<compile_context>
chip_gen: v7x
topology: tpu7x:2x2x1
jax: 0.10.0
libtpu: 0.0.40
codegen_flags: <defaults>
</compile_context>

<pallas_src>
import math
import functools

import jax
import jax.numpy as jnp
from jax.experimental import pallas as pl
from jax.experimental.pallas import tpu as pltpu  # noqa: F401


# bf16 MXU operands (native on v5e/v6e/v7x); accumulation / softmax / layer-norm stay
# f32. Flip to jnp.float32 for tighter numerical parity with the f32 reference.
MATMUL_DTYPE = jnp.bfloat16


def _layer_norm(x, g, b, eps=1e-5):
    mu = jnp.mean(x, axis=-1, keepdims=True)
    var = jnp.mean(jnp.square(x - mu), axis=-1, keepdims=True)
    return (x - mu) * jax.lax.rsqrt(var + eps) * g + b


def encoder_kernel(maskb_ref, x_ref,
                   wqkv_ref, bqkv_ref, wo_ref, bo_ref,
                   ln1g_ref, ln1b_ref,
                   w1_ref, b1_ref, w2_ref, b2_ref,
                   ln2g_ref, ln2b_ref,
                   out_ref, *, n_layers, nhead):
    """Single invocation (no grid): all batches + all layers, everything VMEM-resident."""
    B, S, D = x_ref.shape
    H = nhead
    dh = D // H
    G = H * B                                  # fused (head, batch) einsum batch dim
    cdt = wqkv_ref.dtype                       # MXU operand dtype (bf16 or f32)

    # sqrt(d_model) scale + positional encoding already applied on the host.
    x = x_ref[...].reshape(B * S, D)           # [B*S, D]  (batch fused into matmul M dim)

    # Additive key-padding bias, hoisted out of the layer loop and broadcast once to the
    # head-major grouped layout used by the attention einsums.
    mask_g = jnp.broadcast_to(maskb_ref[...][None], (H, B, S, S)).reshape(G, S, S)

    def split_heads(qkv, offset):
        # [B*S, 3D] lane block -> [H*B, S, dh] (head-major grouping, no per-head matmuls).
        parts = [qkv[:, offset + h * dh: offset + (h + 1) * dh].reshape(B, S, dh)
                 for h in range(H)]
        return jnp.concatenate(parts, axis=0)

    # TODO(synk): convert to lax.fori_loop with dynamic wqkv_ref[l] indexing if n_layers grows.
    for l in range(n_layers):
        # ---------------- multi-head self attention ----------------
        # Fused QKV projection: one lane-dense [B*S, D] @ [D, 3D] matmul per layer
        # (1/sqrt(dh) folded into the Q columns/bias on the host).
        qkv = jnp.dot(x.astype(cdt), wqkv_ref[l],
                      preferred_element_type=jnp.float32) + bqkv_ref[l]      # [B*S, 3D]
        qg = split_heads(qkv, 0).astype(cdt)          # [G, S, dh]
        kg = split_heads(qkv, D).astype(cdt)
        vg = split_heads(qkv, 2 * D).astype(cdt)

        s = jnp.einsum('gqe,gke->gqk', qg, kg,
                       preferred_element_type=jnp.float32)                   # [G, S, S]
        s = s + mask_g                                 # mask padded keys (hoisted broadcast)
        s = s - jnp.max(s, axis=-1, keepdims=True)
        p = jnp.exp(s)
        p = p * pl.reciprocal(jnp.sum(p, axis=-1, keepdims=True), approx=True)
        ctx_g = jnp.einsum('gqk,gke->gqe', p.astype(cdt), vg,
                           preferred_element_type=jnp.float32)               # [G, S, dh]

        # Re-assemble heads along lanes ([B*S, D]) and apply one out-projection matmul.
        ctx = jnp.concatenate([ctx_g[h * B:(h + 1) * B] for h in range(H)],
                              axis=-1).reshape(B * S, D)
        attn = jnp.dot(ctx.astype(cdt), wo_ref[l],
                       preferred_element_type=jnp.float32) + bo_ref[l]
        x = _layer_norm(x + attn, ln1g_ref[l], ln1b_ref[l])

        # ---------------- feed forward (ReLU) ----------------
        h1 = jnp.dot(x.astype(cdt), w1_ref[l],
                     preferred_element_type=jnp.float32) + b1_ref[l]
        h1 = jnp.maximum(h1, 0.0)
        ff = jnp.dot(h1.astype(cdt), w2_ref[l],
                     preferred_element_type=jnp.float32) + b2_ref[l]
        x = _layer_norm(x + ff, ln2g_ref[l], ln2b_ref[l])

    # output[:, 0, :] for every batch element, one contiguous [B, D] store.
    out_ref[...] = x.reshape(B, S, D)[:, 0, :]


def make_positional_encoding(max_len, d_model):
    position = jnp.arange(max_len, dtype=jnp.float32)[:, None]
    div_term = jnp.exp(jnp.arange(0, d_model, 2, dtype=jnp.float32)
                       * (-math.log(10000.0) / d_model))
    pe = jnp.zeros((max_len, d_model), dtype=jnp.float32)
    pe = pe.at[:, 0::2].set(jnp.sin(position * div_term))
    pe = pe.at[:, 1::2].set(jnp.cos(position * div_term))
    return pe


def init_params(key, d_model, d_hid, n_layers):
    """Raw parameters in PyTorch layout ([out, in] weights, 1-D biases)."""
    ks = iter(jax.random.split(key, 12 * n_layers))

    def nrm(shape, scale=0.05):
        return scale * jax.random.normal(next(ks), shape, jnp.float32)

    stack = lambda fn: jnp.stack([fn() for _ in range(n_layers)])
    return dict(
        in_proj_w=stack(lambda: nrm((3 * d_model, d_model))),
        in_proj_b=stack(lambda: nrm((3 * d_model,))),
        out_proj_w=stack(lambda: nrm((d_model, d_model))),
        out_proj_b=stack(lambda: nrm((d_model,))),
        ln1_g=jnp.ones((n_layers, d_model), jnp.float32),
        ln1_b=jnp.zeros((n_layers, d_model), jnp.float32),
        lin1_w=stack(lambda: nrm((d_hid, d_model))),
        lin1_b=stack(lambda: nrm((d_hid,))),
        lin2_w=stack(lambda: nrm((d_model, d_hid))),
        lin2_b=stack(lambda: nrm((d_model,))),
        ln2_g=jnp.ones((n_layers, d_model), jnp.float32),
        ln2_b=jnp.zeros((n_layers, d_model), jnp.float32),
    )


def prepare_params(raw, *, nhead, matmul_dtype=MATMUL_DTYPE):
    """Host-side glue: transpose to [in, out], fuse QKV, fold 1/sqrt(dh) into Q."""
    L = raw['in_proj_w'].shape[0]
    D = raw['in_proj_w'].shape[2]
    dh = D // nhead
    q_scale = 1.0 / math.sqrt(dh)

    # [L, 3D, D] (out, in) -> [L, D(in), 3D(out)], with the Q columns pre-scaled.
    wt = jnp.transpose(raw['in_proj_w'], (0, 2, 1))
    col_scale = jnp.concatenate([jnp.full((D,), q_scale, jnp.float32),
                                 jnp.ones((2 * D,), jnp.float32)])
    wqkv = (wt * col_scale[None, None, :]).astype(matmul_dtype)          # [L, D, 3D]
    bqkv = (raw['in_proj_b'] * col_scale[None, :])[:, None, :].astype(jnp.float32)

    return dict(
        wqkv=wqkv, bqkv=bqkv,
        wo=jnp.transpose(raw['out_proj_w'], (0, 2, 1)).astype(matmul_dtype),  # [L, D, D]
        bo=raw['out_proj_b'][:, None, :].astype(jnp.float32),
        ln1g=raw['ln1_g'][:, None, :], ln1b=raw['ln1_b'][:, None, :],
        w1=jnp.transpose(raw['lin1_w'], (0, 2, 1)).astype(matmul_dtype),
        b1=raw['lin1_b'][:, None, :].astype(jnp.float32),
        w2=jnp.transpose(raw['lin2_w'], (0, 2, 1)).astype(matmul_dtype),
        b2=raw['lin2_b'][:, None, :].astype(jnp.float32),
        ln2g=raw['ln2_g'][:, None, :], ln2b=raw['ln2_b'][:, None, :],
    )


def encoder_forward(x, mask, params, pe, *, nhead, n_layers):
    """x: [B, S, D] float32; mask: [B, S] bool (True == padded). Returns [B, D]."""
    B, S, D = x.shape

    # Hoisted out of the kernel (done once in XLA): input scale + positional encoding.
    # Dropout is identity in eval mode.
    x_in = (x * math.sqrt(D) + pe[None]).astype(jnp.float32)
    # Additive key-padding bias, query-broadcast on the host -> [B, S, S].
    # TODO(synk): -1e9 (not -inf) assumes every query row has >= 1 valid key (pos 0 valid).
    maskb = jnp.broadcast_to(jnp.where(mask, -1e9, 0.0).astype(jnp.float32)[:, None, :],
                             (B, S, S))

    kernel = functools.partial(encoder_kernel, n_layers=n_layers, nhead=nhead)

    # No grid / BlockSpecs: single invocation with whole arrays resident in VMEM (<1 MiB).
    # TODO(synk): when d_model/d_hid/S/L grow, add a layer grid axis (weights stream via
    # index_map lambda l: (l, ...)) and a "parallel" batch split to use v7x's 2nd TensorCore.
    out = pl.pallas_call(
        kernel,
        out_shape=jax.ShapeDtypeStruct((B, D), jnp.float32),
    )(maskb, x_in,
      params['wqkv'], params['bqkv'], params['wo'], params['bo'],
      params['ln1g'], params['ln1b'],
      params['w1'], params['b1'], params['w2'], params['b2'],
      params['ln2g'], params['ln2b'])
    return out


if __name__ == "__main__":
    config = dict(ent_dim=32, dropout=0.1, nhead=4, d_hid=64,
                  n_layers=2, max_candidate_num=8)
    B, S, D = 2, config['max_candidate_num'], config['ent_dim']

    key = jax.random.PRNGKey(0)
    kx, kp = jax.random.split(key, 2)
    x = jax.random.normal(kx, (B, S, D), jnp.float32)
    # key-padding mask: True == padded position (position 0 always valid)
    lengths = jnp.array([S, 5])
    mask = jnp.arange(S)[None, :] >= lengths[:, None]

    raw = init_params(kp, D, config['d_hid'], config['n_layers'])
    params = prepare_params(raw, nhead=config['nhead'])
    pe = make_positional_encoding(S, D)

    out = encoder_forward(x, mask, params, pe,
                          nhead=config['nhead'], n_layers=config['n_layers'])
    out = jax.block_until_ready(out)

    assert out.shape == (B, D), out.shape
    assert bool(jnp.all(jnp.isfinite(out)))
    print("KERNEL_OK")
</pallas_src>

<mosaic_0001>
module attributes {stable_mosaic.version = 11 : i64} {
  func.func @encoder_kernel(%arg0: memref<2x8x8xf32, #tpu.memory_space<vmem>>, %arg1: memref<2x8x32xf32, #tpu.memory_space<vmem>>, %arg2: memref<2x32x96xbf16, #tpu.memory_space<vmem>>, %arg3: memref<2x1x96xf32, #tpu.memory_space<vmem>>, %arg4: memref<2x32x32xbf16, #tpu.memory_space<vmem>>, %arg5: memref<2x1x32xf32, #tpu.memory_space<vmem>>, %arg6: memref<2x1x32xf32, #tpu.memory_space<vmem>>, %arg7: memref<2x1x32xf32, #tpu.memory_space<vmem>>, %arg8: memref<2x32x64xbf16, #tpu.memory_space<vmem>>, %arg9: memref<2x1x64xf32, #tpu.memory_space<vmem>>, %arg10: memref<2x64x32xbf16, #tpu.memory_space<vmem>>, %arg11: memref<2x1x32xf32, #tpu.memory_space<vmem>>, %arg12: memref<2x1x32xf32, #tpu.memory_space<vmem>>, %arg13: memref<2x1x32xf32, #tpu.memory_space<vmem>>, %arg14: memref<2x32xf32, #tpu.memory_space<vmem>>) attributes {dimension_semantics = [], scalar_prefetch = 0 : i64, scratch_operands = 0 : i64, tpu.core_type = #tpu.core_type<tc>} {
    %c0 = arith.constant 0 : index
    %c0_0 = arith.constant 0 : index
    %c0_1 = arith.constant 0 : index
    %0 = vector.load %arg1[%c0, %c0_0, %c0_1] : memref<2x8x32xf32, #tpu.memory_space<vmem>>, vector<2x8x32xf32>
    %1 = vector.shape_cast %0 : vector<2x8x32xf32> to vector<16x32xf32>
    %c0_2 = arith.constant 0 : index
    %c0_3 = arith.constant 0 : index
    %c0_4 = arith.constant 0 : index
    %2 = vector.load %arg0[%c0_2, %c0_3, %c0_4] : memref<2x8x8xf32, #tpu.memory_space<vmem>>, vector<2x8x8xf32>
    %3 = vector.shape_cast %2 : vector<2x8x8xf32> to vector<1x2x8x8xf32>
    %4 = vector.shape_cast %3 : vector<1x2x8x8xf32> to vector<1x2x8x8xf32>
    %5 = vector.broadcast %4 : vector<1x2x8x8xf32> to vector<4x2x8x8xf32>
    %6 = vector.shape_cast %5 : vector<4x2x8x8xf32> to vector<8x8x8xf32>
    %7 = arith.truncf %1 : vector<16x32xf32> to vector<16x32xbf16>
    %c0_5 = arith.constant 0 : index
    %c0_6 = arith.constant 0 : index
    %c0_7 = arith.constant 0 : index
    %8 = vector.load %arg2[%c0_5, %c0_6, %c0_7] : memref<2x32x96xbf16, #tpu.memory_space<vmem>>, vector<1x32x96xbf16>
    %9 = vector.shape_cast %8 : vector<1x32x96xbf16> to vector<32x96xbf16>
    %cst = arith.constant dense<0.000000e+00> : vector<16x96xf32>
    %10 = tpu.matmul %7, %9, %cst {dimension_numbers = #tpu.dot_dimension_numbers<[1], [0], [0], [1], [0, 0, 1, 1], [], []>} : vector<16x32xbf16>, vector<32x96xbf16>, vector<16x96xf32> -> vector<16x96xf32>
    %c0_8 = arith.constant 0 : index
    %c0_9 = arith.constant 0 : index
    %c0_10 = arith.constant 0 : index
    %11 = vector.load %arg3[%c0_8, %c0_9, %c0_10] : memref<2x1x96xf32, #tpu.memory_space<vmem>>, vector<1x1x96xf32>
    %12 = vector.shape_cast %11 : vector<1x1x96xf32> to vector<1x96xf32>
    %13 = vector.broadcast %12 : vector<1x96xf32> to vector<16x96xf32>
    %14 = arith.addf %10, %13 : vector<16x96xf32>
    %15 = vector.extract_strided_slice %14 {offsets = [0, 0], sizes = [16, 8], strides = [1, 1]} : vector<16x96xf32> to vector<16x8xf32>
    %16 = vector.shape_cast %15 : vector<16x8xf32> to vector<2x8x8xf32>
    %17 = vector.extract_strided_slice %14 {offsets = [0, 8], sizes = [16, 8], strides = [1, 1]} : vector<16x96xf32> to vector<16x8xf32>
    %18 = vector.shape_cast %17 : vector<16x8xf32> to vector<2x8x8xf32>
    %19 = vector.extract_strided_slice %14 {offsets = [0, 16], sizes = [16, 8], strides = [1, 1]} : vector<16x96xf32> to vector<16x8xf32>
    %20 = vector.shape_cast %19 : vector<16x8xf32> to vector<2x8x8xf32>
    %21 = vector.extract_strided_slice %14 {offsets = [0, 24], sizes = [16, 8], strides = [1, 1]} : vector<16x96xf32> to vector<16x8xf32>
    %22 = vector.shape_cast %21 : vector<16x8xf32> to vector<2x8x8xf32>
    %23 = tpu.concatenate %16, %18, %20, %22 in 0 : vector<2x8x8xf32>, vector<2x8x8xf32>, vector<2x8x8xf32>, vector<2x8x8xf32> -> vector<8x8x8xf32>
    %24 = arith.truncf %23 : vector<8x8x8xf32> to vector<8x8x8xbf16>
    %25 = vector.extract_strided_slice %14 {offsets = [0, 32], sizes = [16, 8], strides = [1, 1]} : vector<16x96xf32> to vector<16x8xf32>
    %26 = vector.shape_cast %25 : vector<16x8xf32> to vector<2x8x8xf32>
    %27 = vector.extract_strided_slice %14 {offsets = [0, 40], sizes = [16, 8], strides = [1, 1]} : vector<16x96xf32> to vector<16x8xf32>
    %28 = vector.shape_cast %27 : vector<16x8xf32> to vector<2x8x8xf32>
    %29 = vector.extract_strided_slice %14 {offsets = [0, 48], sizes = [16, 8], strides = [1, 1]} : vector<16x96xf32> to vector<16x8xf32>
    %30 = vector.shape_cast %29 : vector<16x8xf32> to vector<2x8x8xf32>
    %31 = vector.extract_strided_slice %14 {offsets = [0, 56], sizes = [16, 8], strides = [1, 1]} : vector<16x96xf32> to vector<16x8xf32>
    %32 = vector.shape_cast %31 : vector<16x8xf32> to vector<2x8x8xf32>
    %33 = tpu.concatenate %26, %28, %30, %32 in 0 : vector<2x8x8xf32>, vector<2x8x8xf32>, vector<2x8x8xf32>, vector<2x8x8xf32> -> vector<8x8x8xf32>
    %34 = arith.truncf %33 : vector<8x8x8xf32> to vector<8x8x8xbf16>
    %35 = vector.extract_strided_slice %14 {offsets = [0, 64], sizes = [16, 8], strides = [1, 1]} : vector<16x96xf32> to vector<16x8xf32>
    %36 = vector.shape_cast %35 : vector<16x8xf32> to vector<2x8x8xf32>
    %37 = vector.extract_strided_slice %14 {offsets = [0, 72], sizes = [16, 8], strides = [1, 1]} : vector<16x96xf32> to vector<16x8xf32>
    %38 = vector.shape_cast %37 : vector<16x8xf32> to vector<2x8x8xf32>
    %39 = vector.extract_strided_slice %14 {offsets = [0, 80], sizes = [16, 8], strides = [1, 1]} : vector<16x96xf32> to vector<16x8xf32>
    %40 = vector.shape_cast %39 : vector<16x8xf32> to vector<2x8x8xf32>
    %41 = vector.extract_strided_slice %14 {offsets = [0, 88], sizes = [16, 8], strides = [1, 1]} : vector<16x96xf32> to vector<16x8xf32>
    %42 = vector.shape_cast %41 : vector<16x8xf32> to vector<2x8x8xf32>
    %43 = tpu.concatenate %36, %38, %40, %42 in 0 : vector<2x8x8xf32>, vector<2x8x8xf32>, vector<2x8x8xf32>, vector<2x8x8xf32> -> vector<8x8x8xf32>
    %44 = arith.truncf %43 : vector<8x8x8xf32> to vector<8x8x8xbf16>
    "tpu.trace_start"() <{level = 10 : i32, message = "gqe,gke->gqk"}> : () -> ()
    %cst_11 = arith.constant dense<0.000000e+00> : vector<8x8x8xf32>
    %45 = tpu.matmul %24, %34, %cst_11 {dimension_numbers = #tpu.dot_dimension_numbers<[2], [2], [1], [1], [0, 0, 0, 1, 1, 1], [0], [0]>} : vector<8x8x8xbf16>, vector<8x8x8xbf16>, vector<8x8x8xf32> -> vector<8x8x8xf32>
    "tpu.trace_stop"() : () -> ()
    %46 = arith.addf %45, %6 : vector<8x8x8xf32>
    %cst_12 = arith.constant dense<0xFF800000> : vector<8x8xf32>
    %47 = vector.multi_reduction <maximumf>, %46, %cst_12 [2] : vector<8x8x8xf32> to vector<8x8xf32>
    %48 = vector.shape_cast %47 : vector<8x8xf32> to vector<8x8x1xf32>
    %49 = vector.broadcast %48 : vector<8x8x1xf32> to vector<8x8x8xf32>
    %50 = arith.subf %46, %49 : vector<8x8x8xf32>
    %51 = math.exp %50 : vector<8x8x8xf32>
    %cst_13 = arith.constant dense<0.000000e+00> : vector<8x8xf32>
    %52 = vector.multi_reduction <add>, %51, %cst_13 [2] : vector<8x8x8xf32> to vector<8x8xf32>
    %53 = vector.shape_cast %52 : vector<8x8xf32> to vector<8x8x1xf32>
    %54 = tpu.reciprocal %53 {approx = true} : vector<8x8x1xf32> -> vector<8x8x1xf32>
    %55 = vector.broadcast %54 : vector<8x8x1xf32> to vector<8x8x8xf32>
    %56 = arith.mulf %51, %55 : vector<8x8x8xf32>
    %57 = arith.truncf %56 : vector<8x8x8xf32> to vector<8x8x8xbf16>
    "tpu.trace_start"() <{level = 10 : i32, message = "gqk,gke->gqe"}> : () -> ()
    %cst_14 = arith.constant dense<0.000000e+00> : vector<8x8x8xf32>
    %58 = tpu.matmul %57, %44, %cst_14 {dimension_numbers = #tpu.dot_dimension_numbers<[2], [1], [1], [2], [0, 0, 0, 1, 1, 2], [0], [0]>} : vector<8x8x8xbf16>, vector<8x8x8xbf16>, vector<8x8x8xf32> -> vector<8x8x8xf32>
    "tpu.trace_stop"() : () -> ()
    %59 = vector.extract_strided_slice %58 {offsets = [0, 0, 0], sizes = [2, 8, 8], strides = [1, 1, 1]} : vector<8x8x8xf32> to vector<2x8x8xf32>
    %60 = vector.extract_strided_slice %58 {offsets = [2, 0, 0], sizes = [2, 8, 8], strides = [1, 1, 1]} : vector<8x8x8xf32> to vector<2x8x8xf32>
    %61 = vector.extract_strided_slice %58 {offsets = [4, 0, 0], sizes = [2, 8, 8], strides = [1, 1, 1]} : vector<8x8x8xf32> to vector<2x8x8xf32>
    %62 = vector.extract_strided_slice %58 {offsets = [6, 0, 0], sizes = [2, 8, 8], strides = [1, 1, 1]} : vector<8x8x8xf32> to vector<2x8x8xf32>
    %63 = tpu.concatenate %59, %60, %61, %62 in 2 : vector<2x8x8xf32>, vector<2x8x8xf32>, vector<2x8x8xf32>, vector<2x8x8xf32> -> vector<2x8x32xf32>
    %64 = vector.shape_cast %63 : vector<2x8x32xf32> to vector<16x32xf32>
    %65 = arith.truncf %64 : vector<16x32xf32> to vector<16x32xbf16>
    %c0_15 = arith.constant 0 : index
    %c0_16 = arith.constant 0 : index
    %c0_17 = arith.constant 0 : index
    %66 = vector.load %arg4[%c0_15, %c0_16, %c0_17] : memref<2x32x32xbf16, #tpu.memory_space<vmem>>, vector<1x32x32xbf16>
    %67 = vector.shape_cast %66 : vector<1x32x32xbf16> to vector<32x32xbf16>
    %cst_18 = arith.constant dense<0.000000e+00> : vector<16x32xf32>
    %68 = tpu.matmul %65, %67, %cst_18 {dimension_numbers = #tpu.dot_dimension_numbers<[1], [0], [0], [1], [0, 0, 1, 1], [], []>} : vector<16x32xbf16>, vector<32x32xbf16>, vector<16x32xf32> -> vector<16x32xf32>
    %c0_19 = arith.constant 0 : index
    %c0_20 = arith.constant 0 : index
    %c0_21 = arith.constant 0 : index
    %69 = vector.load %arg5[%c0_19, %c0_20, %c0_21] : memref<2x1x32xf32, #tpu.memory_space<vmem>>, vector<1x1x32xf32>
    %70 = vector.shape_cast %69 : vector<1x1x32xf32> to vector<1x32xf32>
    %71 = vector.broadcast %70 : vector<1x32xf32> to vector<16x32xf32>
    %72 = arith.addf %68, %71 : vector<16x32xf32>
    %73 = arith.addf %1, %72 : vector<16x32xf32>
    %c0_22 = arith.constant 0 : index
    %c0_23 = arith.constant 0 : index
    %c0_24 = arith.constant 0 : index
    %74 = vector.load %arg6[%c0_22, %c0_23, %c0_24] : memref<2x1x32xf32, #tpu.memory_space<vmem>>, vector<1x1x32xf32>
    %75 = vector.shape_cast %74 : vector<1x1x32xf32> to vector<1x32xf32>
    %c0_25 = arith.constant 0 : index
    %c0_26 = arith.constant 0 : index
    %c0_27 = arith.constant 0 : index
    %76 = vector.load %arg7[%c0_25, %c0_26, %c0_27] : memref<2x1x32xf32, #tpu.memory_space<vmem>>, vector<1x1x32xf32>
    %77 = vector.shape_cast %76 : vector<1x1x32xf32> to vector<1x32xf32>
    %cst_28 = arith.constant dense<0.000000e+00> : vector<16xf32>
    %78 = vector.multi_reduction <add>, %73, %cst_28 [1] : vector<16x32xf32> to vector<16xf32>
    %79 = vector.shape_cast %78 : vector<16xf32> to vector<16x1xf32>
    %cst_29 = arith.constant 3.200000e+01 : f32
    %80 = vector.broadcast %cst_29 : f32 to vector<16x1xf32>
    %81 = arith.divf %79, %80 : vector<16x1xf32>
    %82 = vector.broadcast %81 : vector<16x1xf32> to vector<16x32xf32>
    %83 = arith.subf %73, %82 : vector<16x32xf32>
    %84 = arith.mulf %83, %83 : vector<16x32xf32>
    %cst_30 = arith.constant dense<0.000000e+00> : vector<16xf32>
    %85 = vector.multi_reduction <add>, %84, %cst_30 [1] : vector<16x32xf32> to vector<16xf32>
    %86 = vector.shape_cast %85 : vector<16xf32> to vector<16x1xf32>
    %cst_31 = arith.constant 3.200000e+01 : f32
    %87 = vector.broadcast %cst_31 : f32 to vector<16x1xf32>
    %88 = arith.divf %86, %87 : vector<16x1xf32>
    %89 = vector.broadcast %81 : vector<16x1xf32> to vector<16x32xf32>
    %90 = arith.subf %73, %89 : vector<16x32xf32>
    %cst_32 = arith.constant 9.99999974E-6 : f32
    %91 = vector.broadcast %cst_32 : f32 to vector<16x1xf32>
    %92 = arith.addf %88, %91 : vector<16x1xf32>
    %93 = math.rsqrt %92 : vector<16x1xf32>
    %94 = vector.broadcast %93 : vector<16x1xf32> to vector<16x32xf32>
    %95 = arith.mulf %90, %94 : vector<16x32xf32>
    %96 = vector.broadcast %75 : vector<1x32xf32> to vector<16x32xf32>
    %97 = arith.mulf %95, %96 : vector<16x32xf32>
    %98 = vector.broadcast %77 : vector<1x32xf32> to vector<16x32xf32>
    %99 = arith.addf %97, %98 : vector<16x32xf32>
    %100 = arith.truncf %99 : vector<16x32xf32> to vector<16x32xbf16>
    %c0_33 = arith.constant 0 : index
    %c0_34 = arith.constant 0 : index
    %c0_35 = arith.constant 0 : index
    %101 = vector.load %arg8[%c0_33, %c0_34, %c0_35] : memref<2x32x64xbf16, #tpu.memory_space<vmem>>, vector<1x32x64xbf16>
    %102 = vector.shape_cast %101 : vector<1x32x64xbf16> to vector<32x64xbf16>
    %cst_36 = arith.constant dense<0.000000e+00> : vector<16x64xf32>
    %103 = tpu.matmul %100, %102, %cst_36 {dimension_numbers = #tpu.dot_dimension_numbers<[1], [0], [0], [1], [0, 0, 1, 1], [], []>} : vector<16x32xbf16>, vector<32x64xbf16>, vector<16x64xf32> -> vector<16x64xf32>
    %c0_37 = arith.constant 0 : index
    %c0_38 = arith.constant 0 : index
    %c0_39 = arith.constant 0 : index
    %104 = vector.load %arg9[%c0_37, %c0_38, %c0_39] : memref<2x1x64xf32, #tpu.memory_space<vmem>>, vector<1x1x64xf32>
    %105 = vector.shape_cast %104 : vector<1x1x64xf32> to vector<1x64xf32>
    %106 = vector.broadcast %105 : vector<1x64xf32> to vector<16x64xf32>
    %107 = arith.addf %103, %106 : vector<16x64xf32>
    %cst_40 = arith.constant 0.000000e+00 : f32
    %108 = vector.broadcast %cst_40 : f32 to vector<16x64xf32>
    %109 = arith.maximumf %107, %108 : vector<16x64xf32>
    %110 = arith.truncf %109 : vector<16x64xf32> to vector<16x64xbf16>
    %c0_41 = arith.constant 0 : index
    %c0_42 = arith.constant 0 : index
    %c0_43 = arith.constant 0 : index
    %111 = vector.load %arg10[%c0_41, %c0_42, %c0_43] : memref<2x64x32xbf16, #tpu.memory_space<vmem>>, vector<1x64x32xbf16>
    %112 = vector.shape_cast %111 : vector<1x64x32xbf16> to vector<64x32xbf16>
    %cst_44 = arith.constant dense<0.000000e+00> : vector<16x32xf32>
    %113 = tpu.matmul %110, %112, %cst_44 {dimension_numbers = #tpu.dot_dimension_numbers<[1], [0], [0], [1], [0, 0, 1, 1], [], []>} : vector<16x64xbf16>, vector<64x32xbf16>, vector<16x32xf32> -> vector<16x32xf32>
    %c0_45 = arith.constant 0 : index
    %c0_46 = arith.constant 0 : index
    %c0_47 = arith.constant 0 : index
    %114 = vector.load %arg11[%c0_45, %c0_46, %c0_47] : memref<2x1x32xf32, #tpu.memory_space<vmem>>, vector<1x1x32xf32>
    %115 = vector.shape_cast %114 : vector<1x1x32xf32> to vector<1x32xf32>
    %116 = vector.broadcast %115 : vector<1x32xf32> to vector<16x32xf32>
    %117 = arith.addf %113, %116 : vector<16x32xf32>
    %118 = arith.addf %99, %117 : vector<16x32xf32>
    %c0_48 = arith.constant 0 : index
    %c0_49 = arith.constant 0 : index
    %c0_50 = arith.constant 0 : index
    %119 = vector.load %arg12[%c0_48, %c0_49, %c0_50] : memref<2x1x32xf32, #tpu.memory_space<vmem>>, vector<1x1x32xf32>
    %120 = vector.shape_cast %119 : vector<1x1x32xf32> to vector<1x32xf32>
    %c0_51 = arith.constant 0 : index
    %c0_52 = arith.constant 0 : index
    %c0_53 = arith.constant 0 : index
    %121 = vector.load %arg13[%c0_51, %c0_52, %c0_53] : memref<2x1x32xf32, #tpu.memory_space<vmem>>, vector<1x1x32xf32>
    %122 = vector.shape_cast %121 : vector<1x1x32xf32> to vector<1x32xf32>
    %cst_54 = arith.constant dense<0.000000e+00> : vector<16xf32>
    %123 = vector.multi_reduction <add>, %118, %cst_54 [1] : vector<16x32xf32> to vector<16xf32>
    %124 = vector.shape_cast %123 : vector<16xf32> to vector<16x1xf32>
    %cst_55 = arith.constant 3.200000e+01 : f32
    %125 = vector.broadcast %cst_55 : f32 to vector<16x1xf32>
    %126 = arith.divf %124, %125 : vector<16x1xf32>
    %127 = vector.broadcast %126 : vector<16x1xf32> to vector<16x32xf32>
    %128 = arith.subf %118, %127 : vector<16x32xf32>
    %129 = arith.mulf %128, %128 : vector<16x32xf32>
    %cst_56 = arith.constant dense<0.000000e+00> : vector<16xf32>
    %130 = vector.multi_reduction <add>, %129, %cst_56 [1] : vector<16x32xf32> to vector<16xf32>
    %131 = vector.shape_cast %130 : vector<16xf32> to vector<16x1xf32>
    %cst_57 = arith.constant 3.200000e+01 : f32
    %132 = vector.broadcast %cst_57 : f32 to vector<16x1xf32>
    %133 = arith.divf %131, %132 : vector<16x1xf32>
    %134 = vector.broadcast %126 : vector<16x1xf32> to vector<16x32xf32>
    %135 = arith.subf %118, %134 : vector<16x32xf32>
    %cst_58 = arith.constant 9.99999974E-6 : f32
    %136 = vector.broadcast %cst_58 : f32 to vector<16x1xf32>
    %137 = arith.addf %133, %136 : vector<16x1xf32>
    %138 = math.rsqrt %137 : vector<16x1xf32>
    %139 = vector.broadcast %138 : vector<16x1xf32> to vector<16x32xf32>
    %140 = arith.mulf %135, %139 : vector<16x32xf32>
    %141 = vector.broadcast %120 : vector<1x32xf32> to vector<16x32xf32>
    %142 = arith.mulf %140, %141 : vector<16x32xf32>
    %143 = vector.broadcast %122 : vector<1x32xf32> to vector<16x32xf32>
    %144 = arith.addf %142, %143 : vector<16x32xf32>
    %145 = arith.truncf %144 : vector<16x32xf32> to vector<16x32xbf16>
    %c1 = arith.constant 1 : index
    %c0_59 = arith.constant 0 : index
    %c0_60 = arith.constant 0 : index
    %146 = vector.load %arg2[%c1, %c0_59, %c0_60] : memref<2x32x96xbf16, #tpu.memory_space<vmem>>, vector<1x32x96xbf16>
    %147 = vector.shape_cast %146 : vector<1x32x96xbf16> to vector<32x96xbf16>
    %cst_61 = arith.constant dense<0.000000e+00> : vector<16x96xf32>
    %148 = tpu.matmul %145, %147, %cst_61 {dimension_numbers = #tpu.dot_dimension_numbers<[1], [0], [0], [1], [0, 0, 1, 1], [], []>} : vector<16x32xbf16>, vector<32x96xbf16>, vector<16x96xf32> -> vector<16x96xf32>
    %c1_62 = arith.constant 1 : index
    %c0_63 = arith.constant 0 : index
    %c0_64 = arith.constant 0 : index
    %149 = vector.load %arg3[%c1_62, %c0_63, %c0_64] : memref<2x1x96xf32, #tpu.memory_space<vmem>>, vector<1x1x96xf32>
    %150 = vector.shape_cast %149 : vector<1x1x96xf32> to vector<1x96xf32>
    %151 = vector.broadcast %150 : vector<1x96xf32> to vector<16x96xf32>
    %152 = arith.addf %148, %151 : vector<16x96xf32>
    %153 = vector.extract_strided_slice %152 {offsets = [0, 0], sizes = [16, 8], strides = [1, 1]} : vector<16x96xf32> to vector<16x8xf32>
    %154 = vector.shape_cast %153 : vector<16x8xf32> to vector<2x8x8xf32>
    %155 = vector.extract_strided_slice %152 {offsets = [0, 8], sizes = [16, 8], strides = [1, 1]} : vector<16x96xf32> to vector<16x8xf32>
    %156 = vector.shape_cast %155 : vector<16x8xf32> to vector<2x8x8xf32>
    %157 = vector.extract_strided_slice %152 {offsets = [0, 16], sizes = [16, 8], strides = [1, 1]} : vector<16x96xf32> to vector<16x8xf32>
    %158 = vector.shape_cast %157 : vector<16x8xf32> to vector<2x8x8xf32>
    %159 = vector.extract_strided_slice %152 {offsets = [0, 24], sizes = [16, 8], strides = [1, 1]} : vector<16x96xf32> to vector<16x8xf32>
    %160 = vector.shape_cast %159 : vector<16x8xf32> to vector<2x8x8xf32>
    %161 = tpu.concatenate %154, %156, %158, %160 in 0 : vector<2x8x8xf32>, vector<2x8x8xf32>, vector<2x8x8xf32>, vector<2x8x8xf32> -> vector<8x8x8xf32>
    %162 = arith.truncf %161 : vector<8x8x8xf32> to vector<8x8x8xbf16>
    %163 = vector.extract_strided_slice %152 {offsets = [0, 32], sizes = [16, 8], strides = [1, 1]} : vector<16x96xf32> to vector<16x8xf32>
    %164 = vector.shape_cast %163 : vector<16x8xf32> to vector<2x8x8xf32>
    %165 = vector.extract_strided_slice %152 {offsets = [0, 40], sizes = [16, 8], strides = [1, 1]} : vector<16x96xf32> to vector<16x8xf32>
    %166 = vector.shape_cast %165 : vector<16x8xf32> to vector<2x8x8xf32>
    %167 = vector.extract_strided_slice %152 {offsets = [0, 48], sizes = [16, 8], strides = [1, 1]} : vector<16x96xf32> to vector<16x8xf32>
    %168 = vector.shape_cast %167 : vector<16x8xf32> to vector<2x8x8xf32>
    %169 = vector.extract_strided_slice %152 {offsets = [0, 56], sizes = [16, 8], strides = [1, 1]} : vector<16x96xf32> to vector<16x8xf32>
    %170 = vector.shape_cast %169 : vector<16x8xf32> to vector<2x8x8xf32>
    %171 = tpu.concatenate %164, %166, %168, %170 in 0 : vector<2x8x8xf32>, vector<2x8x8xf32>, vector<2x8x8xf32>, vector<2x8x8xf32> -> vector<8x8x8xf32>
    %172 = arith.truncf %171 : vector<8x8x8xf32> to vector<8x8x8xbf16>
    %173 = vector.extract_strided_slice %152 {offsets = [0, 64], sizes = [16, 8], strides = [1, 1]} : vector<16x96xf32> to vector<16x8xf32>
    %174 = vector.shape_cast %173 : vector<16x8xf32> to vector<2x8x8xf32>
    %175 = vector.extract_strided_slice %152 {offsets = [0, 72], sizes = [16, 8], strides = [1, 1]} : vector<16x96xf32> to vector<16x8xf32>
    %176 = vector.shape_cast %175 : vector<16x8xf32> to vector<2x8x8xf32>
    %177 = vector.extract_strided_slice %152 {offsets = [0, 80], sizes = [16, 8], strides = [1, 1]} : vector<16x96xf32> to vector<16x8xf32>
    %178 = vector.shape_cast %177 : vector<16x8xf32> to vector<2x8x8xf32>
    %179 = vector.extract_strided_slice %152 {offsets = [0, 88], sizes = [16, 8], strides = [1, 1]} : vector<16x96xf32> to vector<16x8xf32>
    %180 = vector.shape_cast %179 : vector<16x8xf32> to vector<2x8x8xf32>
    %181 = tpu.concatenate %174, %176, %178, %180 in 0 : vector<2x8x8xf32>, vector<2x8x8xf32>, vector<2x8x8xf32>, vector<2x8x8xf32> -> vector<8x8x8xf32>
    %182 = arith.truncf %181 : vector<8x8x8xf32> to vector<8x8x8xbf16>
    "tpu.trace_start"() <{level = 10 : i32, message = "gqe,gke->gqk"}> : () -> ()
    %cst_65 = arith.constant dense<0.000000e+00> : vector<8x8x8xf32>
    %183 = tpu.matmul %162, %172, %cst_65 {dimension_numbers = #tpu.dot_dimension_numbers<[2], [2], [1], [1], [0, 0, 0, 1, 1, 1], [0], [0]>} : vector<8x8x8xbf16>, vector<8x8x8xbf16>, vector<8x8x8xf32> -> vector<8x8x8xf32>
    "tpu.trace_stop"() : () -> ()
    %184 = arith.addf %183, %6 : vector<8x8x8xf32>
    %cst_66 = arith.constant dense<0xFF800000> : vector<8x8xf32>
    %185 = vector.multi_reduction <maximumf>, %184, %cst_66 [2] : vector<8x8x8xf32> to vector<8x8xf32>
    %186 = vector.shape_cast %185 : vector<8x8xf32> to vector<8x8x1xf32>
    %187 = vector.broadcast %186 : vector<8x8x1xf32> to vector<8x8x8xf32>
    %188 = arith.subf %184, %187 : vector<8x8x8xf32>
    %189 = math.exp %188 : vector<8x8x8xf32>
    %cst_67 = arith.constant dense<0.000000e+00> : vector<8x8xf32>
    %190 = vector.multi_reduction <add>, %189, %cst_67 [2] : vector<8x8x8xf32> to vector<8x8xf32>
    %191 = vector.shape_cast %190 : vector<8x8xf32> to vector<8x8x1xf32>
    %192 = tpu.reciprocal %191 {approx = true} : vector<8x8x1xf32> -> vector<8x8x1xf32>
    %193 = vector.broadcast %192 : vector<8x8x1xf32> to vector<8x8x8xf32>
    %194 = arith.mulf %189, %193 : vector<8x8x8xf32>
    %195 = arith.truncf %194 : vector<8x8x8xf32> to vector<8x8x8xbf16>
    "tpu.trace_start"() <{level = 10 : i32, message = "gqk,gke->gqe"}> : () -> ()
    %cst_68 = arith.constant dense<0.000000e+00> : vector<8x8x8xf32>
    %196 = tpu.matmul %195, %182, %cst_68 {dimension_numbers = #tpu.dot_dimension_numbers<[2], [1], [1], [2], [0, 0, 0, 1, 1, 2], [0], [0]>} : vector<8x8x8xbf16>, vector<8x8x8xbf16>, vector<8x8x8xf32> -> vector<8x8x8xf32>
    "tpu.trace_stop"() : () -> ()
    %197 = vector.extract_strided_slice %196 {offsets = [0, 0, 0], sizes = [2, 8, 8], strides = [1, 1, 1]} : vector<8x8x8xf32> to vector<2x8x8xf32>
    %198 = vector.extract_strided_slice %196 {offsets = [2, 0, 0], sizes = [2, 8, 8], strides = [1, 1, 1]} : vector<8x8x8xf32> to vector<2x8x8xf32>
    %199 = vector.extract_strided_slice %196 {offsets = [4, 0, 0], sizes = [2, 8, 8], strides = [1, 1, 1]} : vector<8x8x8xf32> to vector<2x8x8xf32>
    %200 = vector.extract_strided_slice %196 {offsets = [6, 0, 0], sizes = [2, 8, 8], strides = [1, 1, 1]} : vector<8x8x8xf32> to vector<2x8x8xf32>
    %201 = tpu.concatenate %197, %198, %199, %200 in 2 : vector<2x8x8xf32>, vector<2x8x8xf32>, vector<2x8x8xf32>, vector<2x8x8xf32> -> vector<2x8x32xf32>
    %202 = vector.shape_cast %201 : vector<2x8x32xf32> to vector<16x32xf32>
    %203 = arith.truncf %202 : vector<16x32xf32> to vector<16x32xbf16>
    %c1_69 = arith.constant 1 : index
    %c0_70 = arith.constant 0 : index
    %c0_71 = arith.constant 0 : index
    %204 = vector.load %arg4[%c1_69, %c0_70, %c0_71] : memref<2x32x32xbf16, #tpu.memory_space<vmem>>, vector<1x32x32xbf16>
    %205 = vector.shape_cast %204 : vector<1x32x32xbf16> to vector<32x32xbf16>
    %cst_72 = arith.constant dense<0.000000e+00> : vector<16x32xf32>
    %206 = tpu.matmul %203, %205, %cst_72 {dimension_numbers = #tpu.dot_dimension_numbers<[1], [0], [0], [1], [0, 0, 1, 1], [], []>} : vector<16x32xbf16>, vector<32x32xbf16>, vector<16x32xf32> -> vector<16x32xf32>
    %c1_73 = arith.constant 1 : index
    %c0_74 = arith.constant 0 : index
    %c0_75 = arith.constant 0 : index
    %207 = vector.load %arg5[%c1_73, %c0_74, %c0_75] : memref<2x1x32xf32, #tpu.memory_space<vmem>>, vector<1x1x32xf32>
    %208 = vector.shape_cast %207 : vector<1x1x32xf32> to vector<1x32xf32>
    %209 = vector.broadcast %208 : vector<1x32xf32> to vector<16x32xf32>
    %210 = arith.addf %206, %209 : vector<16x32xf32>
    %211 = arith.addf %144, %210 : vector<16x32xf32>
    %c1_76 = arith.constant 1 : index
    %c0_77 = arith.constant 0 : index
    %c0_78 = arith.constant 0 : index
    %212 = vector.load %arg6[%c1_76, %c0_77, %c0_78] : memref<2x1x32xf32, #tpu.memory_space<vmem>>, vector<1x1x32xf32>
    %213 = vector.shape_cast %212 : vector<1x1x32xf32> to vector<1x32xf32>
    %c1_79 = arith.constant 1 : index
    %c0_80 = arith.constant 0 : index
    %c0_81 = arith.constant 0 : index
    %214 = vector.load %arg7[%c1_79, %c0_80, %c0_81] : memref<2x1x32xf32, #tpu.memory_space<vmem>>, vector<1x1x32xf32>
    %215 = vector.shape_cast %214 : vector<1x1x32xf32> to vector<1x32xf32>
    %cst_82 = arith.constant dense<0.000000e+00> : vector<16xf32>
    %216 = vector.multi_reduction <add>, %211, %cst_82 [1] : vector<16x32xf32> to vector<16xf32>
    %217 = vector.shape_cast %216 : vector<16xf32> to vector<16x1xf32>
    %cst_83 = arith.constant 3.200000e+01 : f32
    %218 = vector.broadcast %cst_83 : f32 to vector<16x1xf32>
    %219 = arith.divf %217, %218 : vector<16x1xf32>
    %220 = vector.broadcast %219 : vector<16x1xf32> to vector<16x32xf32>
    %221 = arith.subf %211, %220 : vector<16x32xf32>
    %222 = arith.mulf %221, %221 : vector<16x32xf32>
    %cst_84 = arith.constant dense<0.000000e+00> : vector<16xf32>
    %223 = vector.multi_reduction <add>, %222, %cst_84 [1] : vector<16x32xf32> to vector<16xf32>
    %224 = vector.shape_cast %223 : vector<16xf32> to vector<16x1xf32>
    %cst_85 = arith.constant 3.200000e+01 : f32
    %225 = vector.broadcast %cst_85 : f32 to vector<16x1xf32>
    %226 = arith.divf %224, %225 : vector<16x1xf32>
    %227 = vector.broadcast %219 : vector<16x1xf32> to vector<16x32xf32>
    %228 = arith.subf %211, %227 : vector<16x32xf32>
    %cst_86 = arith.constant 9.99999974E-6 : f32
    %229 = vector.broadcast %cst_86 : f32 to vector<16x1xf32>
    %230 = arith.addf %226, %229 : vector<16x1xf32>
    %231 = math.rsqrt %230 : vector<16x1xf32>
    %232 = vector.broadcast %231 : vector<16x1xf32> to vector<16x32xf32>
    %233 = arith.mulf %228, %232 : vector<16x32xf32>
    %234 = vector.broadcast %213 : vector<1x32xf32> to vector<16x32xf32>
    %235 = arith.mulf %233, %234 : vector<16x32xf32>
    %236 = vector.broadcast %215 : vector<1x32xf32> to vector<16x32xf32>
    %237 = arith.addf %235, %236 : vector<16x32xf32>
    %238 = arith.truncf %237 : vector<16x32xf32> to vector<16x32xbf16>
    %c1_87 = arith.constant 1 : index
    %c0_88 = arith.constant 0 : index
    %c0_89 = arith.constant 0 : index
    %239 = vector.load %arg8[%c1_87, %c0_88, %c0_89] : memref<2x32x64xbf16, #tpu.memory_space<vmem>>, vector<1x32x64xbf16>
    %240 = vector.shape_cast %239 : vector<1x32x64xbf16> to vector<32x64xbf16>
    %cst_90 = arith.constant dense<0.000000e+00> : vector<16x64xf32>
    %241 = tpu.matmul %238, %240, %cst_90 {dimension_numbers = #tpu.dot_dimension_numbers<[1], [0], [0], [1], [0, 0, 1, 1], [], []>} : vector<16x32xbf16>, vector<32x64xbf16>, vector<16x64xf32> -> vector<16x64xf32>
    %c1_91 = arith.constant 1 : index
    %c0_92 = arith.constant 0 : index
    %c0_93 = arith.constant 0 : index
    %242 = vector.load %arg9[%c1_91, %c0_92, %c0_93] : memref<2x1x64xf32, #tpu.memory_space<vmem>>, vector<1x1x64xf32>
    %243 = vector.shape_cast %242 : vector<1x1x64xf32> to vector<1x64xf32>
    %244 = vector.broadcast %243 : vector<1x64xf32> to vector<16x64xf32>
    %245 = arith.addf %241, %244 : vector<16x64xf32>
    %cst_94 = arith.constant 0.000000e+00 : f32
    %246 = vector.broadcast %cst_94 : f32 to vector<16x64xf32>
    %247 = arith.maximumf %245, %246 : vector<16x64xf32>
    %248 = arith.truncf %247 : vector<16x64xf32> to vector<16x64xbf16>
    %c1_95 = arith.constant 1 : index
    %c0_96 = arith.constant 0 : index
    %c0_97 = arith.constant 0 : index
    %249 = vector.load %arg10[%c1_95, %c0_96, %c0_97] : memref<2x64x32xbf16, #tpu.memory_space<vmem>>, vector<1x64x32xbf16>
    %250 = vector.shape_cast %249 : vector<1x64x32xbf16> to vector<64x32xbf16>
    %cst_98 = arith.constant dense<0.000000e+00> : vector<16x32xf32>
    %251 = tpu.matmul %248, %250, %cst_98 {dimension_numbers = #tpu.dot_dimension_numbers<[1], [0], [0], [1], [0, 0, 1, 1], [], []>} : vector<16x64xbf16>, vector<64x32xbf16>, vector<16x32xf32> -> vector<16x32xf32>
    %c1_99 = arith.constant 1 : index
    %c0_100 = arith.constant 0 : index
    %c0_101 = arith.constant 0 : index
    %252 = vector.load %arg11[%c1_99, %c0_100, %c0_101] : memref<2x1x32xf32, #tpu.memory_space<vmem>>, vector<1x1x32xf32>
    %253 = vector.shape_cast %252 : vector<1x1x32xf32> to vector<1x32xf32>
    %254 = vector.broadcast %253 : vector<1x32xf32> to vector<16x32xf32>
    %255 = arith.addf %251, %254 : vector<16x32xf32>
    %256 = arith.addf %237, %255 : vector<16x32xf32>
    %c1_102 = arith.constant 1 : index
    %c0_103 = arith.constant 0 : index
    %c0_104 = arith.constant 0 : index
    %257 = vector.load %arg12[%c1_102, %c0_103, %c0_104] : memref<2x1x32xf32, #tpu.memory_space<vmem>>, vector<1x1x32xf32>
    %258 = vector.shape_cast %257 : vector<1x1x32xf32> to vector<1x32xf32>
    %c1_105 = arith.constant 1 : index
    %c0_106 = arith.constant 0 : index
    %c0_107 = arith.constant 0 : index
    %259 = vector.load %arg13[%c1_105, %c0_106, %c0_107] : memref<2x1x32xf32, #tpu.memory_space<vmem>>, vector<1x1x32xf32>
    %260 = vector.shape_cast %259 : vector<1x1x32xf32> to vector<1x32xf32>
    %cst_108 = arith.constant dense<0.000000e+00> : vector<16xf32>
    %261 = vector.multi_reduction <add>, %256, %cst_108 [1] : vector<16x32xf32> to vector<16xf32>
    %262 = vector.shape_cast %261 : vector<16xf32> to vector<16x1xf32>
    %cst_109 = arith.constant 3.200000e+01 : f32
    %263 = vector.broadcast %cst_109 : f32 to vector<16x1xf32>
    %264 = arith.divf %262, %263 : vector<16x1xf32>
    %265 = vector.broadcast %264 : vector<16x1xf32> to vector<16x32xf32>
    %266 = arith.subf %256, %265 : vector<16x32xf32>
    %267 = arith.mulf %266, %266 : vector<16x32xf32>
    %cst_110 = arith.constant dense<0.000000e+00> : vector<16xf32>
    %268 = vector.multi_reduction <add>, %267, %cst_110 [1] : vector<16x32xf32> to vector<16xf32>
    %269 = vector.shape_cast %268 : vector<16xf32> to vector<16x1xf32>
    %cst_111 = arith.constant 3.200000e+01 : f32
    %270 = vector.broadcast %cst_111 : f32 to vector<16x1xf32>
    %271 = arith.divf %269, %270 : vector<16x1xf32>
    %272 = vector.broadcast %264 : vector<16x1xf32> to vector<16x32xf32>
    %273 = arith.subf %256, %272 : vector<16x32xf32>
    %cst_112 = arith.constant 9.99999974E-6 : f32
    %274 = vector.broadcast %cst_112 : f32 to vector<16x1xf32>
    %275 = arith.addf %271, %274 : vector<16x1xf32>
    %276 = math.rsqrt %275 : vector<16x1xf32>
    %277 = vector.broadcast %276 : vector<16x1xf32> to vector<16x32xf32>
    %278 = arith.mulf %273, %277 : vector<16x32xf32>
    %279 = vector.broadcast %258 : vector<1x32xf32> to vector<16x32xf32>
    %280 = arith.mulf %278, %279 : vector<16x32xf32>
    %281 = vector.broadcast %260 : vector<1x32xf32> to vector<16x32xf32>
    %282 = arith.addf %280, %281 : vector<16x32xf32>
    %283 = vector.shape_cast %282 : vector<16x32xf32> to vector<2x8x32xf32>
    %284 = vector.extract_strided_slice %283 {offsets = [0, 0, 0], sizes = [2, 1, 32], strides = [1, 1, 1]} : vector<2x8x32xf32> to vector<2x1x32xf32>
    %285 = vector.shape_cast %284 : vector<2x1x32xf32> to vector<2x32xf32>
    %c0_113 = arith.constant 0 : index
    %c0_114 = arith.constant 0 : index
    %286 = vector.load %arg14[%c0_113, %c0_114] : memref<2x32xf32, #tpu.memory_space<vmem>>, vector<2x32xf32>
    tpu.vector_store %arg14[%c0_113, %c0_114], %285 {strides = array<i32>} : memref<2x32xf32, #tpu.memory_space<vmem>>, vector<2x32xf32>,
    return
  }
}

</mosaic_0001>

<llo_original>
// kernel: tpu_custom_call.1
$region0: #{tpu_custom_call.1}
  #allocation0 [shape = 'u32[]', space=smem, size = 0x4, offset = 0x4, fixed_abs, tag = 'smem constant byte address 0x4 - core index']
  #allocation1 [shape = 'u32[144,128]{1,0:T(1,128)}', space=vmem, size = 0x12000, scoped, tag = 'internal scratch']
  %s0 = inlined_call_operand.hbm [shape: f32[2,8,8], index: 0, kind: input, shape index: {}]
  %s1 = inlined_call_operand.hbm [shape: f32[2,8,32], index: 1, kind: input, shape index: {}]
  %s2 = inlined_call_operand.vmem [shape: bf16[2,32,96], index: 2, kind: input, shape index: {}]
  %s3 = inlined_call_operand.vmem [shape: f32[2,1,96], index: 3, kind: input, shape index: {}]
  %s4 = inlined_call_operand.vmem [shape: bf16[2,32,32], index: 4, kind: input, shape index: {}]
  %s5 = inlined_call_operand.vmem [shape: f32[2,1,32], index: 5, kind: input, shape index: {}]
  %s6 = inlined_call_operand.hbm [shape: f32[2,1,32], index: 6, kind: input, shape index: {}]
  %s7 = inlined_call_operand.hbm [shape: f32[2,1,32], index: 7, kind: input, shape index: {}]
  %s8 = inlined_call_operand.vmem [shape: bf16[2,32,64], index: 8, kind: input, shape index: {}]
  %s9 = inlined_call_operand.hbm [shape: f32[2,1,64], index: 9, kind: input, shape index: {}]
  %s10 = inlined_call_operand.vmem [shape: bf16[2,64,32], index: 10, kind: input, shape index: {}]
  %s11 = inlined_call_operand.vmem [shape: f32[2,1,32], index: 11, kind: input, shape index: {}]
  %s12 = inlined_call_operand.vmem [shape: f32[2,1,32], index: 12, kind: input, shape index: {}]
  %s13 = inlined_call_operand.vmem [shape: f32[2,1,32], index: 13, kind: input, shape index: {}]
  %s14 = inlined_call_operand.hbm [shape: f32[2,32], index: 14, kind: output, shape index: {}]
  %s15 = sld [smem:[#allocation0]]
  $region86: #{tpu_custom_call.1} parent=0
    _
  %s17 = ssub.s32 1, %s15
  %s18 = scalar_select 0, %s17, %s15
  $region1: #{tpu_custom_call.1} parent=0
    #allocation2 [shape = 'u8[8192]{0}', space=vmem, size = 0x2000, scoped, tag = 'input window, operand 0, single buffered']
    #allocation3 [shape = 's32[1]{0}', space=sflag, size = 0x4, scoped, tag = 'scoped memory for tpu_custom_call.1']
    #allocation4 [shape = 's32[1]{0}', space=sflag, size = 0x4, scoped, tag = 'scoped memory for tpu_custom_call.1']
    #allocation5 [shape = 'u8[8192]{0}', space=vmem, size = 0x2000, scoped, tag = 'input window, operand 1, single buffered']
    #allocation6 [shape = 's32[1]{0}', space=sflag, size = 0x4, scoped, tag = 'scoped memory for tpu_custom_call.1']
    #allocation7 [shape = 'u8[1024]{0}', space=vmem, size = 0x400, scoped, tag = 'input window, operand 6, single buffered']
    #allocation8 [shape = 'u8[1024]{0}', space=vmem, size = 0x400, scoped, tag = 'input window, operand 7, single buffered']
    #allocation9 [shape = 's32[1]{0}', space=sflag, size = 0x4, scoped, tag = 'scoped memory for tpu_custom_call.1']
    #allocation10 [shape = 'u8[1024]{0}', space=vmem, size = 0x400, scoped, tag = 'input window, operand 9, single buffered']
    #allocation11 [shape = 'u8[1024]{0}', space=vmem, size = 0x400, scoped, tag = 'output window, operand 0, single buffered']
    %19 = vsyncpa [#allocation3], 0
    %20 = vsyncpa [#allocation6], 0
    %21 = vsyncpa [#allocation9], 0
    %22 = vsyncpa [#allocation4], 0
    // Predicated region
    $region2: #{tpu_custom_call.1} parent=1 // pred_check
      _
    $region3: #{tpu_custom_call.1} parent=1 // pred_check_branch
      %24 = sbr.rel (0) target = $region5
    $region4: #{tpu_custom_call.1} parent=1 // pred_region
      %s26 = ssub.s32 256, 256
      %27 = vsyncadd [#allocation3], %s26
      %s28 = sshll.u32 [#allocation2], 4
      %s29 = int_to_ptr.vmem [resolvable:$true] %s28
      %34 = dma.hbm_to_vmem [thread:$0]  %s0, 256, %s29, [#allocation3], 128, 128, 8
    $region5: #{tpu_custom_call.1} parent=1 // pred_fallthru
      _
    // Predicated region
    $region6: #{tpu_custom_call.1} parent=1 // pred_check
      _
    $region7: #{tpu_custom_call.1} parent=1 // pred_check_branch
      %36 = sbr.rel (0) target = $region9
    $region8: #{tpu_custom_call.1} parent=1 // pred_region
      %s38 = ssub.s32 256, 256
      %39 = vsyncadd [#allocation6], %s38
      %s40 = sshll.u32 [#allocation5], 4
      %s41 = int_to_ptr.vmem [resolvable:$true] %s40
      %46 = dma.hbm_to_vmem [thread:$0]  %s1, 256, %s41, [#allocation6], 128, 128, 8
    $region9: #{tpu_custom_call.1} parent=1 // pred_fallthru
      _
    // Predicated region
    $region10: #{tpu_custom_call.1} parent=1 // pred_check
      _
    $region11: #{tpu_custom_call.1} parent=1 // pred_check_branch
      %48 = sbr.rel (0) target = $region13
    $region12: #{tpu_custom_call.1} parent=1 // pred_region
      _
    $region13: #{tpu_custom_call.1} parent=1 // pred_fallthru
      _
    // Predicated region
    $region14: #{tpu_custom_call.1} parent=1 // pred_check
      _
    $region15: #{tpu_custom_call.1} parent=1 // pred_check_branch
      %50 = sbr.rel (0) target = $region17
    $region16: #{tpu_custom_call.1} parent=1 // pred_region
      _
    $region17: #{tpu_custom_call.1} parent=1 // pred_fallthru
      _
    // Predicated region
    $region18: #{tpu_custom_call.1} parent=1 // pred_check
      _
    $region19: #{tpu_custom_call.1} parent=1 // pred_check_branch
      %52 = sbr.rel (0) target = $region21
    $region20: #{tpu_custom_call.1} parent=1 // pred_region
      _
    $region21: #{tpu_custom_call.1} parent=1 // pred_fallthru
      _
    // Predicated region
    $region22: #{tpu_custom_call.1} parent=1 // pred_check
      _
    $region23: #{tpu_custom_call.1} parent=1 // pred_check_branch
      %54 = sbr.rel (0) target = $region25
    $region24: #{tpu_custom_call.1} parent=1 // pred_region
      _
    $region25: #{tpu_custom_call.1} parent=1 // pred_fallthru
      _
    // Predicated region
    $region26: #{tpu_custom_call.1} parent=1 // pred_check
      _
    $region27: #{tpu_custom_call.1} parent=1 // pred_check_branch
      %56 = sbr.rel (0) target = $region29
    $region28: #{tpu_custom_call.1} parent=1 // pred_region
      %s58 = ssub.s32 32, 32
      %59 = vsyncadd [#allocation6], %s58
      %s60 = sshll.u32 [#allocation7], 4
      %s61 = int_to_ptr.vmem [resolvable:$true] %s60
      %66 = dma.hbm_to_vmem [thread:$0]  %s6, 32, %s61, [#allocation6], 16, 16, 1
    $region29: #{tpu_custom_call.1} parent=1 // pred_fallthru
      _
    // Predicated region
    $region30: #{tpu_custom_call.1} parent=1 // pred_check
      _
    $region31: #{tpu_custom_call.1} parent=1 // pred_check_branch
      %68 = sbr.rel (0) target = $region33
    $region32: #{tpu_custom_call.1} parent=1 // pred_region
      %s70 = ssub.s32 32, 32
      %71 = vsyncadd [#allocation9], %s70
      %s72 = sshll.u32 [#allocation8], 4
      %s73 = int_to_ptr.vmem [resolvable:$true] %s72
      %78 = dma.hbm_to_vmem [thread:$0]  %s7, 32, %s73, [#allocation9], 16, 16, 1
    $region33: #{tpu_custom_call.1} parent=1 // pred_fallthru
      _
    // Predicated region
    $region34: #{tpu_custom_call.1} parent=1 // pred_check
      _
    $region35: #{tpu_custom_call.1} parent=1 // pred_check_branch
      %80 = sbr.rel (0) target = $region37
    $region36: #{tpu_custom_call.1} parent=1 // pred_region
      _
    $region37: #{tpu_custom_call.1} parent=1 // pred_fallthru
      _
    // Predicated region
    $region38: #{tpu_custom_call.1} parent=1 // pred_check
      _
    $region39: #{tpu_custom_call.1} parent=1 // pred_check_branch
      %82 = sbr.rel (0) target = $region41
    $region40: #{tpu_custom_call.1} parent=1 // pred_region
      %s84 = ssub.s32 32, 32
      %85 = vsyncadd [#allocation9], %s84
      %s86 = sshll.u32 [#allocation10], 4
      %s87 = int_to_ptr.vmem [resolvable:$true] %s86
      %92 = dma.hbm_to_vmem [thread:$0]  %s9, 32, %s87, [#allocation9], 16, 16, 1
    $region41: #{tpu_custom_call.1} parent=1 // pred_fallthru
      _
    // Predicated region
    $region42: #{tpu_custom_call.1} parent=1 // pred_check
      _
    $region43: #{tpu_custom_call.1} parent=1 // pred_check_branch
      %94 = sbr.rel (0) target = $region45
    $region44: #{tpu_custom_call.1} parent=1 // pred_region
      _
    $region45: #{tpu_custom_call.1} parent=1 // pred_fallthru
      _
    // Predicated region
    $region46: #{tpu_custom_call.1} parent=1 // pred_check
      _
    $region47: #{tpu_custom_call.1} parent=1 // pred_check_branch
      %96 = sbr.rel (0) target = $region49
    $region48: #{tpu_custom_call.1} parent=1 // pred_region
      _
    $region49: #{tpu_custom_call.1} parent=1 // pred_fallthru
      _
    // Predicated region
    $region50: #{tpu_custom_call.1} parent=1 // pred_check
      _
    $region51: #{tpu_custom_call.1} parent=1 // pred_check_branch
      %98 = sbr.rel (0) target = $region53
    $region52: #{tpu_custom_call.1} parent=1 // pred_region
      _
    $region53: #{tpu_custom_call.1} parent=1 // pred_fallthru
      _
    // Predicated region
    $region54: #{tpu_custom_call.1} parent=1 // pred_check
      _
    $region55: #{tpu_custom_call.1} parent=1 // pred_check_branch
      %100 = sbr.rel (0) target = $region57
    $region56: #{tpu_custom_call.1} parent=1 // pred_region
      _
    $region57: #{tpu_custom_call.1} parent=1 // pred_fallthru
      _
    // Predicated region
    $region58: #{tpu_custom_call.1} parent=1 // pred_check
      _
    $region59: #{tpu_custom_call.1} parent=1 // pred_check_branch
      %102 = sbr.rel (0) target = $region61
    $region60: #{tpu_custom_call.1} parent=1 // pred_region
      %103 = dma.done [#allocation3], 256
    $region61: #{tpu_custom_call.1} parent=1 // pred_fallthru
      _
    // Predicated region
    $region62: #{tpu_custom_call.1} parent=1 // pred_check
      _
    $region63: #{tpu_custom_call.1} parent=1 // pred_check_branch
      %105 = sbr.rel (0) target = $region65
    $region64: #{tpu_custom_call.1} parent=1 // pred_region
      %106 = dma.done [#allocation6], 256
    $region65: #{tpu_custom_call.1} parent=1 // pred_fallthru
      _
    // Predicated region
    $region66: #{tpu_custom_call.1} parent=1 // pred_check
      _
    $region67: #{tpu_custom_call.1} parent=1 // pred_check_branch
      %108 = sbr.rel (0) target = $region69
    $region68: #{tpu_custom_call.1} parent=1 // pred_region
      %109 = dma.done [#allocation6], 32
    $region69: #{tpu_custom_call.1} parent=1 // pred_fallthru
      _
    // Predicated region
    $region70: #{tpu_custom_call.1} parent=1 // pred_check
      _
    $region71: #{tpu_custom_call.1} parent=1 // pred_check_branch
      %111 = sbr.rel (0) target = $region73
    $region72: #{tpu_custom_call.1} parent=1 // pred_region
      %112 = dma.done [#allocation9], 32
    $region73: #{tpu_custom_call.1} parent=1 // pred_fallthru
      _
    // Predicated region
    $region74: #{tpu_custom_call.1} parent=1 // pred_check
      _
    $region75: #{tpu_custom_call.1} parent=1 // pred_check_branch
      %114 = sbr.rel (0) target = $region77
    $region76: #{tpu_custom_call.1} parent=1 // pred_region
      %115 = dma.done [#allocation9], 32
    $region77: #{tpu_custom_call.1} parent=1 // pred_fallthru
      _
    %v117 = vld [vmem:[#allocation5] sm:$0xff]
    %v118 = vld [vmem:[#allocation5 + $0x8] sm:$0xff]
    %v119 = vld [vmem:[#allocation2] sm:$0xff]
    %v120 = vld [vmem:[#allocation2 + $0x8] sm:$0xff]
    %v121 = vpack.c.bf16 %v118, %v117
    %v122 = vld [vmem:[%s2] sm:$0xf]
    %v123 = vld [vmem:[%s2 + $0x4] sm:$0xf]
    %v124 = vld [vmem:[%s2 + $0x8] sm:$0xf]
    %v125 = vld [vmem:[%s2 + $0xc] sm:$0xf]
    %v126 = vld [vmem:[%s3] sm:$0x1]
    %v128 = vlaneseq
    %v129 = vshrl.u32 %v128, 7
    %v130 = vsub.s32 0, %v129
    %v131 = vrot.slane %v126, %v130
    %v137 = vunpack.c.l.b16 %v122
    %v138 = vunpack.c.l.b16 %v123
    %v139 = vunpack.c.l.b16 %v124
    %v140 = vunpack.c.l.b16 %v125
    %v141 = vpack.c.b16 %v138, %v137
    %v142 = vpack.c.b16 %v140, %v139
    %vm145 = vcmask 261120
    %v147 = vsel %vm145, %v121, 0
    %149 = vmatprep.subr.bf16.mxu0 0
    %150 = vmatpush1.bf16.msra.mxu0 %v141
    %151 = vmatprep.subr.bf16.mxu0 0
    %152 = vmatpush1.bf16.msra.mxu0 %v142
    %153 = vmatprep.subr.bf16.mxu0 0
    %154 = vmatpush1.bf16.msra.mxu0 0
    %155 = vmatprep.subr.bf16.mxu0 0
    %156 = vmatpush1.bf16.msra.mxu0 0
    %157 = vmatprep.subr.bf16.mxu0 0
    %158 = vmatpush1.bf16.msra.mxu0 0
    %159 = vmatprep.subr.bf16.mxu0 0
    %160 = vmatpush1.bf16.msra.mxu0 0
    %161 = vmatprep.subr.bf16.mxu0 0
    %162 = vmatpush1.bf16.msra.mxu0 0
    %163 = vmatprep.subr.bf16.mxu0 0
    %164 = vmatpush1.bf16.msra.mxu0 0
    %165 = vmatprep.subr.bf16.mxu0 0
    %166 = vmatpush1.bf16.msra.mxu0 0
    %167 = vmatprep.subr.bf16.mxu0 0
    %168 = vmatpush1.bf16.msra.mxu0 0
    %169 = vmatprep.subr.bf16.mxu0 0
    %170 = vmatpush1.bf16.msra.mxu0 0
    %171 = vmatprep.subr.bf16.mxu0 0
    %172 = vmatpush1.bf16.msra.mxu0 0
    %173 = vmatprep.subr.bf16.mxu0 0
    %174 = vmatpush1.bf16.msra.mxu0 0
    %175 = vmatprep.subr.bf16.mxu0 0
    %176 = vmatpush1.bf16.msra.mxu0 0
    %177 = vmatprep.subr.bf16.mxu0 0
    %178 = vmatpush1.bf16.msra.mxu0 0
    %179 = vmatprep.subr.bf16.mxu0 0
    %180 = vmatpush1.bf16.msra.mxu0 0
    %181 = vmatprep.mubr.bf16.mxu0 0
    %182 = vmatmul.mubr.bf16.gmra.mrb[0].mxu0 %v147
    %v183 = vpop.f32.mrb[0].mxu0
    %v184 = vadd.f32 %v131, %v183
    %v185 = vpop.f32.mrb[0].mxu0
    %v186 = vpop.f32.mrb[0].mxu0
    %v187 = vadd.f32 %v131, %v186
    %v188 = vpop.f32.mrb[0].mxu0
    %189 = vdwg.mxu0
    %192 = vrot.lane.b32.xlu0 %v184, 120
    %v193 = vpop.permute.xlu0 %192
    %194 = vrot.lane.b32.xlu0 %v187, 120
    %v195 = vpop.permute.xlu0 %194
    %198 = vrot.lane.b32.xlu0 %v184, 112
    %v199 = vpop.permute.xlu0 %198
    %200 = vrot.lane.b32.xlu0 %v187, 112
    %v201 = vpop.permute.xlu0 %200
    %204 = vrot.lane.b32.xlu0 %v184, 104
    %v205 = vpop.permute.xlu0 %204
    %206 = vrot.lane.b32.xlu0 %v187, 104
    %v207 = vpop.permute.xlu0 %206
    %v210 = vpack.c.bf16 %v184, %v184
    %v211 = vpack.c.bf16 %v187, %v187
    %v212 = vpack.c.bf16 %v193, %v193
    %v213 = vpack.c.bf16 %v195, %v195
    %v214 = vpack.c.bf16 %v199, %v199
    %v215 = vpack.c.bf16 %v201, %v201
    %v216 = vpack.c.bf16 %v205, %v205
    %v217 = vpack.c.bf16 %v207, %v207
    %219 = vrot.lane.b32.xlu0 %v210, 96
    %v220 = vpop.permute.xlu0 %219
    %vm221 = vcmask 64512
    %v223 = vsel %vm221, %v210, 0
    %v226 = vsel %vm221, %v220, 0
    %228 = vmatprep.subr.bf16.mxu0 0
    %229 = vmatpush1.bf16.xpose.msra.mxu0 %v226
    %230 = vmatprep.subr.bf16.mxu0 0
    %231 = vmatpush1.bf16.xpose.msra.mxu0 0
    %232 = vmatprep.subr.bf16.mxu0 0
    %233 = vmatpush1.bf16.xpose.msra.mxu0 0
    %234 = vmatprep.subr.bf16.mxu0 0
    %235 = vmatpush1.bf16.xpose.msra.mxu0 0
    %236 = vmatprep.subr.bf16.mxu0 0
    %237 = vmatpush1.bf16.xpose.msra.mxu0 0
    %238 = vmatprep.subr.bf16.mxu0 0
    %239 = vmatpush1.bf16.xpose.msra.mxu0 0
    %240 = vmatprep.subr.bf16.mxu0 0
    %241 = vmatpush1.bf16.xpose.msra.mxu0 0
    %242 = vmatprep.subr.bf16.mxu0 0
    %243 = vmatpush1.bf16.xpose.msra.mxu0 0
    %244 = vmatprep.subr.bf16.mxu0 0
    %245 = vmatpush1.bf16.xpose.msra.mxu0 0
    %246 = vmatprep.subr.bf16.mxu0 0
    %247 = vmatpush1.bf16.xpose.msra.mxu0 0
    %248 = vmatprep.subr.bf16.mxu0 0
    %249 = vmatpush1.bf16.xpose.msra.mxu0 0
    %250 = vmatprep.subr.bf16.mxu0 0
    %251 = vmatpush1.bf16.xpose.msra.mxu0 0
    %252 = vmatprep.subr.bf16.mxu0 0
    %253 = vmatpush1.bf16.xpose.msra.mxu0 0
    %254 = vmatprep.subr.bf16.mxu0 0
    %255 = vmatpush1.bf16.xpose.msra.mxu0 0
    %256 = vmatprep.subr.bf16.mxu0 0
    %257 = vmatpush1.bf16.xpose.msra.mxu0 0
    %258 = vmatprep.subr.bf16.mxu0 0
    %259 = vmatpush1.bf16.xpose.msra.mxu0 0
    %260 = vmatprep.mubr.bf16.mxu0 0
    %261 = vmatmul.mubr.bf16.gmra.mrb[0].mxu0 %v223
    %v262 = vpop.f32.mrb[0].mxu0
    %v263 = vadd.f32 %v119, %v262
    %v264 = vpop.f32.mrb[0].mxu0
    %v265 = vpop.f32.mrb[0].mxu0
    %v266 = vpop.f32.mrb[0].mxu0
    %267 = vdwg.mxu0
    %269 = vrot.lane.b32.xlu0 %v211, 96
    %v270 = vpop.permute.xlu0 %269
    %v272 = vsel %vm221, %v211, 0
    %v275 = vsel %vm221, %v270, 0
    %277 = vmatprep.subr.bf16.mxu0 0
    %278 = vmatpush1.bf16.xpose.msra.mxu0 %v275
    %279 = vmatprep.subr.bf16.mxu0 0
    %280 = vmatpush1.bf16.xpose.msra.mxu0 0
    %281 = vmatprep.subr.bf16.mxu0 0
    %282 = vmatpush1.bf16.xpose.msra.mxu0 0
    %283 = vmatprep.subr.bf16.mxu0 0
    %284 = vmatpush1.bf16.xpose.msra.mxu0 0
    %285 = vmatprep.subr.bf16.mxu0 0
    %286 = vmatpush1.bf16.xpose.msra.mxu0 0
    %287 = vmatprep.subr.bf16.mxu0 0
    %288 = vmatpush1.bf16.xpose.msra.mxu0 0
    %289 = vmatprep.subr.bf16.mxu0 0
    %290 = vmatpush1.bf16.xpose.msra.mxu0 0
    %291 = vmatprep.subr.bf16.mxu0 0
    %292 = vmatpush1.bf16.xpose.msra.mxu0 0
    %293 = vmatprep.subr.bf16.mxu0 0
    %294 = vmatpush1.bf16.xpose.msra.mxu0 0
    %295 = vmatprep.subr.bf16.mxu0 0
    %296 = vmatpush1.bf16.xpose.msra.mxu0 0
    %297 = vmatprep.subr.bf16.mxu0 0
    %298 = vmatpush1.bf16.xpose.msra.mxu0 0
    %299 = vmatprep.subr.bf16.mxu0 0
    %300 = vmatpush1.bf16.xpose.msra.mxu0 0
    %301 = vmatprep.subr.bf16.mxu0 0
    %302 = vmatpush1.bf16.xpose.msra.mxu0 0
    %303 = vmatprep.subr.bf16.mxu0 0
    %304 = vmatpush1.bf16.xpose.msra.mxu0 0
    %305 = vmatprep.subr.bf16.mxu0 0
    %306 = vmatpush1.bf16.xpose.msra.mxu0 0
    %307 = vmatprep.subr.bf16.mxu0 0
    %308 = vmatpush1.bf16.xpose.msra.mxu0 0
    %309 = vmatprep.mubr.bf16.mxu0 0
    %310 = vmatmul.mubr.bf16.gmra.mrb[0].mxu0 %v272
    %v311 = vpop.f32.mrb[0].mxu0
    %v312 = vadd.f32 %v120, %v311
    %v313 = vpop.f32.mrb[0].mxu0
    %v314 = vpop.f32.mrb[0].mxu0
    %v315 = vpop.f32.mrb[0].mxu0
    %316 = vdwg.mxu0
    %318 = vrot.lane.b32.xlu0 %v212, 96
    %v319 = vpop.permute.xlu0 %318
    %v321 = vsel %vm221, %v212, 0
    %v324 = vsel %vm221, %v319, 0
    %326 = vmatprep.subr.bf16.mxu0 0
    %327 = vmatpush1.bf16.xpose.msra.mxu0 %v324
    %328 = vmatprep.subr.bf16.mxu0 0
    %329 = vmatpush1.bf16.xpose.msra.mxu0 0
    %330 = vmatprep.subr.bf16.mxu0 0
    %331 = vmatpush1.bf16.xpose.msra.mxu0 0
    %332 = vmatprep.subr.bf16.mxu0 0
    %333 = vmatpush1.bf16.xpose.msra.mxu0 0
    %334 = vmatprep.subr.bf16.mxu0 0
    %335 = vmatpush1.bf16.xpose.msra.mxu0 0
    %336 = vmatprep.subr.bf16.mxu0 0
    %337 = vmatpush1.bf16.xpose.msra.mxu0 0
    %338 = vmatprep.subr.bf16.mxu0 0
    %339 = vmatpush1.bf16.xpose.msra.mxu0 0
    %340 = vmatprep.subr.bf16.mxu0 0
    %341 = vmatpush1.bf16.xpose.msra.mxu0 0
    %342 = vmatprep.subr.bf16.mxu0 0
    %343 = vmatpush1.bf16.xpose.msra.mxu0 0
    %344 = vmatprep.subr.bf16.mxu0 0
    %345 = vmatpush1.bf16.xpose.msra.mxu0 0
    %346 = vmatprep.subr.bf16.mxu0 0
    %347 = vmatpush1.bf16.xpose.msra.mxu0 0
    %348 = vmatprep.subr.bf16.mxu0 0
    %349 = vmatpush1.bf16.xpose.msra.mxu0 0
    %350 = vmatprep.subr.bf16.mxu0 0
    %351 = vmatpush1.bf16.xpose.msra.mxu0 0
    %352 = vmatprep.subr.bf16.mxu0 0
    %353 = vmatpush1.bf16.xpose.msra.mxu0 0
    %354 = vmatprep.subr.bf16.mxu0 0
    %355 = vmatpush1.bf16.xpose.msra.mxu0 0
    %356 = vmatprep.subr.bf16.mxu0 0
    %357 = vmatpush1.bf16.xpose.msra.mxu0 0
    %358 = vmatprep.mubr.bf16.mxu0 0
    %359 = vmatmul.mubr.bf16.gmra.mrb[0].mxu0 %v321
    %v360 = vpop.f32.mrb[0].mxu0
    %v361 = vadd.f32 %v119, %v360
    %v362 = vpop.f32.mrb[0].mxu0
    %v363 = vpop.f32.mrb[0].mxu0
    %v364 = vpop.f32.mrb[0].mxu0
    %365 = vdwg.mxu0
    %367 = vrot.lane.b32.xlu0 %v213, 96
    %v368 = vpop.permute.xlu0 %367
    %v370 = vsel %vm221, %v213, 0
    %v373 = vsel %vm221, %v368, 0
    %375 = vmatprep.subr.bf16.mxu0 0
    %376 = vmatpush1.bf16.xpose.msra.mxu0 %v373
    %377 = vmatprep.subr.bf16.mxu0 0
    %378 = vmatpush1.bf16.xpose.msra.mxu0 0
    %379 = vmatprep.subr.bf16.mxu0 0
    %380 = vmatpush1.bf16.xpose.msra.mxu0 0
    %381 = vmatprep.subr.bf16.mxu0 0
    %382 = vmatpush1.bf16.xpose.msra.mxu0 0
    %383 = vmatprep.subr.bf16.mxu0 0
    %384 = vmatpush1.bf16.xpose.msra.mxu0 0
    %385 = vmatprep.subr.bf16.mxu0 0
    %386 = vmatpush1.bf16.xpose.msra.mxu0 0
    %387 = vmatprep.subr.bf16.mxu0 0
    %388 = vmatpush1.bf16.xpose.msra.mxu0 0
    %389 = vmatprep.subr.bf16.mxu0 0
    %390 = vmatpush1.bf16.xpose.msra.mxu0 0
    %391 = vmatprep.subr.bf16.mxu0 0
    %392 = vmatpush1.bf16.xpose.msra.mxu0 0
    %393 = vmatprep.subr.bf16.mxu0 0
    %394 = vmatpush1.bf16.xpose.msra.mxu0 0
    %395 = vmatprep.subr.bf16.mxu0 0
    %396 = vmatpush1.bf16.xpose.msra.mxu0 0
    %397 = vmatprep.subr.bf16.mxu0 0
    %398 = vmatpush1.bf16.xpose.msra.mxu0 0
    %399 = vmatprep.subr.bf16.mxu0 0
    %400 = vmatpush1.bf16.xpose.msra.mxu0 0
    %401 = vmatprep.subr.bf16.mxu0 0
    %402 = vmatpush1.bf16.xpose.msra.mxu0 0
    %403 = vmatprep.subr.bf16.mxu0 0
    %404 = vmatpush1.bf16.xpose.msra.mxu0 0
    %405 = vmatprep.subr.bf16.mxu0 0
    %406 = vmatpush1.bf16.xpose.msra.mxu0 0
    %407 = vmatprep.mubr.bf16.mxu0 0
    %408 = vmatmul.mubr.bf16.gmra.mrb[0].mxu0 %v370
    %v409 = vpop.f32.mrb[0].mxu0
    %v410 = vadd.f32 %v120, %v409
    %v411 = vpop.f32.mrb[0].mxu0
    %v412 = vpop.f32.mrb[0].mxu0
    %v413 = vpop.f32.mrb[0].mxu0
    %414 = vdwg.mxu0
    %416 = vrot.lane.b32.xlu0 %v214, 96
    %v417 = vpop.permute.xlu0 %416
    %v419 = vsel %vm221, %v214, 0
    %v422 = vsel %vm221, %v417, 0
    %424 = vmatprep.subr.bf16.mxu0 0
    %425 = vmatpush1.bf16.xpose.msra.mxu0 %v422
    %426 = vmatprep.subr.bf16.mxu0 0
    %427 = vmatpush1.bf16.xpose.msra.mxu0 0
    %428 = vmatprep.subr.bf16.mxu0 0
    %429 = vmatpush1.bf16.xpose.msra.mxu0 0
    %430 = vmatprep.subr.bf16.mxu0 0
    %431 = vmatpush1.bf16.xpose.msra.mxu0 0
    %432 = vmatprep.subr.bf16.mxu0 0
    %433 = vmatpush1.bf16.xpose.msra.mxu0 0
    %434 = vmatprep.subr.bf16.mxu0 0
    %435 = vmatpush1.bf16.xpose.msra.mxu0 0
    %436 = vmatprep.subr.bf16.mxu0 0
    %437 = vmatpush1.bf16.xpose.msra.mxu0 0
    %438 = vmatprep.subr.bf16.mxu0 0
    %439 = vmatpush1.bf16.xpose.msra.mxu0 0
    %440 = vmatprep.subr.bf16.mxu0 0
    %441 = vmatpush1.bf16.xpose.msra.mxu0 0
    %442 = vmatprep.subr.bf16.mxu0 0
    %443 = vmatpush1.bf16.xpose.msra.mxu0 0
    %444 = vmatprep.subr.bf16.mxu0 0
    %445 = vmatpush1.bf16.xpose.msra.mxu0 0
    %446 = vmatprep.subr.bf16.mxu0 0
    %447 = vmatpush1.bf16.xpose.msra.mxu0 0
    %448 = vmatprep.subr.bf16.mxu0 0
    %449 = vmatpush1.bf16.xpose.msra.mxu0 0
    %450 = vmatprep.subr.bf16.mxu0 0
    %451 = vmatpush1.bf16.xpose.msra.mxu0 0
    %452 = vmatprep.subr.bf16.mxu0 0
    %453 = vmatpush1.bf16.xpose.msra.mxu0 0
    %454 = vmatprep.subr.bf16.mxu0 0
    %455 = vmatpush1.bf16.xpose.msra.mxu0 0
    %456 = vmatprep.mubr.bf16.mxu0 0
    %457 = vmatmul.mubr.bf16.gmra.mrb[0].mxu0 %v419
    %v458 = vpop.f32.mrb[0].mxu0
    %v459 = vadd.f32 %v119, %v458
    %v460 = vpop.f32.mrb[0].mxu0
    %v461 = vpop.f32.mrb[0].mxu0
    %v462 = vpop.f32.mrb[0].mxu0
    %463 = vdwg.mxu0
    %465 = vrot.lane.b32.xlu0 %v215, 96
    %v466 = vpop.permute.xlu0 %465
    %v468 = vsel %vm221, %v215, 0
    %v471 = vsel %vm221, %v466, 0
    %473 = vmatprep.subr.bf16.mxu0 0
    %474 = vmatpush1.bf16.xpose.msra.mxu0 %v471
    %475 = vmatprep.subr.bf16.mxu0 0
    %476 = vmatpush1.bf16.xpose.msra.mxu0 0
    %477 = vmatprep.subr.bf16.mxu0 0
    %478 = vmatpush1.bf16.xpose.msra.mxu0 0
    %479 = vmatprep.subr.bf16.mxu0 0
    %480 = vmatpush1.bf16.xpose.msra.mxu0 0
    %481 = vmatprep.subr.bf16.mxu0 0
    %482 = vmatpush1.bf16.xpose.msra.mxu0 0
    %483 = vmatprep.subr.bf16.mxu0 0
    %484 = vmatpush1.bf16.xpose.msra.mxu0 0
    %485 = vmatprep.subr.bf16.mxu0 0
    %486 = vmatpush1.bf16.xpose.msra.mxu0 0
    %487 = vmatprep.subr.bf16.mxu0 0
    %488 = vmatpush1.bf16.xpose.msra.mxu0 0
    %489 = vmatprep.subr.bf16.mxu0 0
    %490 = vmatpush1.bf16.xpose.msra.mxu0 0
    %491 = vmatprep.subr.bf16.mxu0 0
    %492 = vmatpush1.bf16.xpose.msra.mxu0 0
    %493 = vmatprep.subr.bf16.mxu0 0
    %494 = vmatpush1.bf16.xpose.msra.mxu0 0
    %495 = vmatprep.subr.bf16.mxu0 0
    %496 = vmatpush1.bf16.xpose.msra.mxu0 0
    %497 = vmatprep.subr.bf16.mxu0 0
    %498 = vmatpush1.bf16.xpose.msra.mxu0 0
    %499 = vmatprep.subr.bf16.mxu0 0
    %500 = vmatpush1.bf16.xpose.msra.mxu0 0
    %501 = vmatprep.subr.bf16.mxu0 0
    %502 = vmatpush1.bf16.xpose.msra.mxu0 0
    %503 = vmatprep.subr.bf16.mxu0 0
    %504 = vmatpush1.bf16.xpose.msra.mxu0 0
    %505 = vmatprep.mubr.bf16.mxu0 0
    %506 = vmatmul.mubr.bf16.gmra.mrb[0].mxu0 %v468
    %v507 = vpop.f32.mrb[0].mxu0
    %v508 = vadd.f32 %v120, %v507
    %v509 = vpop.f32.mrb[0].mxu0
    %v510 = vpop.f32.mrb[0].mxu0
    %v511 = vpop.f32.mrb[0].mxu0
    %512 = vdwg.mxu0
    %514 = vrot.lane.b32.xlu0 %v216, 96
    %v515 = vpop.permute.xlu0 %514
    %v517 = vsel %vm221, %v216, 0
    %v520 = vsel %vm221, %v515, 0
    %522 = vmatprep.subr.bf16.mxu0 0
    %523 = vmatpush1.bf16.xpose.msra.mxu0 %v520
    %524 = vmatprep.subr.bf16.mxu0 0
    %525 = vmatpush1.bf16.xpose.msra.mxu0 0
    %526 = vmatprep.subr.bf16.mxu0 0
    %527 = vmatpush1.bf16.xpose.msra.mxu0 0
    %528 = vmatprep.subr.bf16.mxu0 0
    %529 = vmatpush1.bf16.xpose.msra.mxu0 0
    %530 = vmatprep.subr.bf16.mxu0 0
    %531 = vmatpush1.bf16.xpose.msra.mxu0 0
    %532 = vmatprep.subr.bf16.mxu0 0
    %533 = vmatpush1.bf16.xpose.msra.mxu0 0
    %534 = vmatprep.subr.bf16.mxu0 0
    %535 = vmatpush1.bf16.xpose.msra.mxu0 0
    %536 = vmatprep.subr.bf16.mxu0 0
    %537 = vmatpush1.bf16.xpose.msra.mxu0 0
    %538 = vmatprep.subr.bf16.mxu0 0
    %539 = vmatpush1.bf16.xpose.msra.mxu0 0
    %540 = vmatprep.subr.bf16.mxu0 0
    %541 = vmatpush1.bf16.xpose.msra.mxu0 0
    %542 = vmatprep.subr.bf16.mxu0 0
    %543 = vmatpush1.bf16.xpose.msra.mxu0 0
    %544 = vmatprep.subr.bf16.mxu0 0
    %545 = vmatpush1.bf16.xpose.msra.mxu0 0
    %546 = vmatprep.subr.bf16.mxu0 0
    %547 = vmatpush1.bf16.xpose.msra.mxu0 0
    %548 = vmatprep.subr.bf16.mxu0 0
    %549 = vmatpush1.bf16.xpose.msra.mxu0 0
    %550 = vmatprep.subr.bf16.mxu0 0
    %551 = vmatpush1.bf16.xpose.msra.mxu0 0
    %552 = vmatprep.subr.bf16.mxu0 0
    %553 = vmatpush1.bf16.xpose.msra.mxu0 0
    %554 = vmatprep.mubr.bf16.mxu0 0
    %555 = vmatmul.mubr.bf16.gmra.mrb[0].mxu0 %v517
    %v556 = vpop.f32.mrb[0].mxu0
    %v557 = vadd.f32 %v119, %v556
    %v558 = vpop.f32.mrb[0].mxu0
    %v559 = vpop.f32.mrb[0].mxu0
    %v560 = vpop.f32.mrb[0].mxu0
    %561 = vdwg.mxu0
    %563 = vrot.lane.b32.xlu0 %v217, 96
    %v564 = vpop.permute.xlu0 %563
    %v566 = vsel %vm221, %v217, 0
    %v569 = vsel %vm221, %v564, 0
    %571 = vmatprep.subr.bf16.mxu0 0
    %572 = vmatpush1.bf16.xpose.msra.mxu0 %v569
    %573 = vmatprep.subr.bf16.mxu0 0
    %574 = vmatpush1.bf16.xpose.msra.mxu0 0
    %575 = vmatprep.subr.bf16.mxu0 0
    %576 = vmatpush1.bf16.xpose.msra.mxu0 0
    %577 = vmatprep.subr.bf16.mxu0 0
    %578 = vmatpush1.bf16.xpose.msra.mxu0 0
    %579 = vmatprep.subr.bf16.mxu0 0
    %580 = vmatpush1.bf16.xpose.msra.mxu0 0
    %581 = vmatprep.subr.bf16.mxu0 0
    %582 = vmatpush1.bf16.xpose.msra.mxu0 0
    %583 = vmatprep.subr.bf16.mxu0 0
    %584 = vmatpush1.bf16.xpose.msra.mxu0 0
    %585 = vmatprep.subr.bf16.mxu0 0
    %586 = vmatpush1.bf16.xpose.msra.mxu0 0
    %587 = vmatprep.subr.bf16.mxu0 0
    %588 = vmatpush1.bf16.xpose.msra.mxu0 0
    %589 = vmatprep.subr.bf16.mxu0 0
    %590 = vmatpush1.bf16.xpose.msra.mxu0 0
    %591 = vmatprep.subr.bf16.mxu0 0
    %592 = vmatpush1.bf16.xpose.msra.mxu0 0
    %593 = vmatprep.subr.bf16.mxu0 0
    %594 = vmatpush1.bf16.xpose.msra.mxu0 0
    %595 = vmatprep.subr.bf16.mxu0 0
    %596 = vmatpush1.bf16.xpose.msra.mxu0 0
    %597 = vmatprep.subr.bf16.mxu0 0
    %598 = vmatpush1.bf16.xpose.msra.mxu0 0
    %599 = vmatprep.subr.bf16.mxu0 0
    %600 = vmatpush1.bf16.xpose.msra.mxu0 0
    %601 = vmatprep.subr.bf16.mxu0 0
    %602 = vmatpush1.bf16.xpose.msra.mxu0 0
    %603 = vmatprep.mubr.bf16.mxu0 0
    %604 = vmatmul.mubr.bf16.gmra.mrb[0].mxu0 %v566
    %v605 = vpop.f32.mrb[0].mxu0
    %v606 = vadd.f32 %v120, %v605
    %v607 = vpop.f32.mrb[0].mxu0
    %v608 = vpop.f32.mrb[0].mxu0
    %v609 = vpop.f32.mrb[0].mxu0
    %610 = vdwg.mxu0
    %v611 = vsel %vm221, %v263, -inf
    %612 = vmax.xlane.f32.xlu0 %v611
    %v613 = vpop.xlane.xlu0 %612
    %v614 = vsel %vm221, %v312, -inf
    %615 = vmax.xlane.f32.xlu0 %v614
    %v616 = vpop.xlane.xlu0 %615
    %v617 = vsel %vm221, %v361, -inf
    %618 = vmax.xlane.f32.xlu0 %v617
    %v619 = vpop.xlane.xlu0 %618
    %v620 = vsel %vm221, %v410, -inf
    %621 = vmax.xlane.f32.xlu0 %v620
    %v622 = vpop.xlane.xlu0 %621
    %v623 = vsel %vm221, %v459, -inf
    %624 = vmax.xlane.f32.xlu0 %v623
    %v625 = vpop.xlane.xlu0 %624
    %v626 = vsel %vm221, %v508, -inf
    %627 = vmax.xlane.f32.xlu0 %v626
    %v628 = vpop.xlane.xlu0 %627
    %v629 = vsel %vm221, %v557, -inf
    %630 = vmax.xlane.f32.xlu0 %v629
    %v631 = vpop.xlane.xlu0 %630
    %v632 = vsel %vm221, %v606, -inf
    %633 = vmax.xlane.f32.xlu0 %v632
    %v634 = vpop.xlane.xlu0 %633
    %v635 = vsub.f32 %v263, %v613
    %v636 = vsub.f32 %v312, %v616
    %v637 = vsub.f32 %v361, %v619
    %v638 = vsub.f32 %v410, %v622
    %v639 = vsub.f32 %v459, %v625
    %v640 = vsub.f32 %v508, %v628
    %v641 = vsub.f32 %v557, %v631
    %v642 = vsub.f32 %v606, %v634
    %v643 = vmul.f32 %v635, 1.442695
    %v644 = vpow.pop %v643
    %v645 = vmul.f32 %v636, 1.442695
    %v646 = vpow.pop %v645
    %v647 = vmul.f32 %v637, 1.442695
    %v648 = vpow.pop %v647
    %v649 = vmul.f32 %v638, 1.442695
    %v650 = vpow.pop %v649
    %v651 = vmul.f32 %v639, 1.442695
    %v652 = vpow.pop %v651
    %v653 = vmul.f32 %v640, 1.442695
    %v654 = vpow.pop %v653
    %v655 = vmul.f32 %v641, 1.442695
    %v656 = vpow.pop %v655
    %v657 = vmul.f32 %v642, 1.442695
    %v658 = vpow.pop %v657
    %v659 = vsel %vm221, %v644, 0.0
    %660 = vadd.xlane.f32.xlu0 %v659
    %v661 = vpop.xlane.xlu0 %660
    %v662 = vsel %vm221, %v646, 0.0
    %663 = vadd.xlane.f32.xlu0 %v662
    %v664 = vpop.xlane.xlu0 %663
    %v665 = vsel %vm221, %v648, 0.0
    %666 = vadd.xlane.f32.xlu0 %v665
    %v667 = vpop.xlane.xlu0 %666
    %v668 = vsel %vm221, %v650, 0.0
    %669 = vadd.xlane.f32.xlu0 %v668
    %v670 = vpop.xlane.xlu0 %669
    %v671 = vsel %vm221, %v652, 0.0
    %672 = vadd.xlane.f32.xlu0 %v671
    %v673 = vpop.xlane.xlu0 %672
    %v674 = vsel %vm221, %v654, 0.0
    %675 = vadd.xlane.f32.xlu0 %v674
    %v676 = vpop.xlane.xlu0 %675
    %v677 = vsel %vm221, %v656, 0.0
    %678 = vadd.xlane.f32.xlu0 %v677
    %v679 = vpop.xlane.xlu0 %678
    %v680 = vsel %vm221, %v658, 0.0
    %681 = vadd.xlane.f32.xlu0 %v680
    %v682 = vpop.xlane.xlu0 %681
    %v683 = vrcp.pop %v661
    %v684 = vrcp.pop %v664
    %v685 = vrcp.pop %v667
    %v686 = vrcp.pop %v670
    %v687 = vrcp.pop %v673
    %v688 = vrcp.pop %v676
    %v689 = vrcp.pop %v679
    %v690 = vrcp.pop %v682
    %v691 = vmul.f32 %v644, %v683
    %v692 = vmul.f32 %v646, %v684
    %v693 = vmul.f32 %v648, %v685
    %v694 = vmul.f32 %v650, %v686
    %v695 = vmul.f32 %v652, %v687
    %v696 = vmul.f32 %v654, %v688
    %v697 = vmul.f32 %v656, %v689
    %v698 = vmul.f32 %v658, %v690
    %v699 = vpack.c.bf16 %v691, %v691
    %v700 = vpack.c.bf16 %v692, %v692
    %v701 = vpack.c.bf16 %v693, %v693
    %v702 = vpack.c.bf16 %v694, %v694
    %v703 = vpack.c.bf16 %v695, %v695
    %v704 = vpack.c.bf16 %v696, %v696
    %v705 = vpack.c.bf16 %v697, %v697
    %v706 = vpack.c.bf16 %v698, %v698
    %707 = vrot.lane.b32.xlu0 %v210, 64
    %v708 = vpop.permute.xlu0 %707
    %v710 = vsel %vm221, %v699, 0
    %vm712 = vcmask 1043456
    %v714 = vsel %vm712, %v708, 0
    %716 = vmatprep.subr.bf16.mxu0 0
    %717 = vmatpush1.bf16.msra.mxu0 %v714
    %718 = vmatprep.subr.bf16.mxu0 0
    %719 = vmatpush1.bf16.msra.mxu0 0
    %720 = vmatprep.subr.bf16.mxu0 0
    %721 = vmatpush1.bf16.msra.mxu0 0
    %722 = vmatprep.subr.bf16.mxu0 0
    %723 = vmatpush1.bf16.msra.mxu0 0
    %724 = vmatprep.subr.bf16.mxu0 0
    %725 = vmatpush1.bf16.msra.mxu0 0
    %726 = vmatprep.subr.bf16.mxu0 0
    %727 = vmatpush1.bf16.msra.mxu0 0
    %728 = vmatprep.subr.bf16.mxu0 0
    %729 = vmatpush1.bf16.msra.mxu0 0
    %730 = vmatprep.subr.bf16.mxu0 0
    %731 = vmatpush1.bf16.msra.mxu0 0
    %732 = vmatprep.subr.bf16.mxu0 0
    %733 = vmatpush1.bf16.msra.mxu0 0
    %734 = vmatprep.subr.bf16.mxu0 0
    %735 = vmatpush1.bf16.msra.mxu0 0
    %736 = vmatprep.subr.bf16.mxu0 0
    %737 = vmatpush1.bf16.msra.mxu0 0
    %738 = vmatprep.subr.bf16.mxu0 0
    %739 = vmatpush1.bf16.msra.mxu0 0
    %740 = vmatprep.subr.bf16.mxu0 0
    %741 = vmatpush1.bf16.msra.mxu0 0
    %742 = vmatprep.subr.bf16.mxu0 0
    %743 = vmatpush1.bf16.msra.mxu0 0
    %744 = vmatprep.subr.bf16.mxu0 0
    %745 = vmatpush1.bf16.msra.mxu0 0
    %746 = vmatprep.subr.bf16.mxu0 0
    %747 = vmatpush1.bf16.msra.mxu0 0
    %748 = vmatprep.mubr.bf16.mxu0 0
    %749 = vmatmul.mubr.bf16.gmra.mrb[0].mxu0 %v710
    %v750 = vpop.f32.mrb[0].mxu0
    %v751 = vadd.f32 0.0, %v750
    %v752 = vpop.f32.mrb[0].mxu0
    %v753 = vpop.f32.mrb[0].mxu0
    %v754 = vpop.f32.mrb[0].mxu0
    %755 = vdwg.mxu0
    %756 = vrot.lane.b32.xlu0 %v211, 64
    %v757 = vpop.permute.xlu0 %756
    %v759 = vsel %vm221, %v700, 0
    %v762 = vsel %vm712, %v757, 0
    %764 = vmatprep.subr.bf16.mxu0 0
    %765 = vmatpush1.bf16.msra.mxu0 %v762
    %766 = vmatprep.subr.bf16.mxu0 0
    %767 = vmatpush1.bf16.msra.mxu0 0
    %768 = vmatprep.subr.bf16.mxu0 0
    %769 = vmatpush1.bf16.msra.mxu0 0
    %770 = vmatprep.subr.bf16.mxu0 0
    %771 = vmatpush1.bf16.msra.mxu0 0
    %772 = vmatprep.subr.bf16.mxu0 0
    %773 = vmatpush1.bf16.msra.mxu0 0
    %774 = vmatprep.subr.bf16.mxu0 0
    %775 = vmatpush1.bf16.msra.mxu0 0
    %776 = vmatprep.subr.bf16.mxu0 0
    %777 = vmatpush1.bf16.msra.mxu0 0
    %778 = vmatprep.subr.bf16.mxu0 0
    %779 = vmatpush1.bf16.msra.mxu0 0
    %780 = vmatprep.subr.bf16.mxu0 0
    %781 = vmatpush1.bf16.msra.mxu0 0
    %782 = vmatprep.subr.bf16.mxu0 0
    %783 = vmatpush1.bf16.msra.mxu0 0
    %784 = vmatprep.subr.bf16.mxu0 0
    %785 = vmatpush1.bf16.msra.mxu0 0
    %786 = vmatprep.subr.bf16.mxu0 0
    %787 = vmatpush1.bf16.msra.mxu0 0
    %788 = vmatprep.subr.bf16.mxu0 0
    %789 = vmatpush1.bf16.msra.mxu0 0
    %790 = vmatprep.subr.bf16.mxu0 0
    %791 = vmatpush1.bf16.msra.mxu0 0
    %792 = vmatprep.subr.bf16.mxu0 0
    %793 = vmatpush1.bf16.msra.mxu0 0
    %794 = vmatprep.subr.bf16.mxu0 0
    %795 = vmatpush1.bf16.msra.mxu0 0
    %796 = vmatprep.mubr.bf16.mxu0 0
    %797 = vmatmul.mubr.bf16.gmra.mrb[0].mxu0 %v759
    %v798 = vpop.f32.mrb[0].mxu0
    %v799 = vadd.f32 0.0, %v798
    %v800 = vpop.f32.mrb[0].mxu0
    %v801 = vpop.f32.mrb[0].mxu0
    %v802 = vpop.f32.mrb[0].mxu0
    %803 = vdwg.mxu0
    %804 = vrot.lane.b32.xlu0 %v212, 64
    %v805 = vpop.permute.xlu0 %804
    %v807 = vsel %vm221, %v701, 0
    %v810 = vsel %vm712, %v805, 0
    %812 = vmatprep.subr.bf16.mxu0 0
    %813 = vmatpush1.bf16.msra.mxu0 %v810
    %814 = vmatprep.subr.bf16.mxu0 0
    %815 = vmatpush1.bf16.msra.mxu0 0
    %816 = vmatprep.subr.bf16.mxu0 0
    %817 = vmatpush1.bf16.msra.mxu0 0
    %818 = vmatprep.subr.bf16.mxu0 0
    %819 = vmatpush1.bf16.msra.mxu0 0
    %820 = vmatprep.subr.bf16.mxu0 0
    %821 = vmatpush1.bf16.msra.mxu0 0
    %822 = vmatprep.subr.bf16.mxu0 0
    %823 = vmatpush1.bf16.msra.mxu0 0
    %824 = vmatprep.subr.bf16.mxu0 0
    %825 = vmatpush1.bf16.msra.mxu0 0
    %826 = vmatprep.subr.bf16.mxu0 0
    %827 = vmatpush1.bf16.msra.mxu0 0
    %828 = vmatprep.subr.bf16.mxu0 0
    %829 = vmatpush1.bf16.msra.mxu0 0
    %830 = vmatprep.subr.bf16.mxu0 0
    %831 = vmatpush1.bf16.msra.mxu0 0
    %832 = vmatprep.subr.bf16.mxu0 0
    %833 = vmatpush1.bf16.msra.mxu0 0
    %834 = vmatprep.subr.bf16.mxu0 0
    %835 = vmatpush1.bf16.msra.mxu0 0
    %836 = vmatprep.subr.bf16.mxu0 0
    %837 = vmatpush1.bf16.msra.mxu0 0
    %838 = vmatprep.subr.bf16.mxu0 0
    %839 = vmatpush1.bf16.msra.mxu0 0
    %840 = vmatprep.subr.bf16.mxu0 0
    %841 = vmatpush1.bf16.msra.mxu0 0
    %842 = vmatprep.subr.bf16.mxu0 0
    %843 = vmatpush1.bf16.msra.mxu0 0
    %844 = vmatprep.mubr.bf16.mxu0 0
    %845 = vmatmul.mubr.bf16.gmra.mrb[0].mxu0 %v807
    %v846 = vpop.f32.mrb[0].mxu0
    %v847 = vadd.f32 0.0, %v846
    %v848 = vpop.f32.mrb[0].mxu0
    %v849 = vpop.f32.mrb[0].mxu0
    %v850 = vpop.f32.mrb[0].mxu0
    %851 = vdwg.mxu0
    %852 = vrot.lane.b32.xlu0 %v213, 64
    %v853 = vpop.permute.xlu0 %852
    %v855 = vsel %vm221, %v702, 0
    %v858 = vsel %vm712, %v853, 0
    %860 = vmatprep.subr.bf16.mxu0 0
    %861 = vmatpush1.bf16.msra.mxu0 %v858
    %862 = vmatprep.subr.bf16.mxu0 0
    %863 = vmatpush1.bf16.msra.mxu0 0
    %864 = vmatprep.subr.bf16.mxu0 0
    %865 = vmatpush1.bf16.msra.mxu0 0
    %866 = vmatprep.subr.bf16.mxu0 0
    %867 = vmatpush1.bf16.msra.mxu0 0
    %868 = vmatprep.subr.bf16.mxu0 0
    %869 = vmatpush1.bf16.msra.mxu0 0
    %870 = vmatprep.subr.bf16.mxu0 0
    %871 = vmatpush1.bf16.msra.mxu0 0
    %872 = vmatprep.subr.bf16.mxu0 0
    %873 = vmatpush1.bf16.msra.mxu0 0
    %874 = vmatprep.subr.bf16.mxu0 0
    %875 = vmatpush1.bf16.msra.mxu0 0
    %876 = vmatprep.subr.bf16.mxu0 0
    %877 = vmatpush1.bf16.msra.mxu0 0
    %878 = vmatprep.subr.bf16.mxu0 0
    %879 = vmatpush1.bf16.msra.mxu0 0
    %880 = vmatprep.subr.bf16.mxu0 0
    %881 = vmatpush1.bf16.msra.mxu0 0
    %882 = vmatprep.subr.bf16.mxu0 0
    %883 = vmatpush1.bf16.msra.mxu0 0
    %884 = vmatprep.subr.bf16.mxu0 0
    %885 = vmatpush1.bf16.msra.mxu0 0
    %886 = vmatprep.subr.bf16.mxu0 0
    %887 = vmatpush1.bf16.msra.mxu0 0
    %888 = vmatprep.subr.bf16.mxu0 0
    %889 = vmatpush1.bf16.msra.mxu0 0
    %890 = vmatprep.subr.bf16.mxu0 0
    %891 = vmatpush1.bf16.msra.mxu0 0
    %892 = vmatprep.mubr.bf16.mxu0 0
    %893 = vmatmul.mubr.bf16.gmra.mrb[0].mxu0 %v855
    %v894 = vpop.f32.mrb[0].mxu0
    %v895 = vadd.f32 0.0, %v894
    %v896 = vpop.f32.mrb[0].mxu0
    %v897 = vpop.f32.mrb[0].mxu0
    %v898 = vpop.f32.mrb[0].mxu0
    %899 = vdwg.mxu0
    %900 = vrot.lane.b32.xlu0 %v214, 64
    %v901 = vpop.permute.xlu0 %900
    %v903 = vsel %vm221, %v703, 0
    %v906 = vsel %vm712, %v901, 0
    %908 = vmatprep.subr.bf16.mxu0 0
    %909 = vmatpush1.bf16.msra.mxu0 %v906
    %910 = vmatprep.subr.bf16.mxu0 0
    %911 = vmatpush1.bf16.msra.mxu0 0
    %912 = vmatprep.subr.bf16.mxu0 0
    %913 = vmatpush1.bf16.msra.mxu0 0
    %914 = vmatprep.subr.bf16.mxu0 0
    %915 = vmatpush1.bf16.msra.mxu0 0
    %916 = vmatprep.subr.bf16.mxu0 0
    %917 = vmatpush1.bf16.msra.mxu0 0
    %918 = vmatprep.subr.bf16.mxu0 0
    %919 = vmatpush1.bf16.msra.mxu0 0
    %920 = vmatprep.subr.bf16.mxu0 0
    %921 = vmatpush1.bf16.msra.mxu0 0
    %922 = vmatprep.subr.bf16.mxu0 0
    %923 = vmatpush1.bf16.msra.mxu0 0
    %924 = vmatprep.subr.bf16.mxu0 0
    %925 = vmatpush1.bf16.msra.mxu0 0
    %926 = vmatprep.subr.bf16.mxu0 0
    %927 = vmatpush1.bf16.msra.mxu0 0
    %928 = vmatprep.subr.bf16.mxu0 0
    %929 = vmatpush1.bf16.msra.mxu0 0
    %930 = vmatprep.subr.bf16.mxu0 0
    %931 = vmatpush1.bf16.msra.mxu0 0
    %932 = vmatprep.subr.bf16.mxu0 0
    %933 = vmatpush1.bf16.msra.mxu0 0
    %934 = vmatprep.subr.bf16.mxu0 0
    %935 = vmatpush1.bf16.msra.mxu0 0
    %936 = vmatprep.subr.bf16.mxu0 0
    %937 = vmatpush1.bf16.msra.mxu0 0
    %938 = vmatprep.subr.bf16.mxu0 0
    %939 = vmatpush1.bf16.msra.mxu0 0
    %940 = vmatprep.mubr.bf16.mxu0 0
    %941 = vmatmul.mubr.bf16.gmra.mrb[0].mxu0 %v903
    %v942 = vpop.f32.mrb[0].mxu0
    %v943 = vadd.f32 0.0, %v942
    %v944 = vpop.f32.mrb[0].mxu0
    %v945 = vpop.f32.mrb[0].mxu0
    %v946 = vpop.f32.mrb[0].mxu0
    %947 = vdwg.mxu0
    %948 = vrot.lane.b32.xlu0 %v215, 64
    %v949 = vpop.permute.xlu0 %948
    %v951 = vsel %vm221, %v704, 0
    %v954 = vsel %vm712, %v949, 0
    %956 = vmatprep.subr.bf16.mxu0 0
    %957 = vmatpush1.bf16.msra.mxu0 %v954
    %958 = vmatprep.subr.bf16.mxu0 0
    %959 = vmatpush1.bf16.msra.mxu0 0
    %960 = vmatprep.subr.bf16.mxu0 0
    %961 = vmatpush1.bf16.msra.mxu0 0
    %962 = vmatprep.subr.bf16.mxu0 0
    %963 = vmatpush1.bf16.msra.mxu0 0
    %964 = vmatprep.subr.bf16.mxu0 0
    %965 = vmatpush1.bf16.msra.mxu0 0
    %966 = vmatprep.subr.bf16.mxu0 0
    %967 = vmatpush1.bf16.msra.mxu0 0
    %968 = vmatprep.subr.bf16.mxu0 0
    %969 = vmatpush1.bf16.msra.mxu0 0
    %970 = vmatprep.subr.bf16.mxu0 0
    %971 = vmatpush1.bf16.msra.mxu0 0
    %972 = vmatprep.subr.bf16.mxu0 0
    %973 = vmatpush1.bf16.msra.mxu0 0
    %974 = vmatprep.subr.bf16.mxu0 0
    %975 = vmatpush1.bf16.msra.mxu0 0
    %976 = vmatprep.subr.bf16.mxu0 0
    %977 = vmatpush1.bf16.msra.mxu0 0
    %978 = vmatprep.subr.bf16.mxu0 0
    %979 = vmatpush1.bf16.msra.mxu0 0
    %980 = vmatprep.subr.bf16.mxu0 0
    %981 = vmatpush1.bf16.msra.mxu0 0
    %982 = vmatprep.subr.bf16.mxu0 0
    %983 = vmatpush1.bf16.msra.mxu0 0
    %984 = vmatprep.subr.bf16.mxu0 0
    %985 = vmatpush1.bf16.msra.mxu0 0
    %986 = vmatprep.subr.bf16.mxu0 0
    %987 = vmatpush1.bf16.msra.mxu0 0
    %988 = vmatprep.mubr.bf16.mxu0 0
    %989 = vmatmul.mubr.bf16.gmra.mrb[0].mxu0 %v951
    %v990 = vpop.f32.mrb[0].mxu0
    %v991 = vadd.f32 0.0, %v990
    %v992 = vpop.f32.mrb[0].mxu0
    %v993 = vpop.f32.mrb[0].mxu0
    %v994 = vpop.f32.mrb[0].mxu0
    %995 = vdwg.mxu0
    %996 = vrot.lane.b32.xlu0 %v216, 64
    %v997 = vpop.permute.xlu0 %996
    %v999 = vsel %vm221, %v705, 0
    %v1002 = vsel %vm712, %v997, 0
    %1004 = vmatprep.subr.bf16.mxu0 0
    %1005 = vmatpush1.bf16.msra.mxu0 %v1002
    %1006 = vmatprep.subr.bf16.mxu0 0
    %1007 = vmatpush1.bf16.msra.mxu0 0
    %1008 = vmatprep.subr.bf16.mxu0 0
    %1009 = vmatpush1.bf16.msra.mxu0 0
    %1010 = vmatprep.subr.bf16.mxu0 0
    %1011 = vmatpush1.bf16.msra.mxu0 0
    %1012 = vmatprep.subr.bf16.mxu0 0
    %1013 = vmatpush1.bf16.msra.mxu0 0
    %1014 = vmatprep.subr.bf16.mxu0 0
    %1015 = vmatpush1.bf16.msra.mxu0 0
    %1016 = vmatprep.subr.bf16.mxu0 0
    %1017 = vmatpush1.bf16.msra.mxu0 0
    %1018 = vmatprep.subr.bf16.mxu0 0
    %1019 = vmatpush1.bf16.msra.mxu0 0
    %1020 = vmatprep.subr.bf16.mxu0 0
    %1021 = vmatpush1.bf16.msra.mxu0 0
    %1022 = vmatprep.subr.bf16.mxu0 0
    %1023 = vmatpush1.bf16.msra.mxu0 0
    %1024 = vmatprep.subr.bf16.mxu0 0
    %1025 = vmatpush1.bf16.msra.mxu0 0
    %1026 = vmatprep.subr.bf16.mxu0 0
    %1027 = vmatpush1.bf16.msra.mxu0 0
    %1028 = vmatprep.subr.bf16.mxu0 0
    %1029 = vmatpush1.bf16.msra.mxu0 0
    %1030 = vmatprep.subr.bf16.mxu0 0
    %1031 = vmatpush1.bf16.msra.mxu0 0
    %1032 = vmatprep.subr.bf16.mxu0 0
    %1033 = vmatpush1.bf16.msra.mxu0 0
    %1034 = vmatprep.subr.bf16.mxu0 0
    %1035 = vmatpush1.bf16.msra.mxu0 0
    %1036 = vmatprep.mubr.bf16.mxu0 0
    %1037 = vmatmul.mubr.bf16.gmra.mrb[0].mxu0 %v999
    %v1038 = vpop.f32.mrb[0].mxu0
    %v1039 = vadd.f32 0.0, %v1038
    %v1040 = vpop.f32.mrb[0].mxu0
    %v1041 = vpop.f32.mrb[0].mxu0
    %v1042 = vpop.f32.mrb[0].mxu0
    %1043 = vdwg.mxu0
    %1044 = vrot.lane.b32.xlu0 %v217, 64
    %v1045 = vpop.permute.xlu0 %1044
    %v1047 = vsel %vm221, %v706, 0
    %v1050 = vsel %vm712, %v1045, 0
    %1052 = vmatprep.subr.bf16.mxu0 0
    %1053 = vmatpush1.bf16.msra.mxu0 %v1050
    %1054 = vmatprep.subr.bf16.mxu0 0
    %1055 = vmatpush1.bf16.msra.mxu0 0
    %1056 = vmatprep.subr.bf16.mxu0 0
    %1057 = vmatpush1.bf16.msra.mxu0 0
    %1058 = vmatprep.subr.bf16.mxu0 0
    %1059 = vmatpush1.bf16.msra.mxu0 0
    %1060 = vmatprep.subr.bf16.mxu0 0
    %1061 = vmatpush1.bf16.msra.mxu0 0
    %1062 = vmatprep.subr.bf16.mxu0 0
    %1063 = vmatpush1.bf16.msra.mxu0 0
    %1064 = vmatprep.subr.bf16.mxu0 0
    %1065 = vmatpush1.bf16.msra.mxu0 0
    %1066 = vmatprep.subr.bf16.mxu0 0
    %1067 = vmatpush1.bf16.msra.mxu0 0
    %1068 = vmatprep.subr.bf16.mxu0 0
    %1069 = vmatpush1.bf16.msra.mxu0 0
    %1070 = vmatprep.subr.bf16.mxu0 0
    %1071 = vmatpush1.bf16.msra.mxu0 0
    %1072 = vmatprep.subr.bf16.mxu0 0
    %1073 = vmatpush1.bf16.msra.mxu0 0
    %1074 = vmatprep.subr.bf16.mxu0 0
    %1075 = vmatpush1.bf16.msra.mxu0 0
    %1076 = vmatprep.subr.bf16.mxu0 0
    %1077 = vmatpush1.bf16.msra.mxu0 0
    %1078 = vmatprep.subr.bf16.mxu0 0
    %1079 = vmatpush1.bf16.msra.mxu0 0
    %1080 = vmatprep.subr.bf16.mxu0 0
    %1081 = vmatpush1.bf16.msra.mxu0 0
    %1082 = vmatprep.subr.bf16.mxu0 0
    %1083 = vmatpush1.bf16.msra.mxu0 0
    %1084 = vmatprep.mubr.bf16.mxu0 0
    %1085 = vmatmul.mubr.bf16.gmra.mrb[0].mxu0 %v1047
    %v1086 = vpop.f32.mrb[0].mxu0
    %v1087 = vadd.f32 0.0, %v1086
    %v1088 = vpop.f32.mrb[0].mxu0
    %v1089 = vpop.f32.mrb[0].mxu0
    %v1090 = vpop.f32.mrb[0].mxu0
    %1091 = vdwg.mxu0
    %1094 = vrot.lane.b32.xlu0 %v847, 8
    %v1095 = vpop.permute.xlu0 %1094
    %1096 = vrot.lane.b32.xlu0 %v895, 8
    %v1097 = vpop.permute.xlu0 %1096
    %1102 = vrot.lane.b32.xlu0 %v943, 16
    %v1103 = vpop.permute.xlu0 %1102
    %1104 = vrot.lane.b32.xlu0 %v991, 16
    %v1105 = vpop.permute.xlu0 %1104
    %1110 = vrot.lane.b32.xlu0 %v1039, 24
    %v1111 = vpop.permute.xlu0 %1110
    %1112 = vrot.lane.b32.xlu0 %v1087, 24
    %v1113 = vpop.permute.xlu0 %1112
    %v1116 = vsel %vm221, %v751, %v1095
    %v1117 = vsel %vm221, %v799, %v1097
    %vm1118 = vcmask 130048
    %v1119 = vsel %vm1118, %v1116, %v1103
    %v1120 = vsel %vm1118, %v1117, %v1105
    %vm1121 = vcmask 195584
    %v1122 = vsel %vm1121, %v1119, %v1111
    %v1123 = vsel %vm1121, %v1120, %v1113
    %v1124 = vpack.c.bf16 %v1123, %v1122
    %v1125 = vld [vmem:[%s4] sm:$0xf]
    %v1126 = vld [vmem:[%s4 + $0x4] sm:$0xf]
    %v1127 = vld [vmem:[%s4 + $0x8] sm:$0xf]
    %v1128 = vld [vmem:[%s4 + $0xc] sm:$0xf]
    %v1129 = vld [vmem:[%s5] sm:$0x1]
    %v1131 = vlaneseq
    %v1132 = vshrl.u32 %v1131, 7
    %v1133 = vsub.s32 0, %v1132
    %v1134 = vrot.slane %v1129, %v1133
    %v1140 = vunpack.c.l.b16 %v1125
    %v1141 = vunpack.c.l.b16 %v1126
    %v1142 = vunpack.c.l.b16 %v1127
    %v1143 = vunpack.c.l.b16 %v1128
    %v1144 = vpack.c.b16 %v1141, %v1140
    %v1145 = vpack.c.b16 %v1143, %v1142
    %v1149 = vsel %vm145, %v1124, 0
    %1151 = vmatprep.subr.bf16.mxu0 0
    %1152 = vmatpush1.bf16.msra.mxu0 %v1144
    %1153 = vmatprep.subr.bf16.mxu0 0
    %1154 = vmatpush1.bf16.msra.mxu0 %v1145
    %1155 = vmatprep.subr.bf16.mxu0 0
    %1156 = vmatpush1.bf16.msra.mxu0 0
    %1157 = vmatprep.subr.bf16.mxu0 0
    %1158 = vmatpush1.bf16.msra.mxu0 0
    %1159 = vmatprep.subr.bf16.mxu0 0
    %1160 = vmatpush1.bf16.msra.mxu0 0
    %1161 = vmatprep.subr.bf16.mxu0 0
    %1162 = vmatpush1.bf16.msra.mxu0 0
    %1163 = vmatprep.subr.bf16.mxu0 0
    %1164 = vmatpush1.bf16.msra.mxu0 0
    %1165 = vmatprep.subr.bf16.mxu0 0
    %1166 = vmatpush1.bf16.msra.mxu0 0
    %1167 = vmatprep.subr.bf16.mxu0 0
    %1168 = vmatpush1.bf16.msra.mxu0 0
    %1169 = vmatprep.subr.bf16.mxu0 0
    %1170 = vmatpush1.bf16.msra.mxu0 0
    %1171 = vmatprep.subr.bf16.mxu0 0
    %1172 = vmatpush1.bf16.msra.mxu0 0
    %1173 = vmatprep.subr.bf16.mxu0 0
    %1174 = vmatpush1.bf16.msra.mxu0 0
    %1175 = vmatprep.subr.bf16.mxu0 0
    %1176 = vmatpush1.bf16.msra.mxu0 0
    %1177 = vmatprep.subr.bf16.mxu0 0
    %1178 = vmatpush1.bf16.msra.mxu0 0
    %1179 = vmatprep.subr.bf16.mxu0 0
    %1180 = vmatpush1.bf16.msra.mxu0 0
    %1181 = vmatprep.subr.bf16.mxu0 0
    %1182 = vmatpush1.bf16.msra.mxu0 0
    %1183 = vmatprep.mubr.bf16.mxu0 0
    %1184 = vmatmul.mubr.bf16.gmra.mrb[0].mxu0 %v1149
    %v1185 = vpop.f32.mrb[0].mxu0
    %v1186 = vadd.f32 %v1134, %v1185
    %v1187 = vpop.f32.mrb[0].mxu0
    %v1188 = vpop.f32.mrb[0].mxu0
    %v1189 = vadd.f32 %v1134, %v1188
    %v1190 = vpop.f32.mrb[0].mxu0
    %1191 = vdwg.mxu0
    %v1192 = vadd.f32 %v117, %v1186
    %v1193 = vadd.f32 %v118, %v1189
    %v1194 = vld [vmem:[#allocation7] sm:$0x1]
    %v1195 = vld [vmem:[#allocation8] sm:$0x1]
    %v1196 = vsel %vm145, %v1192, 0.0
    %1197 = vadd.xlane.f32.xlu0 %v1196
    %v1198 = vpop.xlane.xlu0 %1197
    %v1199 = vsel %vm145, %v1193, 0.0
    %1200 = vadd.xlane.f32.xlu0 %v1199
    %v1201 = vpop.xlane.xlu0 %1200
    %v1202 = vrcp.pop 32.0
    %v1203 = vmul.f32 %v1198, %v1202
    %v1204 = vmul.f32 %v1201, %v1202
    %v1205 = vsub.f32 %v1192, %v1203
    %v1206 = vsub.f32 %v1193, %v1204
    %v1207 = vmul.f32 %v1205, %v1205
    %v1208 = vmul.f32 %v1206, %v1206
    %v1209 = vsel %vm145, %v1207, 0.0
    %1210 = vadd.xlane.f32.xlu0 %v1209
    %v1211 = vpop.xlane.xlu0 %1210
    %v1212 = vsel %vm145, %v1208, 0.0
    %1213 = vadd.xlane.f32.xlu0 %v1212
    %v1214 = vpop.xlane.xlu0 %1213
    %v1215 = vmul.f32 %v1211, %v1202
    %v1216 = vmul.f32 %v1214, %v1202
    %v1217 = vadd.f32 %v1215, 1e-05
    %v1218 = vadd.f32 %v1216, 1e-05
    %v1219 = vrsqrt.pop %v1217
    %v1220 = vrsqrt.pop %v1218
    %v1221 = vmul.f32 %v1205, %v1219
    %v1222 = vmul.f32 %v1206, %v1220
    %v1224 = vlaneseq
    %v1225 = vshrl.u32 %v1224, 7
    %v1226 = vsub.s32 0, %v1225
    %v1227 = vrot.slane %v1194, %v1226
    %v1229 = vmul.f32 %v1221, %v1227
    %v1230 = vmul.f32 %v1222, %v1227
    %v1232 = vlaneseq
    %v1233 = vshrl.u32 %v1232, 7
    %v1234 = vsub.s32 0, %v1233
    %v1235 = vrot.slane %v1195, %v1234
    %v1237 = vadd.f32 %v1229, %v1235
    %v1238 = vadd.f32 %v1230, %v1235
    %v1239 = vpack.c.bf16 %v1238, %v1237
    %v1240 = vld [vmem:[%s8] sm:$0xf]
    %v1241 = vld [vmem:[%s8 + $0x4] sm:$0xf]
    %v1242 = vld [vmem:[%s8 + $0x8] sm:$0xf]
    %v1243 = vld [vmem:[%s8 + $0xc] sm:$0xf]
    %v1244 = vld [vmem:[#allocation10] sm:$0x1]
    %v1246 = vlaneseq
    %v1247 = vshrl.u32 %v1246, 7
    %v1248 = vsub.s32 0, %v1247
    %v1249 = vrot.slane %v1244, %v1248
    %v1255 = vunpack.c.l.b16 %v1240
    %v1256 = vunpack.c.l.b16 %v1241
    %v1257 = vunpack.c.l.b16 %v1242
    %v1258 = vunpack.c.l.b16 %v1243
    %v1259 = vpack.c.b16 %v1256, %v1255
    %v1260 = vpack.c.b16 %v1258, %v1257
    %v1264 = vsel %vm145, %v1239, 0
    %1266 = vmatprep.subr.bf16.mxu0 0
    %1267 = vmatpush1.bf16.msra.mxu0 %v1259
    %1268 = vmatprep.subr.bf16.mxu0 0
    %1269 = vmatpush1.bf16.msra.mxu0 %v1260
    %1270 = vmatprep.subr.bf16.mxu0 0
    %1271 = vmatpush1.bf16.msra.mxu0 0
    %1272 = vmatprep.subr.bf16.mxu0 0
    %1273 = vmatpush1.bf16.msra.mxu0 0
    %1274 = vmatprep.subr.bf16.mxu0 0
    %1275 = vmatpush1.bf16.msra.mxu0 0
    %1276 = vmatprep.subr.bf16.mxu0 0
    %1277 = vmatpush1.bf16.msra.mxu0 0
    %1278 = vmatprep.subr.bf16.mxu0 0
    %1279 = vmatpush1.bf16.msra.mxu0 0
    %1280 = vmatprep.subr.bf16.mxu0 0
    %1281 = vmatpush1.bf16.msra.mxu0 0
    %1282 = vmatprep.subr.bf16.mxu0 0
    %1283 = vmatpush1.bf16.msra.mxu0 0
    %1284 = vmatprep.subr.bf16.mxu0 0
    %1285 = vmatpush1.bf16.msra.mxu0 0
    %1286 = vmatprep.subr.bf16.mxu0 0
    %1287 = vmatpush1.bf16.msra.mxu0 0
    %1288 = vmatprep.subr.bf16.mxu0 0
    %1289 = vmatpush1.bf16.msra.mxu0 0
    %1290 = vmatprep.subr.bf16.mxu0 0
    %1291 = vmatpush1.bf16.msra.mxu0 0
    %1292 = vmatprep.subr.bf16.mxu0 0
    %1293 = vmatpush1.bf16.msra.mxu0 0
    %1294 = vmatprep.subr.bf16.mxu0 0
    %1295 = vmatpush1.bf16.msra.mxu0 0
    %1296 = vmatprep.subr.bf16.mxu0 0
    %1297 = vmatpush1.bf16.msra.mxu0 0
    %1298 = vmatprep.mubr.bf16.mxu0 0
    %1299 = vmatmul.mubr.bf16.gmra.mrb[0].mxu0 %v1264
    %v1300 = vpop.f32.mrb[0].mxu0
    %v1301 = vadd.f32 %v1249, %v1300
    %v1302 = vpop.f32.mrb[0].mxu0
    %v1303 = vpop.f32.mrb[0].mxu0
    %v1304 = vadd.f32 %v1249, %v1303
    %v1305 = vpop.f32.mrb[0].mxu0
    %1306 = vdwg.mxu0
    %v1307 = vmax.f32 %v1301, 0.0
    %v1308 = vmax.f32 %v1304, 0.0
    %v1309 = vpack.c.bf16 %v1308, %v1307
    %v1310 = vld [vmem:[%s10] sm:$0xf]
    %v1311 = vld [vmem:[%s10 + $0x4] sm:$0xf]
    %v1312 = vld [vmem:[%s10 + $0x8] sm:$0xf]
    %v1313 = vld [vmem:[%s10 + $0xc] sm:$0xf]
    %v1314 = vld [vmem:[%s10 + $0x10] sm:$0xf]
    %v1315 = vld [vmem:[%s10 + $0x14] sm:$0xf]
    %v1316 = vld [vmem:[%s10 + $0x18] sm:$0xf]
    %v1317 = vld [vmem:[%s10 + $0x1c] sm:$0xf]
    %v1318 = vld [vmem:[%s11] sm:$0x1]
    %v1320 = vlaneseq
    %v1321 = vshrl.u32 %v1320, 7
    %v1322 = vsub.s32 0, %v1321
    %v1323 = vrot.slane %v1318, %v1322
    %v1333 = vunpack.c.l.b16 %v1310
    %v1334 = vunpack.c.l.b16 %v1311
    %v1335 = vunpack.c.l.b16 %v1312
    %v1336 = vunpack.c.l.b16 %v1313
    %v1337 = vunpack.c.l.b16 %v1314
    %v1338 = vunpack.c.l.b16 %v1315
    %v1339 = vunpack.c.l.b16 %v1316
    %v1340 = vunpack.c.l.b16 %v1317
    %v1341 = vpack.c.b16 %v1334, %v1333
    %v1342 = vpack.c.b16 %v1336, %v1335
    %v1343 = vpack.c.b16 %v1338, %v1337
    %v1344 = vpack.c.b16 %v1340, %v1339
    %vm1349 = vcmask 523264
    %v1351 = vsel %vm1349, %v1309, 0
    %1353 = vmatprep.subr.bf16.mxu0 0
    %1354 = vmatpush1.bf16.msra.mxu0 %v1341
    %1355 = vmatprep.subr.bf16.mxu0 0
    %1356 = vmatpush1.bf16.msra.mxu0 %v1342
    %1357 = vmatprep.subr.bf16.mxu0 0
    %1358 = vmatpush1.bf16.msra.mxu0 %v1343
    %1359 = vmatprep.subr.bf16.mxu0 0
    %1360 = vmatpush1.bf16.msra.mxu0 %v1344
    %1361 = vmatprep.subr.bf16.mxu0 0
    %1362 = vmatpush1.bf16.msra.mxu0 0
    %1363 = vmatprep.subr.bf16.mxu0 0
    %1364 = vmatpush1.bf16.msra.mxu0 0
    %1365 = vmatprep.subr.bf16.mxu0 0
    %1366 = vmatpush1.bf16.msra.mxu0 0
    %1367 = vmatprep.subr.bf16.mxu0 0
    %1368 = vmatpush1.bf16.msra.mxu0 0
    %1369 = vmatprep.subr.bf16.mxu0 0
    %1370 = vmatpush1.bf16.msra.mxu0 0
    %1371 = vmatprep.subr.bf16.mxu0 0
    %1372 = vmatpush1.bf16.msra.mxu0 0
    %1373 = vmatprep.subr.bf16.mxu0 0
    %1374 = vmatpush1.bf16.msra.mxu0 0
    %1375 = vmatprep.subr.bf16.mxu0 0
    %1376 = vmatpush1.bf16.msra.mxu0 0
    %1377 = vmatprep.subr.bf16.mxu0 0
    %1378 = vmatpush1.bf16.msra.mxu0 0
    %1379 = vmatprep.subr.bf16.mxu0 0
    %1380 = vmatpush1.bf16.msra.mxu0 0
    %1381 = vmatprep.subr.bf16.mxu0 0
    %1382 = vmatpush1.bf16.msra.mxu0 0
    %1383 = vmatprep.subr.bf16.mxu0 0
    %1384 = vmatpush1.bf16.msra.mxu0 0
    %1385 = vmatprep.mubr.bf16.mxu0 0
    %1386 = vmatmul.mubr.bf16.gmra.mrb[0].mxu0 %v1351
    %v1387 = vpop.f32.mrb[0].mxu0
    %v1388 = vadd.f32 %v1323, %v1387
    %v1389 = vpop.f32.mrb[0].mxu0
    %v1390 = vpop.f32.mrb[0].mxu0
    %v1391 = vadd.f32 %v1323, %v1390
    %v1392 = vpop.f32.mrb[0].mxu0
    %1393 = vdwg.mxu0
    %v1394 = vadd.f32 %v1237, %v1388
    %v1395 = vadd.f32 %v1238, %v1391
    %v1396 = vld [vmem:[%s12] sm:$0x1]
    %v1397 = vld [vmem:[%s13] sm:$0x1]
    %v1398 = vsel %vm145, %v1394, 0.0
    %1399 = vadd.xlane.f32.xlu0 %v1398
    %v1400 = vpop.xlane.xlu0 %1399
    %v1401 = vsel %vm145, %v1395, 0.0
    %1402 = vadd.xlane.f32.xlu0 %v1401
    %v1403 = vpop.xlane.xlu0 %1402
    %v1404 = vmul.f32 %v1400, %v1202
    %v1405 = vmul.f32 %v1403, %v1202
    %v1406 = vsub.f32 %v1394, %v1404
    %v1407 = vsub.f32 %v1395, %v1405
    %v1408 = vmul.f32 %v1406, %v1406
    %v1409 = vmul.f32 %v1407, %v1407
    %v1410 = vsel %vm145, %v1408, 0.0
    %1411 = vadd.xlane.f32.xlu0 %v1410
    %v1412 = vpop.xlane.xlu0 %1411
    %v1413 = vsel %vm145, %v1409, 0.0
    %1414 = vadd.xlane.f32.xlu0 %v1413
    %v1415 = vpop.xlane.xlu0 %1414
    %v1416 = vmul.f32 %v1412, %v1202
    %v1417 = vmul.f32 %v1415, %v1202
    %v1418 = vadd.f32 %v1416, 1e-05
    %v1419 = vadd.f32 %v1417, 1e-05
    %v1420 = vrsqrt.pop %v1418
    %v1421 = vrsqrt.pop %v1419
    %v1422 = vmul.f32 %v1406, %v1420
    %v1423 = vmul.f32 %v1407, %v1421
    %v1425 = vlaneseq
    %v1426 = vshrl.u32 %v1425, 7
    %v1427 = vsub.s32 0, %v1426
    %v1428 = vrot.slane %v1396, %v1427
    %v1430 = vmul.f32 %v1422, %v1428
    %v1431 = vmul.f32 %v1423, %v1428
    %v1433 = vlaneseq
    %v1434 = vshrl.u32 %v1433, 7
    %v1435 = vsub.s32 0, %v1434
    %v1436 = vrot.slane %v1397, %v1435
    %v1438 = vadd.f32 %v1430, %v1436
    %v1439 = vadd.f32 %v1431, %v1436
    %v1440 = vpack.c.bf16 %v1439, %v1438
    %s1441 = scalar_lea.vmem %s2, 16
    %v1442 = vld [vmem:[%s1441] sm:$0xf]
    %v1443 = vld [vmem:[%s1441 + $0x4] sm:$0xf]
    %v1444 = vld [vmem:[%s1441 + $0x8] sm:$0xf]
    %v1445 = vld [vmem:[%s1441 + $0xc] sm:$0xf]
    %s1446 = scalar_lea.vmem %s3, 1
    %v1447 = vld [vmem:[%s1446] sm:$0x1]
    %v1449 = vlaneseq
    %v1450 = vshrl.u32 %v1449, 7
    %v1451 = vsub.s32 0, %v1450
    %v1452 = vrot.slane %v1447, %v1451
    %v1458 = vunpack.c.l.b16 %v1442
    %v1459 = vunpack.c.l.b16 %v1443
    %v1460 = vunpack.c.l.b16 %v1444
    %v1461 = vunpack.c.l.b16 %v1445
    %v1462 = vpack.c.b16 %v1459, %v1458
    %v1463 = vpack.c.b16 %v1461, %v1460
    %v1467 = vsel %vm145, %v1440, 0
    %1469 = vmatprep.subr.bf16.mxu0 0
    %1470 = vmatpush1.bf16.msra.mxu0 %v1462
    %1471 = vmatprep.subr.bf16.mxu0 0
    %1472 = vmatpush1.bf16.msra.mxu0 %v1463
    %1473 = vmatprep.subr.bf16.mxu0 0
    %1474 = vmatpush1.bf16.msra.mxu0 0
    %1475 = vmatprep.subr.bf16.mxu0 0
    %1476 = vmatpush1.bf16.msra.mxu0 0
    %1477 = vmatprep.subr.bf16.mxu0 0
    %1478 = vmatpush1.bf16.msra.mxu0 0
    %1479 = vmatprep.subr.bf16.mxu0 0
    %1480 = vmatpush1.bf16.msra.mxu0 0
    %1481 = vmatprep.subr.bf16.mxu0 0
    %1482 = vmatpush1.bf16.msra.mxu0 0
    %1483 = vmatprep.subr.bf16.mxu0 0
    %1484 = vmatpush1.bf16.msra.mxu0 0
    %1485 = vmatprep.subr.bf16.mxu0 0
    %1486 = vmatpush1.bf16.msra.mxu0 0
    %1487 = vmatprep.subr.bf16.mxu0 0
    %1488 = vmatpush1.bf16.msra.mxu0 0
    %1489 = vmatprep.subr.bf16.mxu0 0
    %1490 = vmatpush1.bf16.msra.mxu0 0
    %1491 = vmatprep.subr.bf16.mxu0 0
    %1492 = vmatpush1.bf16.msra.mxu0 0
    %1493 = vmatprep.subr.bf16.mxu0 0
    %1494 = vmatpush1.bf16.msra.mxu0 0
    %1495 = vmatprep.subr.bf16.mxu0 0
    %1496 = vmatpush1.bf16.msra.mxu0 0
    %1497 = vmatprep.subr.bf16.mxu0 0
    %1498 = vmatpush1.bf16.msra.mxu0 0
    %1499 = vmatprep.subr.bf16.mxu0 0
    %1500 = vmatpush1.bf16.msra.mxu0 0
    %1501 = vmatprep.mubr.bf16.mxu0 0
    %1502 = vmatmul.mubr.bf16.gmra.mrb[0].mxu0 %v1467
    %v1503 = vpop.f32.mrb[0].mxu0
    %v1504 = vadd.f32 %v1452, %v1503
    %v1505 = vpop.f32.mrb[0].mxu0
    %v1506 = vpop.f32.mrb[0].mxu0
    %v1507 = vadd.f32 %v1452, %v1506
    %v1508 = vpop.f32.mrb[0].mxu0
    %1509 = vdwg.mxu0
    %1512 = vrot.lane.b32.xlu0 %v1504, 120
    %v1513 = vpop.permute.xlu0 %1512
    %1514 = vrot.lane.b32.xlu0 %v1507, 120
    %v1515 = vpop.permute.xlu0 %1514
    %1518 = vrot.lane.b32.xlu0 %v1504, 112
    %v1519 = vpop.permute.xlu0 %1518
    %1520 = vrot.lane.b32.xlu0 %v1507, 112
    %v1521 = vpop.permute.xlu0 %1520
    %1524 = vrot.lane.b32.xlu0 %v1504, 104
    %v1525 = vpop.permute.xlu0 %1524
    %1526 = vrot.lane.b32.xlu0 %v1507, 104
    %v1527 = vpop.permute.xlu0 %1526
    %v1530 = vpack.c.bf16 %v1504, %v1504
    %v1531 = vpack.c.bf16 %v1507, %v1507
    %v1532 = vpack.c.bf16 %v1513, %v1513
    %v1533 = vpack.c.bf16 %v1515, %v1515
    %v1534 = vpack.c.bf16 %v1519, %v1519
    %v1535 = vpack.c.bf16 %v1521, %v1521
    %v1536 = vpack.c.bf16 %v1525, %v1525
    %v1537 = vpack.c.bf16 %v1527, %v1527
    %1539 = vrot.lane.b32.xlu0 %v1530, 96
    %v1540 = vpop.permute.xlu0 %1539
    %v1542 = vsel %vm221, %v1530, 0
    %v1545 = vsel %vm221, %v1540, 0
    %1547 = vmatprep.subr.bf16.mxu0 0
    %1548 = vmatpush1.bf16.xpose.msra.mxu0 %v1545
    %1549 = vmatprep.subr.bf16.mxu0 0
    %1550 = vmatpush1.bf16.xpose.msra.mxu0 0
    %1551 = vmatprep.subr.bf16.mxu0 0
    %1552 = vmatpush1.bf16.xpose.msra.mxu0 0
    %1553 = vmatprep.subr.bf16.mxu0 0
    %1554 = vmatpush1.bf16.xpose.msra.mxu0 0
    %1555 = vmatprep.subr.bf16.mxu0 0
    %1556 = vmatpush1.bf16.xpose.msra.mxu0 0
    %1557 = vmatprep.subr.bf16.mxu0 0
    %1558 = vmatpush1.bf16.xpose.msra.mxu0 0
    %1559 = vmatprep.subr.bf16.mxu0 0
    %1560 = vmatpush1.bf16.xpose.msra.mxu0 0
    %1561 = vmatprep.subr.bf16.mxu0 0
    %1562 = vmatpush1.bf16.xpose.msra.mxu0 0
    %1563 = vmatprep.subr.bf16.mxu0 0
    %1564 = vmatpush1.bf16.xpose.msra.mxu0 0
    %1565 = vmatprep.subr.bf16.mxu0 0
    %1566 = vmatpush1.bf16.xpose.msra.mxu0 0
    %1567 = vmatprep.subr.bf16.mxu0 0
    %1568 = vmatpush1.bf16.xpose.msra.mxu0 0
    %1569 = vmatprep.subr.bf16.mxu0 0
    %1570 = vmatpush1.bf16.xpose.msra.mxu0 0
    %1571 = vmatprep.subr.bf16.mxu0 0
    %1572 = vmatpush1.bf16.xpose.msra.mxu0 0
    %1573 = vmatprep.subr.bf16.mxu0 0
    %1574 = vmatpush1.bf16.xpose.msra.mxu0 0
    %1575 = vmatprep.subr.bf16.mxu0 0
    %1576 = vmatpush1.bf16.xpose.msra.mxu0 0
    %1577 = vmatprep.subr.bf16.mxu0 0
    %1578 = vmatpush1.bf16.xpose.msra.mxu0 0
    %1579 = vmatprep.mubr.bf16.mxu0 0
    %1580 = vmatmul.mubr.bf16.gmra.mrb[0].mxu0 %v1542
    %v1581 = vpop.f32.mrb[0].mxu0
    %v1582 = vadd.f32 %v119, %v1581
    %v1583 = vpop.f32.mrb[0].mxu0
    %v1584 = vpop.f32.mrb[0].mxu0
    %v1585 = vpop.f32.mrb[0].mxu0
    %1586 = vdwg.mxu0
    %1588 = vrot.lane.b32.xlu0 %v1531, 96
    %v1589 = vpop.permute.xlu0 %1588
    %v1591 = vsel %vm221, %v1531, 0
    %v1594 = vsel %vm221, %v1589, 0
    %1596 = vmatprep.subr.bf16.mxu0 0
    %1597 = vmatpush1.bf16.xpose.msra.mxu0 %v1594
    %1598 = vmatprep.subr.bf16.mxu0 0
    %1599 = vmatpush1.bf16.xpose.msra.mxu0 0
    %1600 = vmatprep.subr.bf16.mxu0 0
    %1601 = vmatpush1.bf16.xpose.msra.mxu0 0
    %1602 = vmatprep.subr.bf16.mxu0 0
    %1603 = vmatpush1.bf16.xpose.msra.mxu0 0
    %1604 = vmatprep.subr.bf16.mxu0 0
    %1605 = vmatpush1.bf16.xpose.msra.mxu0 0
    %1606 = vmatprep.subr.bf16.mxu0 0
    %1607 = vmatpush1.bf16.xpose.msra.mxu0 0
    %1608 = vmatprep.subr.bf16.mxu0 0
    %1609 = vmatpush1.bf16.xpose.msra.mxu0 0
    %1610 = vmatprep.subr.bf16.mxu0 0
    %1611 = vmatpush1.bf16.xpose.msra.mxu0 0
    %1612 = vmatprep.subr.bf16.mxu0 0
    %1613 = vmatpush1.bf16.xpose.msra.mxu0 0
    %1614 = vmatprep.subr.bf16.mxu0 0
    %1615 = vmatpush1.bf16.xpose.msra.mxu0 0
    %1616 = vmatprep.subr.bf16.mxu0 0
    %1617 = vmatpush1.bf16.xpose.msra.mxu0 0
    %1618 = vmatprep.subr.bf16.mxu0 0
    %1619 = vmatpush1.bf16.xpose.msra.mxu0 0
    %1620 = vmatprep.subr.bf16.mxu0 0
    %1621 = vmatpush1.bf16.xpose.msra.mxu0 0
    %1622 = vmatprep.subr.bf16.mxu0 0
    %1623 = vmatpush1.bf16.xpose.msra.mxu0 0
    %1624 = vmatprep.subr.bf16.mxu0 0
    %1625 = vmatpush1.bf16.xpose.msra.mxu0 0
    %1626 = vmatprep.subr.bf16.mxu0 0
    %1627 = vmatpush1.bf16.xpose.msra.mxu0 0
    %1628 = vmatprep.mubr.bf16.mxu0 0
    %1629 = vmatmul.mubr.bf16.gmra.mrb[0].mxu0 %v1591
    %v1630 = vpop.f32.mrb[0].mxu0
    %v1631 = vadd.f32 %v120, %v1630
    %v1632 = vpop.f32.mrb[0].mxu0
    %v1633 = vpop.f32.mrb[0].mxu0
    %v1634 = vpop.f32.mrb[0].mxu0
    %1635 = vdwg.mxu0
    %1637 = vrot.lane.b32.xlu0 %v1532, 96
    %v1638 = vpop.permute.xlu0 %1637
    %v1640 = vsel %vm221, %v1532, 0
    %v1643 = vsel %vm221, %v1638, 0
    %1645 = vmatprep.subr.bf16.mxu0 0
    %1646 = vmatpush1.bf16.xpose.msra.mxu0 %v1643
    %1647 = vmatprep.subr.bf16.mxu0 0
    %1648 = vmatpush1.bf16.xpose.msra.mxu0 0
    %1649 = vmatprep.subr.bf16.mxu0 0
    %1650 = vmatpush1.bf16.xpose.msra.mxu0 0
    %1651 = vmatprep.subr.bf16.mxu0 0
    %1652 = vmatpush1.bf16.xpose.msra.mxu0 0
    %1653 = vmatprep.subr.bf16.mxu0 0
    %1654 = vmatpush1.bf16.xpose.msra.mxu0 0
    %1655 = vmatprep.subr.bf16.mxu0 0
    %1656 = vmatpush1.bf16.xpose.msra.mxu0 0
    %1657 = vmatprep.subr.bf16.mxu0 0
    %1658 = vmatpush1.bf16.xpose.msra.mxu0 0
    %1659 = vmatprep.subr.bf16.mxu0 0
    %1660 = vmatpush1.bf16.xpose.msra.mxu0 0
    %1661 = vmatprep.subr.bf16.mxu0 0
    %1662 = vmatpush1.bf16.xpose.msra.mxu0 0
    %1663 = vmatprep.subr.bf16.mxu0 0
    %1664 = vmatpush1.bf16.xpose.msra.mxu0 0
    %1665 = vmatprep.subr.bf16.mxu0 0
    %1666 = vmatpush1.bf16.xpose.msra.mxu0 0
    %1667 = vmatprep.subr.bf16.mxu0 0
    %1668 = vmatpush1.bf16.xpose.msra.mxu0 0
    %1669 = vmatprep.subr.bf16.mxu0 0
    %1670 = vmatpush1.bf16.xpose.msra.mxu0 0
    %1671 = vmatprep.subr.bf16.mxu0 0
    %1672 = vmatpush1.bf16.xpose.msra.mxu0 0
    %1673 = vmatprep.subr.bf16.mxu0 0
    %1674 = vmatpush1.bf16.xpose.msra.mxu0 0
    %1675 = vmatprep.subr.bf16.mxu0 0
    %1676 = vmatpush1.bf16.xpose.msra.mxu0 0
    %1677 = vmatprep.mubr.bf16.mxu0 0
    %1678 = vmatmul.mubr.bf16.gmra.mrb[0].mxu0 %v1640
    %v1679 = vpop.f32.mrb[0].mxu0
    %v1680 = vadd.f32 %v119, %v1679
    %v1681 = vpop.f32.mrb[0].mxu0
    %v1682 = vpop.f32.mrb[0].mxu0
    %v1683 = vpop.f32.mrb[0].mxu0
    %1684 = vdwg.mxu0
    %1686 = vrot.lane.b32.xlu0 %v1533, 96
    %v1687 = vpop.permute.xlu0 %1686
    %v1689 = vsel %vm221, %v1533, 0
    %v1692 = vsel %vm221, %v1687, 0
    %1694 = vmatprep.subr.bf16.mxu0 0
    %1695 = vmatpush1.bf16.xpose.msra.mxu0 %v1692
    %1696 = vmatprep.subr.bf16.mxu0 0
    %1697 = vmatpush1.bf16.xpose.msra.mxu0 0
    %1698 = vmatprep.subr.bf16.mxu0 0
    %1699 = vmatpush1.bf16.xpose.msra.mxu0 0
    %1700 = vmatprep.subr.bf16.mxu0 0
    %1701 = vmatpush1.bf16.xpose.msra.mxu0 0
    %1702 = vmatprep.subr.bf16.mxu0 0
    %1703 = vmatpush1.bf16.xpose.msra.mxu0 0
    %1704 = vmatprep.subr.bf16.mxu0 0
    %1705 = vmatpush1.bf16.xpose.msra.mxu0 0
    %1706 = vmatprep.subr.bf16.mxu0 0
    %1707 = vmatpush1.bf16.xpose.msra.mxu0 0
    %1708 = vmatprep.subr.bf16.mxu0 0
    %1709 = vmatpush1.bf16.xpose.msra.mxu0 0
    %1710 = vmatprep.subr.bf16.mxu0 0
    %1711 = vmatpush1.bf16.xpose.msra.mxu0 0
    %1712 = vmatprep.subr.bf16.mxu0 0
    %1713 = vmatpush1.bf16.xpose.msra.mxu0 0
    %1714 = vmatprep.subr.bf16.mxu0 0
    %1715 = vmatpush1.bf16.xpose.msra.mxu0 0
    %1716 = vmatprep.subr.bf16.mxu0 0
    %1717 = vmatpush1.bf16.xpose.msra.mxu0 0
    %1718 = vmatprep.subr.bf16.mxu0 0
    %1719 = vmatpush1.bf16.xpose.msra.mxu0 0
    %1720 = vmatprep.subr.bf16.mxu0 0
    %1721 = vmatpush1.bf16.xpose.msra.mxu0 0
    %1722 = vmatprep.subr.bf16.mxu0 0
    %1723 = vmatpush1.bf16.xpose.msra.mxu0 0
    %1724 = vmatprep.subr.bf16.mxu0 0
    %1725 = vmatpush1.bf16.xpose.msra.mxu0 0
    %1726 = vmatprep.mubr.bf16.mxu0 0
    %1727 = vmatmul.mubr.bf16.gmra.mrb[0].mxu0 %v1689
    %v1728 = vpop.f32.mrb[0].mxu0
    %v1729 = vadd.f32 %v120, %v1728
    %v1730 = vpop.f32.mrb[0].mxu0
    %v1731 = vpop.f32.mrb[0].mxu0
    %v1732 = vpop.f32.mrb[0].mxu0
    %1733 = vdwg.mxu0
    %1735 = vrot.lane.b32.xlu0 %v1534, 96
    %v1736 = vpop.permute.xlu0 %1735
    %v1738 = vsel %vm221, %v1534, 0
    %v1741 = vsel %vm221, %v1736, 0
    %1743 = vmatprep.subr.bf16.mxu0 0
    %1744 = vmatpush1.bf16.xpose.msra.mxu0 %v1741
    %1745 = vmatprep.subr.bf16.mxu0 0
    %1746 = vmatpush1.bf16.xpose.msra.mxu0 0
    %1747 = vmatprep.subr.bf16.mxu0 0
    %1748 = vmatpush1.bf16.xpose.msra.mxu0 0
    %1749 = vmatprep.subr.bf16.mxu0 0
    %1750 = vmatpush1.bf16.xpose.msra.mxu0 0
    %1751 = vmatprep.subr.bf16.mxu0 0
    %1752 = vmatpush1.bf16.xpose.msra.mxu0 0
    %1753 = vmatprep.subr.bf16.mxu0 0
    %1754 = vmatpush1.bf16.xpose.msra.mxu0 0
    %1755 = vmatprep.subr.bf16.mxu0 0
    %1756 = vmatpush1.bf16.xpose.msra.mxu0 0
    %1757 = vmatprep.subr.bf16.mxu0 0
    %1758 = vmatpush1.bf16.xpose.msra.mxu0 0
    %1759 = vmatprep.subr.bf16.mxu0 0
    %1760 = vmatpush1.bf16.xpose.msra.mxu0 0
    %1761 = vmatprep.subr.bf16.mxu0 0
    %1762 = vmatpush1.bf16.xpose.msra.mxu0 0
    %1763 = vmatprep.subr.bf16.mxu0 0
    %1764 = vmatpush1.bf16.xpose.msra.mxu0 0
    %1765 = vmatprep.subr.bf16.mxu0 0
    %1766 = vmatpush1.bf16.xpose.msra.mxu0 0
    %1767 = vmatprep.subr.bf16.mxu0 0
    %1768 = vmatpush1.bf16.xpose.msra.mxu0 0
    %1769 = vmatprep.subr.bf16.mxu0 0
    %1770 = vmatpush1.bf16.xpose.msra.mxu0 0
    %1771 = vmatprep.subr.bf16.mxu0 0
    %1772 = vmatpush1.bf16.xpose.msra.mxu0 0
    %1773 = vmatprep.subr.bf16.mxu0 0
    %1774 = vmatpush1.bf16.xpose.msra.mxu0 0
    %1775 = vmatprep.mubr.bf16.mxu0 0
    %1776 = vmatmul.mubr.bf16.gmra.mrb[0].mxu0 %v1738
    %v1777 = vpop.f32.mrb[0].mxu0
    %v1778 = vadd.f32 %v119, %v1777
    %v1779 = vpop.f32.mrb[0].mxu0
    %v1780 = vpop.f32.mrb[0].mxu0
    %v1781 = vpop.f32.mrb[0].mxu0
    %1782 = vdwg.mxu0
    %1784 = vrot.lane.b32.xlu0 %v1535, 96
    %v1785 = vpop.permute.xlu0 %1784
    %v1787 = vsel %vm221, %v1535, 0
    %v1790 = vsel %vm221, %v1785, 0
    %1792 = vmatprep.subr.bf16.mxu0 0
    %1793 = vmatpush1.bf16.xpose.msra.mxu0 %v1790
    %1794 = vmatprep.subr.bf16.mxu0 0
    %1795 = vmatpush1.bf16.xpose.msra.mxu0 0
    %1796 = vmatprep.subr.bf16.mxu0 0
    %1797 = vmatpush1.bf16.xpose.msra.mxu0 0
    %1798 = vmatprep.subr.bf16.mxu0 0
    %1799 = vmatpush1.bf16.xpose.msra.mxu0 0
    %1800 = vmatprep.subr.bf16.mxu0 0
    %1801 = vmatpush1.bf16.xpose.msra.mxu0 0
    %1802 = vmatprep.subr.bf16.mxu0 0
    %1803 = vmatpush1.bf16.xpose.msra.mxu0 0
    %1804 = vmatprep.subr.bf16.mxu0 0
    %1805 = vmatpush1.bf16.xpose.msra.mxu0 0
    %1806 = vmatprep.subr.bf16.mxu0 0
    %1807 = vmatpush1.bf16.xpose.msra.mxu0 0
    %1808 = vmatprep.subr.bf16.mxu0 0
    %1809 = vmatpush1.bf16.xpose.msra.mxu0 0
    %1810 = vmatprep.subr.bf16.mxu0 0
    %1811 = vmatpush1.bf16.xpose.msra.mxu0 0
    %1812 = vmatprep.subr.bf16.mxu0 0
    %1813 = vmatpush1.bf16.xpose.msra.mxu0 0
    %1814 = vmatprep.subr.bf16.mxu0 0
    %1815 = vmatpush1.bf16.xpose.msra.mxu0 0
    %1816 = vmatprep.subr.bf16.mxu0 0
    %1817 = vmatpush1.bf16.xpose.msra.mxu0 0
    %1818 = vmatprep.subr.bf16.mxu0 0
    %1819 = vmatpush1.bf16.xpose.msra.mxu0 0
    %1820 = vmatprep.subr.bf16.mxu0 0
    %1821 = vmatpush1.bf16.xpose.msra.mxu0 0
    %1822 = vmatprep.subr.bf16.mxu0 0
    %1823 = vmatpush1.bf16.xpose.msra.mxu0 0
    %1824 = vmatprep.mubr.bf16.mxu0 0
    %1825 = vmatmul.mubr.bf16.gmra.mrb[0].mxu0 %v1787
    %v1826 = vpop.f32.mrb[0].mxu0
    %v1827 = vadd.f32 %v120, %v1826
    %v1828 = vpop.f32.mrb[0].mxu0
    %v1829 = vpop.f32.mrb[0].mxu0
    %v1830 = vpop.f32.mrb[0].mxu0
    %1831 = vdwg.mxu0
    %1833 = vrot.lane.b32.xlu0 %v1536, 96
    %v1834 = vpop.permute.xlu0 %1833
    %v1836 = vsel %vm221, %v1536, 0
    %v1839 = vsel %vm221, %v1834, 0
    %1841 = vmatprep.subr.bf16.mxu0 0
    %1842 = vmatpush1.bf16.xpose.msra.mxu0 %v1839
    %1843 = vmatprep.subr.bf16.mxu0 0
    %1844 = vmatpush1.bf16.xpose.msra.mxu0 0
    %1845 = vmatprep.subr.bf16.mxu0 0
    %1846 = vmatpush1.bf16.xpose.msra.mxu0 0
    %1847 = vmatprep.subr.bf16.mxu0 0
    %1848 = vmatpush1.bf16.xpose.msra.mxu0 0
    %1849 = vmatprep.subr.bf16.mxu0 0
    %1850 = vmatpush1.bf16.xpose.msra.mxu0 0
    %1851 = vmatprep.subr.bf16.mxu0 0
    %1852 = vmatpush1.bf16.xpose.msra.mxu0 0
    %1853 = vmatprep.subr.bf16.mxu0 0
    %1854 = vmatpush1.bf16.xpose.msra.mxu0 0
    %1855 = vmatprep.subr.bf16.mxu0 0
    %1856 = vmatpush1.bf16.xpose.msra.mxu0 0
    %1857 = vmatprep.subr.bf16.mxu0 0
    %1858 = vmatpush1.bf16.xpose.msra.mxu0 0
    %1859 = vmatprep.subr.bf16.mxu0 0
    %1860 = vmatpush1.bf16.xpose.msra.mxu0 0
    %1861 = vmatprep.subr.bf16.mxu0 0
    %1862 = vmatpush1.bf16.xpose.msra.mxu0 0
    %1863 = vmatprep.subr.bf16.mxu0 0
    %1864 = vmatpush1.bf16.xpose.msra.mxu0 0
    %1865 = vmatprep.subr.bf16.mxu0 0
    %1866 = vmatpush1.bf16.xpose.msra.mxu0 0
    %1867 = vmatprep.subr.bf16.mxu0 0
    %1868 = vmatpush1.bf16.xpose.msra.mxu0 0
    %1869 = vmatprep.subr.bf16.mxu0 0
    %1870 = vmatpush1.bf16.xpose.msra.mxu0 0
    %1871 = vmatprep.subr.bf16.mxu0 0
    %1872 = vmatpush1.bf16.xpose.msra.mxu0 0
    %1873 = vmatprep.mubr.bf16.mxu0 0
    %1874 = vmatmul.mubr.bf16.gmra.mrb[0].mxu0 %v1836
    %v1875 = vpop.f32.mrb[0].mxu0
    %v1876 = vadd.f32 %v119, %v1875
    %v1877 = vpop.f32.mrb[0].mxu0
    %v1878 = vpop.f32.mrb[0].mxu0
    %v1879 = vpop.f32.mrb[0].mxu0
    %1880 = vdwg.mxu0
    %1882 = vrot.lane.b32.xlu0 %v1537, 96
    %v1883 = vpop.permute.xlu0 %1882
    %v1885 = vsel %vm221, %v1537, 0
    %v1888 = vsel %vm221, %v1883, 0
    %1890 = vmatprep.subr.bf16.mxu0 0
    %1891 = vmatpush1.bf16.xpose.msra.mxu0 %v1888
    %1892 = vmatprep.subr.bf16.mxu0 0
    %1893 = vmatpush1.bf16.xpose.msra.mxu0 0
    %1894 = vmatprep.subr.bf16.mxu0 0
    %1895 = vmatpush1.bf16.xpose.msra.mxu0 0
    %1896 = vmatprep.subr.bf16.mxu0 0
    %1897 = vmatpush1.bf16.xpose.msra.mxu0 0
    %1898 = vmatprep.subr.bf16.mxu0 0
    %1899 = vmatpush1.bf16.xpose.msra.mxu0 0
    %1900 = vmatprep.subr.bf16.mxu0 0
    %1901 = vmatpush1.bf16.xpose.msra.mxu0 0
    %1902 = vmatprep.subr.bf16.mxu0 0
    %1903 = vmatpush1.bf16.xpose.msra.mxu0 0
    %1904 = vmatprep.subr.bf16.mxu0 0
    %1905 = vmatpush1.bf16.xpose.msra.mxu0 0
    %1906 = vmatprep.subr.bf16.mxu0 0
    %1907 = vmatpush1.bf16.xpose.msra.mxu0 0
    %1908 = vmatprep.subr.bf16.mxu0 0
    %1909 = vmatpush1.bf16.xpose.msra.mxu0 0
    %1910 = vmatprep.subr.bf16.mxu0 0
    %1911 = vmatpush1.bf16.xpose.msra.mxu0 0
    %1912 = vmatprep.subr.bf16.mxu0 0
    %1913 = vmatpush1.bf16.xpose.msra.mxu0 0
    %1914 = vmatprep.subr.bf16.mxu0 0
    %1915 = vmatpush1.bf16.xpose.msra.mxu0 0
    %1916 = vmatprep.subr.bf16.mxu0 0
    %1917 = vmatpush1.bf16.xpose.msra.mxu0 0
    %1918 = vmatprep.subr.bf16.mxu0 0
    %1919 = vmatpush1.bf16.xpose.msra.mxu0 0
    %1920 = vmatprep.subr.bf16.mxu0 0
    %1921 = vmatpush1.bf16.xpose.msra.mxu0 0
    %1922 = vmatprep.mubr.bf16.mxu0 0
    %1923 = vmatmul.mubr.bf16.gmra.mrb[0].mxu0 %v1885
    %v1924 = vpop.f32.mrb[0].mxu0
    %v1925 = vadd.f32 %v120, %v1924
    %v1926 = vpop.f32.mrb[0].mxu0
    %v1927 = vpop.f32.mrb[0].mxu0
    %v1928 = vpop.f32.mrb[0].mxu0
    %1929 = vdwg.mxu0
    %v1930 = vsel %vm221, %v1582, -inf
    %1931 = vmax.xlane.f32.xlu0 %v1930
    %v1932 = vpop.xlane.xlu0 %1931
    %v1933 = vsel %vm221, %v1631, -inf
    %1934 = vmax.xlane.f32.xlu0 %v1933
    %v1935 = vpop.xlane.xlu0 %1934
    %v1936 = vsel %vm221, %v1680, -inf
    %1937 = vmax.xlane.f32.xlu0 %v1936
    %v1938 = vpop.xlane.xlu0 %1937
    %v1939 = vsel %vm221, %v1729, -inf
    %1940 = vmax.xlane.f32.xlu0 %v1939
    %v1941 = vpop.xlane.xlu0 %1940
    %v1942 = vsel %vm221, %v1778, -inf
    %1943 = vmax.xlane.f32.xlu0 %v1942
    %v1944 = vpop.xlane.xlu0 %1943
    %v1945 = vsel %vm221, %v1827, -inf
    %1946 = vmax.xlane.f32.xlu0 %v1945
    %v1947 = vpop.xlane.xlu0 %1946
    %v1948 = vsel %vm221, %v1876, -inf
    %1949 = vmax.xlane.f32.xlu0 %v1948
    %v1950 = vpop.xlane.xlu0 %1949
    %v1951 = vsel %vm221, %v1925, -inf
    %1952 = vmax.xlane.f32.xlu0 %v1951
    %v1953 = vpop.xlane.xlu0 %1952
    %v1954 = vsub.f32 %v1582, %v1932
    %v1955 = vsub.f32 %v1631, %v1935
    %v1956 = vsub.f32 %v1680, %v1938
    %v1957 = vsub.f32 %v1729, %v1941
    %v1958 = vsub.f32 %v1778, %v1944
    %v1959 = vsub.f32 %v1827, %v1947
    %v1960 = vsub.f32 %v1876, %v1950
    %v1961 = vsub.f32 %v1925, %v1953
    %v1962 = vmul.f32 %v1954, 1.442695
    %v1963 = vpow.pop %v1962
    %v1964 = vmul.f32 %v1955, 1.442695
    %v1965 = vpow.pop %v1964
    %v1966 = vmul.f32 %v1956, 1.442695
    %v1967 = vpow.pop %v1966
    %v1968 = vmul.f32 %v1957, 1.442695
    %v1969 = vpow.pop %v1968
    %v1970 = vmul.f32 %v1958, 1.442695
    %v1971 = vpow.pop %v1970
    %v1972 = vmul.f32 %v1959, 1.442695
    %v1973 = vpow.pop %v1972
    %v1974 = vmul.f32 %v1960, 1.442695
    %v1975 = vpow.pop %v1974
    %v1976 = vmul.f32 %v1961, 1.442695
    %v1977 = vpow.pop %v1976
    %v1978 = vsel %vm221, %v1963, 0.0
    %1979 = vadd.xlane.f32.xlu0 %v1978
    %v1980 = vpop.xlane.xlu0 %1979
    %v1981 = vsel %vm221, %v1965, 0.0
    %1982 = vadd.xlane.f32.xlu0 %v1981
    %v1983 = vpop.xlane.xlu0 %1982
    %v1984 = vsel %vm221, %v1967, 0.0
    %1985 = vadd.xlane.f32.xlu0 %v1984
    %v1986 = vpop.xlane.xlu0 %1985
    %v1987 = vsel %vm221, %v1969, 0.0
    %1988 = vadd.xlane.f32.xlu0 %v1987
    %v1989 = vpop.xlane.xlu0 %1988
    %v1990 = vsel %vm221, %v1971, 0.0
    %1991 = vadd.xlane.f32.xlu0 %v1990
    %v1992 = vpop.xlane.xlu0 %1991
    %v1993 = vsel %vm221, %v1973, 0.0
    %1994 = vadd.xlane.f32.xlu0 %v1993
    %v1995 = vpop.xlane.xlu0 %1994
    %v1996 = vsel %vm221, %v1975, 0.0
    %1997 = vadd.xlane.f32.xlu0 %v1996
    %v1998 = vpop.xlane.xlu0 %1997
    %v1999 = vsel %vm221, %v1977, 0.0
    %2000 = vadd.xlane.f32.xlu0 %v1999
    %v2001 = vpop.xlane.xlu0 %2000
    %v2002 = vrcp.pop %v1980
    %v2003 = vrcp.pop %v1983
    %v2004 = vrcp.pop %v1986
    %v2005 = vrcp.pop %v1989
    %v2006 = vrcp.pop %v1992
    %v2007 = vrcp.pop %v1995
    %v2008 = vrcp.pop %v1998
    %v2009 = vrcp.pop %v2001
    %v2010 = vmul.f32 %v1963, %v2002
    %v2011 = vmul.f32 %v1965, %v2003
    %v2012 = vmul.f32 %v1967, %v2004
    %v2013 = vmul.f32 %v1969, %v2005
    %v2014 = vmul.f32 %v1971, %v2006
    %v2015 = vmul.f32 %v1973, %v2007
    %v2016 = vmul.f32 %v1975, %v2008
    %v2017 = vmul.f32 %v1977, %v2009
    %v2018 = vpack.c.bf16 %v2010, %v2010
    %v2019 = vpack.c.bf16 %v2011, %v2011
    %v2020 = vpack.c.bf16 %v2012, %v2012
    %v2021 = vpack.c.bf16 %v2013, %v2013
    %v2022 = vpack.c.bf16 %v2014, %v2014
    %v2023 = vpack.c.bf16 %v2015, %v2015
    %v2024 = vpack.c.bf16 %v2016, %v2016
    %v2025 = vpack.c.bf16 %v2017, %v2017
    %2026 = vrot.lane.b32.xlu0 %v1530, 64
    %v2027 = vpop.permute.xlu0 %2026
    %v2029 = vsel %vm221, %v2018, 0
    %v2032 = vsel %vm712, %v2027, 0
    %2034 = vmatprep.subr.bf16.mxu0 0
    %2035 = vmatpush1.bf16.msra.mxu0 %v2032
    %2036 = vmatprep.subr.bf16.mxu0 0
    %2037 = vmatpush1.bf16.msra.mxu0 0
    %2038 = vmatprep.subr.bf16.mxu0 0
    %2039 = vmatpush1.bf16.msra.mxu0 0
    %2040 = vmatprep.subr.bf16.mxu0 0
    %2041 = vmatpush1.bf16.msra.mxu0 0
    %2042 = vmatprep.subr.bf16.mxu0 0
    %2043 = vmatpush1.bf16.msra.mxu0 0
    %2044 = vmatprep.subr.bf16.mxu0 0
    %2045 = vmatpush1.bf16.msra.mxu0 0
    %2046 = vmatprep.subr.bf16.mxu0 0
    %2047 = vmatpush1.bf16.msra.mxu0 0
    %2048 = vmatprep.subr.bf16.mxu0 0
    %2049 = vmatpush1.bf16.msra.mxu0 0
    %2050 = vmatprep.subr.bf16.mxu0 0
    %2051 = vmatpush1.bf16.msra.mxu0 0
    %2052 = vmatprep.subr.bf16.mxu0 0
    %2053 = vmatpush1.bf16.msra.mxu0 0
    %2054 = vmatprep.subr.bf16.mxu0 0
    %2055 = vmatpush1.bf16.msra.mxu0 0
    %2056 = vmatprep.subr.bf16.mxu0 0
    %2057 = vmatpush1.bf16.msra.mxu0 0
    %2058 = vmatprep.subr.bf16.mxu0 0
    %2059 = vmatpush1.bf16.msra.mxu0 0
    %2060 = vmatprep.subr.bf16.mxu0 0
    %2061 = vmatpush1.bf16.msra.mxu0 0
    %2062 = vmatprep.subr.bf16.mxu0 0
    %2063 = vmatpush1.bf16.msra.mxu0 0
    %2064 = vmatprep.subr.bf16.mxu0 0
    %2065 = vmatpush1.bf16.msra.mxu0 0
    %2066 = vmatprep.mubr.bf16.mxu0 0
    %2067 = vmatmul.mubr.bf16.gmra.mrb[0].mxu0 %v2029
    %v2068 = vpop.f32.mrb[0].mxu0
    %v2069 = vadd.f32 0.0, %v2068
    %v2070 = vpop.f32.mrb[0].mxu0
    %v2071 = vpop.f32.mrb[0].mxu0
    %v2072 = vpop.f32.mrb[0].mxu0
    %2073 = vdwg.mxu0
    %2074 = vrot.lane.b32.xlu0 %v1531, 64
    %v2075 = vpop.permute.xlu0 %2074
    %v2077 = vsel %vm221, %v2019, 0
    %v2080 = vsel %vm712, %v2075, 0
    %2082 = vmatprep.subr.bf16.mxu0 0
    %2083 = vmatpush1.bf16.msra.mxu0 %v2080
    %2084 = vmatprep.subr.bf16.mxu0 0
    %2085 = vmatpush1.bf16.msra.mxu0 0
    %2086 = vmatprep.subr.bf16.mxu0 0
    %2087 = vmatpush1.bf16.msra.mxu0 0
    %2088 = vmatprep.subr.bf16.mxu0 0
    %2089 = vmatpush1.bf16.msra.mxu0 0
    %2090 = vmatprep.subr.bf16.mxu0 0
    %2091 = vmatpush1.bf16.msra.mxu0 0
    %2092 = vmatprep.subr.bf16.mxu0 0
    %2093 = vmatpush1.bf16.msra.mxu0 0
    %2094 = vmatprep.subr.bf16.mxu0 0
    %2095 = vmatpush1.bf16.msra.mxu0 0
    %2096 = vmatprep.subr.bf16.mxu0 0
    %2097 = vmatpush1.bf16.msra.mxu0 0
    %2098 = vmatprep.subr.bf16.mxu0 0
    %2099 = vmatpush1.bf16.msra.mxu0 0
    %2100 = vmatprep.subr.bf16.mxu0 0
    %2101 = vmatpush1.bf16.msra.mxu0 0
    %2102 = vmatprep.subr.bf16.mxu0 0
    %2103 = vmatpush1.bf16.msra.mxu0 0
    %2104 = vmatprep.subr.bf16.mxu0 0
    %2105 = vmatpush1.bf16.msra.mxu0 0
    %2106 = vmatprep.subr.bf16.mxu0 0
    %2107 = vmatpush1.bf16.msra.mxu0 0
    %2108 = vmatprep.subr.bf16.mxu0 0
    %2109 = vmatpush1.bf16.msra.mxu0 0
    %2110 = vmatprep.subr.bf16.mxu0 0
    %2111 = vmatpush1.bf16.msra.mxu0 0
    %2112 = vmatprep.subr.bf16.mxu0 0
    %2113 = vmatpush1.bf16.msra.mxu0 0
    %2114 = vmatprep.mubr.bf16.mxu0 0
    %2115 = vmatmul.mubr.bf16.gmra.mrb[0].mxu0 %v2077
    %v2116 = vpop.f32.mrb[0].mxu0
    %v2117 = vadd.f32 0.0, %v2116
    %v2118 = vpop.f32.mrb[0].mxu0
    %v2119 = vpop.f32.mrb[0].mxu0
    %v2120 = vpop.f32.mrb[0].mxu0
    %2121 = vdwg.mxu0
    %2122 = vrot.lane.b32.xlu0 %v1532, 64
    %v2123 = vpop.permute.xlu0 %2122
    %v2125 = vsel %vm221, %v2020, 0
    %v2128 = vsel %vm712, %v2123, 0
    %2130 = vmatprep.subr.bf16.mxu0 0
    %2131 = vmatpush1.bf16.msra.mxu0 %v2128
    %2132 = vmatprep.subr.bf16.mxu0 0
    %2133 = vmatpush1.bf16.msra.mxu0 0
    %2134 = vmatprep.subr.bf16.mxu0 0
    %2135 = vmatpush1.bf16.msra.mxu0 0
    %2136 = vmatprep.subr.bf16.mxu0 0
    %2137 = vmatpush1.bf16.msra.mxu0 0
    %2138 = vmatprep.subr.bf16.mxu0 0
    %2139 = vmatpush1.bf16.msra.mxu0 0
    %2140 = vmatprep.subr.bf16.mxu0 0
    %2141 = vmatpush1.bf16.msra.mxu0 0
    %2142 = vmatprep.subr.bf16.mxu0 0
    %2143 = vmatpush1.bf16.msra.mxu0 0
    %2144 = vmatprep.subr.bf16.mxu0 0
    %2145 = vmatpush1.bf16.msra.mxu0 0
    %2146 = vmatprep.subr.bf16.mxu0 0
    %2147 = vmatpush1.bf16.msra.mxu0 0
    %2148 = vmatprep.subr.bf16.mxu0 0
    %2149 = vmatpush1.bf16.msra.mxu0 0
    %2150 = vmatprep.subr.bf16.mxu0 0
    %2151 = vmatpush1.bf16.msra.mxu0 0
    %2152 = vmatprep.subr.bf16.mxu0 0
    %2153 = vmatpush1.bf16.msra.mxu0 0
    %2154 = vmatprep.subr.bf16.mxu0 0
    %2155 = vmatpush1.bf16.msra.mxu0 0
    %2156 = vmatprep.subr.bf16.mxu0 0
    %2157 = vmatpush1.bf16.msra.mxu0 0
    %2158 = vmatprep.subr.bf16.mxu0 0
    %2159 = vmatpush1.bf16.msra.mxu0 0
    %2160 = vmatprep.subr.bf16.mxu0 0
    %2161 = vmatpush1.bf16.msra.mxu0 0
    %2162 = vmatprep.mubr.bf16.mxu0 0
    %2163 = vmatmul.mubr.bf16.gmra.mrb[0].mxu0 %v2125
    %v2164 = vpop.f32.mrb[0].mxu0
    %v2165 = vadd.f32 0.0, %v2164
    %v2166 = vpop.f32.mrb[0].mxu0
    %v2167 = vpop.f32.mrb[0].mxu0
    %v2168 = vpop.f32.mrb[0].mxu0
    %2169 = vdwg.mxu0
    %2170 = vrot.lane.b32.xlu0 %v1533, 64
    %v2171 = vpop.permute.xlu0 %2170
    %v2173 = vsel %vm221, %v2021, 0
    %v2176 = vsel %vm712, %v2171, 0
    %2178 = vmatprep.subr.bf16.mxu0 0
    %2179 = vmatpush1.bf16.msra.mxu0 %v2176
    %2180 = vmatprep.subr.bf16.mxu0 0
    %2181 = vmatpush1.bf16.msra.mxu0 0
    %2182 = vmatprep.subr.bf16.mxu0 0
    %2183 = vmatpush1.bf16.msra.mxu0 0
    %2184 = vmatprep.subr.bf16.mxu0 0
    %2185 = vmatpush1.bf16.msra.mxu0 0
    %2186 = vmatprep.subr.bf16.mxu0 0
    %2187 = vmatpush1.bf16.msra.mxu0 0
    %2188 = vmatprep.subr.bf16.mxu0 0
    %2189 = vmatpush1.bf16.msra.mxu0 0
    %2190 = vmatprep.subr.bf16.mxu0 0
    %2191 = vmatpush1.bf16.msra.mxu0 0
    %2192 = vmatprep.subr.bf16.mxu0 0
    %2193 = vmatpush1.bf16.msra.mxu0 0
    %2194 = vmatprep.subr.bf16.mxu0 0
    %2195 = vmatpush1.bf16.msra.mxu0 0
    %2196 = vmatprep.subr.bf16.mxu0 0
    %2197 = vmatpush1.bf16.msra.mxu0 0
    %2198 = vmatprep.subr.bf16.mxu0 0
    %2199 = vmatpush1.bf16.msra.mxu0 0
    %2200 = vmatprep.subr.bf16.mxu0 0
    %2201 = vmatpush1.bf16.msra.mxu0 0
    %2202 = vmatprep.subr.bf16.mxu0 0
    %2203 = vmatpush1.bf16.msra.mxu0 0
    %2204 = vmatprep.subr.bf16.mxu0 0
    %2205 = vmatpush1.bf16.msra.mxu0 0
    %2206 = vmatprep.subr.bf16.mxu0 0
    %2207 = vmatpush1.bf16.msra.mxu0 0
    %2208 = vmatprep.subr.bf16.mxu0 0
    %2209 = vmatpush1.bf16.msra.mxu0 0
    %2210 = vmatprep.mubr.bf16.mxu0 0
    %2211 = vmatmul.mubr.bf16.gmra.mrb[0].mxu0 %v2173
    %v2212 = vpop.f32.mrb[0].mxu0
    %v2213 = vadd.f32 0.0, %v2212
    %v2214 = vpop.f32.mrb[0].mxu0
    %v2215 = vpop.f32.mrb[0].mxu0
    %v2216 = vpop.f32.mrb[0].mxu0
    %2217 = vdwg.mxu0
    %2218 = vrot.lane.b32.xlu0 %v1534, 64
    %v2219 = vpop.permute.xlu0 %2218
    %v2221 = vsel %vm221, %v2022, 0
    %v2224 = vsel %vm712, %v2219, 0
    %2226 = vmatprep.subr.bf16.mxu0 0
    %2227 = vmatpush1.bf16.msra.mxu0 %v2224
    %2228 = vmatprep.subr.bf16.mxu0 0
    %2229 = vmatpush1.bf16.msra.mxu0 0
    %2230 = vmatprep.subr.bf16.mxu0 0
    %2231 = vmatpush1.bf16.msra.mxu0 0
    %2232 = vmatprep.subr.bf16.mxu0 0
    %2233 = vmatpush1.bf16.msra.mxu0 0
    %2234 = vmatprep.subr.bf16.mxu0 0
    %2235 = vmatpush1.bf16.msra.mxu0 0
    %2236 = vmatprep.subr.bf16.mxu0 0
    %2237 = vmatpush1.bf16.msra.mxu0 0
    %2238 = vmatprep.subr.bf16.mxu0 0
    %2239 = vmatpush1.bf16.msra.mxu0 0
    %2240 = vmatprep.subr.bf16.mxu0 0
    %2241 = vmatpush1.bf16.msra.mxu0 0
    %2242 = vmatprep.subr.bf16.mxu0 0
    %2243 = vmatpush1.bf16.msra.mxu0 0
    %2244 = vmatprep.subr.bf16.mxu0 0
    %2245 = vmatpush1.bf16.msra.mxu0 0
    %2246 = vmatprep.subr.bf16.mxu0 0
    %2247 = vmatpush1.bf16.msra.mxu0 0
    %2248 = vmatprep.subr.bf16.mxu0 0
    %2249 = vmatpush1.bf16.msra.mxu0 0
    %2250 = vmatprep.subr.bf16.mxu0 0
    %2251 = vmatpush1.bf16.msra.mxu0 0
    %2252 = vmatprep.subr.bf16.mxu0 0
    %2253 = vmatpush1.bf16.msra.mxu0 0
    %2254 = vmatprep.subr.bf16.mxu0 0
    %2255 = vmatpush1.bf16.msra.mxu0 0
    %2256 = vmatprep.subr.bf16.mxu0 0
    %2257 = vmatpush1.bf16.msra.mxu0 0
    %2258 = vmatprep.mubr.bf16.mxu0 0
    %2259 = vmatmul.mubr.bf16.gmra.mrb[0].mxu0 %v2221
    %v2260 = vpop.f32.mrb[0].mxu0
    %v2261 = vadd.f32 0.0, %v2260
    %v2262 = vpop.f32.mrb[0].mxu0
    %v2263 = vpop.f32.mrb[0].mxu0
    %v2264 = vpop.f32.mrb[0].mxu0
    %2265 = vdwg.mxu0
    %2266 = vrot.lane.b32.xlu0 %v1535, 64
    %v2267 = vpop.permute.xlu0 %2266
    %v2269 = vsel %vm221, %v2023, 0
    %v2272 = vsel %vm712, %v2267, 0
    %2274 = vmatprep.subr.bf16.mxu0 0
    %2275 = vmatpush1.bf16.msra.mxu0 %v2272
    %2276 = vmatprep.subr.bf16.mxu0 0
    %2277 = vmatpush1.bf16.msra.mxu0 0
    %2278 = vmatprep.subr.bf16.mxu0 0
    %2279 = vmatpush1.bf16.msra.mxu0 0
    %2280 = vmatprep.subr.bf16.mxu0 0
    %2281 = vmatpush1.bf16.msra.mxu0 0
    %2282 = vmatprep.subr.bf16.mxu0 0
    %2283 = vmatpush1.bf16.msra.mxu0 0
    %2284 = vmatprep.subr.bf16.mxu0 0
    %2285 = vmatpush1.bf16.msra.mxu0 0
    %2286 = vmatprep.subr.bf16.mxu0 0
    %2287 = vmatpush1.bf16.msra.mxu0 0
    %2288 = vmatprep.subr.bf16.mxu0 0
    %2289 = vmatpush1.bf16.msra.mxu0 0
    %2290 = vmatprep.subr.bf16.mxu0 0
    %2291 = vmatpush1.bf16.msra.mxu0 0
    %2292 = vmatprep.subr.bf16.mxu0 0
    %2293 = vmatpush1.bf16.msra.mxu0 0
    %2294 = vmatprep.subr.bf16.mxu0 0
    %2295 = vmatpush1.bf16.msra.mxu0 0
    %2296 = vmatprep.subr.bf16.mxu0 0
    %2297 = vmatpush1.bf16.msra.mxu0 0
    %2298 = vmatprep.subr.bf16.mxu0 0
    %2299 = vmatpush1.bf16.msra.mxu0 0
    %2300 = vmatprep.subr.bf16.mxu0 0
    %2301 = vmatpush1.bf16.msra.mxu0 0
    %2302 = vmatprep.subr.bf16.mxu0 0
    %2303 = vmatpush1.bf16.msra.mxu0 0
    %2304 = vmatprep.subr.bf16.mxu0 0
    %2305 = vmatpush1.bf16.msra.mxu0 0
    %2306 = vmatprep.mubr.bf16.mxu0 0
    %2307 = vmatmul.mubr.bf16.gmra.mrb[0].mxu0 %v2269
    %v2308 = vpop.f32.mrb[0].mxu0
    %v2309 = vadd.f32 0.0, %v2308
    %v2310 = vpop.f32.mrb[0].mxu0
    %v2311 = vpop.f32.mrb[0].mxu0
    %v2312 = vpop.f32.mrb[0].mxu0
    %2313 = vdwg.mxu0
    %2314 = vrot.lane.b32.xlu0 %v1536, 64
    %v2315 = vpop.permute.xlu0 %2314
    %v2317 = vsel %vm221, %v2024, 0
    %v2320 = vsel %vm712, %v2315, 0
    %2322 = vmatprep.subr.bf16.mxu0 0
    %2323 = vmatpush1.bf16.msra.mxu0 %v2320
    %2324 = vmatprep.subr.bf16.mxu0 0
    %2325 = vmatpush1.bf16.msra.mxu0 0
    %2326 = vmatprep.subr.bf16.mxu0 0
    %2327 = vmatpush1.bf16.msra.mxu0 0
    %2328 = vmatprep.subr.bf16.mxu0 0
    %2329 = vmatpush1.bf16.msra.mxu0 0
    %2330 = vmatprep.subr.bf16.mxu0 0
    %2331 = vmatpush1.bf16.msra.mxu0 0
    %2332 = vmatprep.subr.bf16.mxu0 0
    %2333 = vmatpush1.bf16.msra.mxu0 0
    %2334 = vmatprep.subr.bf16.mxu0 0
    %2335 = vmatpush1.bf16.msra.mxu0 0
    %2336 = vmatprep.subr.bf16.mxu0 0
    %2337 = vmatpush1.bf16.msra.mxu0 0
    %2338 = vmatprep.subr.bf16.mxu0 0
    %2339 = vmatpush1.bf16.msra.mxu0 0
    %2340 = vmatprep.subr.bf16.mxu0 0
    %2341 = vmatpush1.bf16.msra.mxu0 0
    %2342 = vmatprep.subr.bf16.mxu0 0
    %2343 = vmatpush1.bf16.msra.mxu0 0
    %2344 = vmatprep.subr.bf16.mxu0 0
    %2345 = vmatpush1.bf16.msra.mxu0 0
    %2346 = vmatprep.subr.bf16.mxu0 0
    %2347 = vmatpush1.bf16.msra.mxu0 0
    %2348 = vmatprep.subr.bf16.mxu0 0
    %2349 = vmatpush1.bf16.msra.mxu0 0
    %2350 = vmatprep.subr.bf16.mxu0 0
    %2351 = vmatpush1.bf16.msra.mxu0 0
    %2352 = vmatprep.subr.bf16.mxu0 0
    %2353 = vmatpush1.bf16.msra.mxu0 0
    %2354 = vmatprep.mubr.bf16.mxu0 0
    %2355 = vmatmul.mubr.bf16.gmra.mrb[0].mxu0 %v2317
    %v2356 = vpop.f32.mrb[0].mxu0
    %v2357 = vadd.f32 0.0, %v2356
    %v2358 = vpop.f32.mrb[0].mxu0
    %v2359 = vpop.f32.mrb[0].mxu0
    %v2360 = vpop.f32.mrb[0].mxu0
    %2361 = vdwg.mxu0
    %2362 = vrot.lane.b32.xlu0 %v1537, 64
    %v2363 = vpop.permute.xlu0 %2362
    %v2365 = vsel %vm221, %v2025, 0
    %v2368 = vsel %vm712, %v2363, 0
    %2370 = vmatprep.subr.bf16.mxu0 0
    %2371 = vmatpush1.bf16.msra.mxu0 %v2368
    %2372 = vmatprep.subr.bf16.mxu0 0
    %2373 = vmatpush1.bf16.msra.mxu0 0
    %2374 = vmatprep.subr.bf16.mxu0 0
    %2375 = vmatpush1.bf16.msra.mxu0 0
    %2376 = vmatprep.subr.bf16.mxu0 0
    %2377 = vmatpush1.bf16.msra.mxu0 0
    %2378 = vmatprep.subr.bf16.mxu0 0
    %2379 = vmatpush1.bf16.msra.mxu0 0
    %2380 = vmatprep.subr.bf16.mxu0 0
    %2381 = vmatpush1.bf16.msra.mxu0 0
    %2382 = vmatprep.subr.bf16.mxu0 0
    %2383 = vmatpush1.bf16.msra.mxu0 0
    %2384 = vmatprep.subr.bf16.mxu0 0
    %2385 = vmatpush1.bf16.msra.mxu0 0
    %2386 = vmatprep.subr.bf16.mxu0 0
    %2387 = vmatpush1.bf16.msra.mxu0 0
    %2388 = vmatprep.subr.bf16.mxu0 0
    %2389 = vmatpush1.bf16.msra.mxu0 0
    %2390 = vmatprep.subr.bf16.mxu0 0
    %2391 = vmatpush1.bf16.msra.mxu0 0
    %2392 = vmatprep.subr.bf16.mxu0 0
    %2393 = vmatpush1.bf16.msra.mxu0 0
    %2394 = vmatprep.subr.bf16.mxu0 0
    %2395 = vmatpush1.bf16.msra.mxu0 0
    %2396 = vmatprep.subr.bf16.mxu0 0
    %2397 = vmatpush1.bf16.msra.mxu0 0
    %2398 = vmatprep.subr.bf16.mxu0 0
    %2399 = vmatpush1.bf16.msra.mxu0 0
    %2400 = vmatprep.subr.bf16.mxu0 0
    %2401 = vmatpush1.bf16.msra.mxu0 0
    %2402 = vmatprep.mubr.bf16.mxu0 0
    %2403 = vmatmul.mubr.bf16.gmra.mrb[0].mxu0 %v2365
    %v2404 = vpop.f32.mrb[0].mxu0
    %v2405 = vadd.f32 0.0, %v2404
    %v2406 = vpop.f32.mrb[0].mxu0
    %v2407 = vpop.f32.mrb[0].mxu0
    %v2408 = vpop.f32.mrb[0].mxu0
    %2409 = vdwg.mxu0
    %2412 = vrot.lane.b32.xlu0 %v2165, 8
    %v2413 = vpop.permute.xlu0 %2412
    %2414 = vrot.lane.b32.xlu0 %v2213, 8
    %v2415 = vpop.permute.xlu0 %2414
    %2420 = vrot.lane.b32.xlu0 %v2261, 16
    %v2421 = vpop.permute.xlu0 %2420
    %2422 = vrot.lane.b32.xlu0 %v2309, 16
    %v2423 = vpop.permute.xlu0 %2422
    %2428 = vrot.lane.b32.xlu0 %v2357, 24
    %v2429 = vpop.permute.xlu0 %2428
    %2430 = vrot.lane.b32.xlu0 %v2405, 24
    %v2431 = vpop.permute.xlu0 %2430
    %v2434 = vsel %vm221, %v2069, %v2413
    %v2435 = vsel %vm221, %v2117, %v2415
    %v2436 = vsel %vm1118, %v2434, %v2421
    %v2437 = vsel %vm1118, %v2435, %v2423
    %v2438 = vsel %vm1121, %v2436, %v2429
    %v2439 = vsel %vm1121, %v2437, %v2431
    %v2440 = vpack.c.bf16 %v2439, %v2438
    %s2441 = scalar_lea.vmem %s4, 16
    %v2442 = vld [vmem:[%s2441] sm:$0xf]
    %v2443 = vld [vmem:[%s2441 + $0x4] sm:$0xf]
    %v2444 = vld [vmem:[%s2441 + $0x8] sm:$0xf]
    %v2445 = vld [vmem:[%s2441 + $0xc] sm:$0xf]
    %s2446 = scalar_lea.vmem %s5, 1
    %v2447 = vld [vmem:[%s2446] sm:$0x1]
    %v2449 = vlaneseq
    %v2450 = vshrl.u32 %v2449, 7
    %v2451 = vsub.s32 0, %v2450
    %v2452 = vrot.slane %v2447, %v2451
    %v2458 = vunpack.c.l.b16 %v2442
    %v2459 = vunpack.c.l.b16 %v2443
    %v2460 = vunpack.c.l.b16 %v2444
    %v2461 = vunpack.c.l.b16 %v2445
    %v2462 = vpack.c.b16 %v2459, %v2458
    %v2463 = vpack.c.b16 %v2461, %v2460
    %v2467 = vsel %vm145, %v2440, 0
    %2469 = vmatprep.subr.bf16.mxu0 0
    %2470 = vmatpush1.bf16.msra.mxu0 %v2462
    %2471 = vmatprep.subr.bf16.mxu0 0
    %2472 = vmatpush1.bf16.msra.mxu0 %v2463
    %2473 = vmatprep.subr.bf16.mxu0 0
    %2474 = vmatpush1.bf16.msra.mxu0 0
    %2475 = vmatprep.subr.bf16.mxu0 0
    %2476 = vmatpush1.bf16.msra.mxu0 0
    %2477 = vmatprep.subr.bf16.mxu0 0
    %2478 = vmatpush1.bf16.msra.mxu0 0
    %2479 = vmatprep.subr.bf16.mxu0 0
    %2480 = vmatpush1.bf16.msra.mxu0 0
    %2481 = vmatprep.subr.bf16.mxu0 0
    %2482 = vmatpush1.bf16.msra.mxu0 0
    %2483 = vmatprep.subr.bf16.mxu0 0
    %2484 = vmatpush1.bf16.msra.mxu0 0
    %2485 = vmatprep.subr.bf16.mxu0 0
    %2486 = vmatpush1.bf16.msra.mxu0 0
    %2487 = vmatprep.subr.bf16.mxu0 0
    %2488 = vmatpush1.bf16.msra.mxu0 0
    %2489 = vmatprep.subr.bf16.mxu0 0
    %2490 = vmatpush1.bf16.msra.mxu0 0
    %2491 = vmatprep.subr.bf16.mxu0 0
    %2492 = vmatpush1.bf16.msra.mxu0 0
    %2493 = vmatprep.subr.bf16.mxu0 0
    %2494 = vmatpush1.bf16.msra.mxu0 0
    %2495 = vmatprep.subr.bf16.mxu0 0
    %2496 = vmatpush1.bf16.msra.mxu0 0
    %2497 = vmatprep.subr.bf16.mxu0 0
    %2498 = vmatpush1.bf16.msra.mxu0 0
    %2499 = vmatprep.subr.bf16.mxu0 0
    %2500 = vmatpush1.bf16.msra.mxu0 0
    %2501 = vmatprep.mubr.bf16.mxu0 0
    %2502 = vmatmul.mubr.bf16.gmra.mrb[0].mxu0 %v2467
    %v2503 = vpop.f32.mrb[0].mxu0
    %v2504 = vadd.f32 %v2452, %v2503
    %v2505 = vpop.f32.mrb[0].mxu0
    %v2506 = vpop.f32.mrb[0].mxu0
    %v2507 = vadd.f32 %v2452, %v2506
    %v2508 = vpop.f32.mrb[0].mxu0
    %2509 = vdwg.mxu0
    %v2510 = vadd.f32 %v1438, %v2504
    %v2511 = vadd.f32 %v1439, %v2507
    %s2512 = scalar_lea.vmem [#allocation7], 1
    %v2513 = vld [vmem:[%s2512] sm:$0x1]
    %s2514 = scalar_lea.vmem [#allocation8], 1
    %v2515 = vld [vmem:[%s2514] sm:$0x1]
    %v2516 = vsel %vm145, %v2510, 0.0
    %2517 = vadd.xlane.f32.xlu0 %v2516
    %v2518 = vpop.xlane.xlu0 %2517
    %v2519 = vsel %vm145, %v2511, 0.0
    %2520 = vadd.xlane.f32.xlu0 %v2519
    %v2521 = vpop.xlane.xlu0 %2520
    %v2522 = vmul.f32 %v2518, %v1202
    %v2523 = vmul.f32 %v2521, %v1202
    %v2524 = vsub.f32 %v2510, %v2522
    %v2525 = vsub.f32 %v2511, %v2523
    %v2526 = vmul.f32 %v2524, %v2524
    %v2527 = vmul.f32 %v2525, %v2525
    %v2528 = vsel %vm145, %v2526, 0.0
    %2529 = vadd.xlane.f32.xlu0 %v2528
    %v2530 = vpop.xlane.xlu0 %2529
    %v2531 = vsel %vm145, %v2527, 0.0
    %2532 = vadd.xlane.f32.xlu0 %v2531
    %v2533 = vpop.xlane.xlu0 %2532
    %v2534 = vmul.f32 %v2530, %v1202
    %v2535 = vmul.f32 %v2533, %v1202
    %v2536 = vadd.f32 %v2534, 1e-05
    %v2537 = vadd.f32 %v2535, 1e-05
    %v2538 = vrsqrt.pop %v2536
    %v2539 = vrsqrt.pop %v2537
    %v2540 = vmul.f32 %v2524, %v2538
    %v2541 = vmul.f32 %v2525, %v2539
    %v2543 = vlaneseq
    %v2544 = vshrl.u32 %v2543, 7
    %v2545 = vsub.s32 0, %v2544
    %v2546 = vrot.slane %v2513, %v2545
    %v2548 = vmul.f32 %v2540, %v2546
    %v2549 = vmul.f32 %v2541, %v2546
    %v2551 = vlaneseq
    %v2552 = vshrl.u32 %v2551, 7
    %v2553 = vsub.s32 0, %v2552
    %v2554 = vrot.slane %v2515, %v2553
    %v2556 = vadd.f32 %v2548, %v2554
    %v2557 = vadd.f32 %v2549, %v2554
    %v2558 = vpack.c.bf16 %v2557, %v2556
    %s2559 = scalar_lea.vmem %s8, 16
    %v2560 = vld [vmem:[%s2559] sm:$0xf]
    %v2561 = vld [vmem:[%s2559 + $0x4] sm:$0xf]
    %v2562 = vld [vmem:[%s2559 + $0x8] sm:$0xf]
    %v2563 = vld [vmem:[%s2559 + $0xc] sm:$0xf]
    %s2564 = scalar_lea.vmem [#allocation10], 1
    %v2565 = vld [vmem:[%s2564] sm:$0x1]
    %v2567 = vlaneseq
    %v2568 = vshrl.u32 %v2567, 7
    %v2569 = vsub.s32 0, %v2568
    %v2570 = vrot.slane %v2565, %v2569
    %v2576 = vunpack.c.l.b16 %v2560
    %v2577 = vunpack.c.l.b16 %v2561
    %v2578 = vunpack.c.l.b16 %v2562
    %v2579 = vunpack.c.l.b16 %v2563
    %v2580 = vpack.c.b16 %v2577, %v2576
    %v2581 = vpack.c.b16 %v2579, %v2578
    %v2585 = vsel %vm145, %v2558, 0
    %2587 = vmatprep.subr.bf16.mxu0 0
    %2588 = vmatpush1.bf16.msra.mxu0 %v2580
    %2589 = vmatprep.subr.bf16.mxu0 0
    %2590 = vmatpush1.bf16.msra.mxu0 %v2581
    %2591 = vmatprep.subr.bf16.mxu0 0
    %2592 = vmatpush1.bf16.msra.mxu0 0
    %2593 = vmatprep.subr.bf16.mxu0 0
    %2594 = vmatpush1.bf16.msra.mxu0 0
    %2595 = vmatprep.subr.bf16.mxu0 0
    %2596 = vmatpush1.bf16.msra.mxu0 0
    %2597 = vmatprep.subr.bf16.mxu0 0
    %2598 = vmatpush1.bf16.msra.mxu0 0
    %2599 = vmatprep.subr.bf16.mxu0 0
    %2600 = vmatpush1.bf16.msra.mxu0 0
    %2601 = vmatprep.subr.bf16.mxu0 0
    %2602 = vmatpush1.bf16.msra.mxu0 0
    %2603 = vmatprep.subr.bf16.mxu0 0
    %2604 = vmatpush1.bf16.msra.mxu0 0
    %2605 = vmatprep.subr.bf16.mxu0 0
    %2606 = vmatpush1.bf16.msra.mxu0 0
    %2607 = vmatprep.subr.bf16.mxu0 0
    %2608 = vmatpush1.bf16.msra.mxu0 0
    %2609 = vmatprep.subr.bf16.mxu0 0
    %2610 = vmatpush1.bf16.msra.mxu0 0
    %2611 = vmatprep.subr.bf16.mxu0 0
    %2612 = vmatpush1.bf16.msra.mxu0 0
    %2613 = vmatprep.subr.bf16.mxu0 0
    %2614 = vmatpush1.bf16.msra.mxu0 0
    %2615 = vmatprep.subr.bf16.mxu0 0
    %2616 = vmatpush1.bf16.msra.mxu0 0
    %2617 = vmatprep.subr.bf16.mxu0 0
    %2618 = vmatpush1.bf16.msra.mxu0 0
    %2619 = vmatprep.mubr.bf16.mxu0 0
    %2620 = vmatmul.mubr.bf16.gmra.mrb[0].mxu0 %v2585
    %v2621 = vpop.f32.mrb[0].mxu0
    %v2622 = vadd.f32 %v2570, %v2621
    %v2623 = vpop.f32.mrb[0].mxu0
    %v2624 = vpop.f32.mrb[0].mxu0
    %v2625 = vadd.f32 %v2570, %v2624
    %v2626 = vpop.f32.mrb[0].mxu0
    %2627 = vdwg.mxu0
    %v2628 = vmax.f32 %v2622, 0.0
    %v2629 = vmax.f32 %v2625, 0.0
    %v2630 = vpack.c.bf16 %v2629, %v2628
    %s2631 = scalar_lea.vmem %s10, 32
    %v2632 = vld [vmem:[%s2631] sm:$0xf]
    %v2633 = vld [vmem:[%s2631 + $0x4] sm:$0xf]
    %v2634 = vld [vmem:[%s2631 + $0x8] sm:$0xf]
    %v2635 = vld [vmem:[%s2631 + $0xc] sm:$0xf]
    %v2636 = vld [vmem:[%s2631 + $0x10] sm:$0xf]
    %v2637 = vld [vmem:[%s2631 + $0x14] sm:$0xf]
    %v2638 = vld [vmem:[%s2631 + $0x18] sm:$0xf]
    %v2639 = vld [vmem:[%s2631 + $0x1c] sm:$0xf]
    %s2640 = scalar_lea.vmem %s11, 1
    %v2641 = vld [vmem:[%s2640] sm:$0x1]
    %v2643 = vlaneseq
    %v2644 = vshrl.u32 %v2643, 7
    %v2645 = vsub.s32 0, %v2644
    %v2646 = vrot.slane %v2641, %v2645
    %v2656 = vunpack.c.l.b16 %v2632
    %v2657 = vunpack.c.l.b16 %v2633
    %v2658 = vunpack.c.l.b16 %v2634
    %v2659 = vunpack.c.l.b16 %v2635
    %v2660 = vunpack.c.l.b16 %v2636
    %v2661 = vunpack.c.l.b16 %v2637
    %v2662 = vunpack.c.l.b16 %v2638
    %v2663 = vunpack.c.l.b16 %v2639
    %v2664 = vpack.c.b16 %v2657, %v2656
    %v2665 = vpack.c.b16 %v2659, %v2658
    %v2666 = vpack.c.b16 %v2661, %v2660
    %v2667 = vpack.c.b16 %v2663, %v2662
    %v2673 = vsel %vm1349, %v2630, 0
    %2675 = vmatprep.subr.bf16.mxu0 0
    %2676 = vmatpush1.bf16.msra.mxu0 %v2664
    %2677 = vmatprep.subr.bf16.mxu0 0
    %2678 = vmatpush1.bf16.msra.mxu0 %v2665
    %2679 = vmatprep.subr.bf16.mxu0 0
    %2680 = vmatpush1.bf16.msra.mxu0 %v2666
    %2681 = vmatprep.subr.bf16.mxu0 0
    %2682 = vmatpush1.bf16.msra.mxu0 %v2667
    %2683 = vmatprep.subr.bf16.mxu0 0
    %2684 = vmatpush1.bf16.msra.mxu0 0
    %2685 = vmatprep.subr.bf16.mxu0 0
    %2686 = vmatpush1.bf16.msra.mxu0 0
    %2687 = vmatprep.subr.bf16.mxu0 0
    %2688 = vmatpush1.bf16.msra.mxu0 0
    %2689 = vmatprep.subr.bf16.mxu0 0
    %2690 = vmatpush1.bf16.msra.mxu0 0
    %2691 = vmatprep.subr.bf16.mxu0 0
    %2692 = vmatpush1.bf16.msra.mxu0 0
    %2693 = vmatprep.subr.bf16.mxu0 0
    %2694 = vmatpush1.bf16.msra.mxu0 0
    %2695 = vmatprep.subr.bf16.mxu0 0
    %2696 = vmatpush1.bf16.msra.mxu0 0
    %2697 = vmatprep.subr.bf16.mxu0 0
    %2698 = vmatpush1.bf16.msra.mxu0 0
    %2699 = vmatprep.subr.bf16.mxu0 0
    %2700 = vmatpush1.bf16.msra.mxu0 0
    %2701 = vmatprep.subr.bf16.mxu0 0
    %2702 = vmatpush1.bf16.msra.mxu0 0
    %2703 = vmatprep.subr.bf16.mxu0 0
    %2704 = vmatpush1.bf16.msra.mxu0 0
    %2705 = vmatprep.subr.bf16.mxu0 0
    %2706 = vmatpush1.bf16.msra.mxu0 0
    %2707 = vmatprep.mubr.bf16.mxu0 0
    %2708 = vmatmul.mubr.bf16.gmra.mrb[0].mxu0 %v2673
    %v2709 = vpop.f32.mrb[0].mxu0
    %v2710 = vadd.f32 %v2646, %v2709
    %v2711 = vpop.f32.mrb[0].mxu0
    %v2712 = vpop.f32.mrb[0].mxu0
    %v2713 = vadd.f32 %v2646, %v2712
    %v2714 = vpop.f32.mrb[0].mxu0
    %2715 = vdwg.mxu0
    %v2716 = vadd.f32 %v2556, %v2710
    %v2717 = vadd.f32 %v2557, %v2713
    %s2718 = scalar_lea.vmem %s12, 1
    %v2719 = vld [vmem:[%s2718] sm:$0x1]
    %s2720 = scalar_lea.vmem %s13, 1
    %v2721 = vld [vmem:[%s2720] sm:$0x1]
    %v2722 = vsel %vm145, %v2716, 0.0
    %2723 = vadd.xlane.f32.xlu0 %v2722
    %v2724 = vpop.xlane.xlu0 %2723
    %v2725 = vsel %vm145, %v2717, 0.0
    %2726 = vadd.xlane.f32.xlu0 %v2725
    %v2727 = vpop.xlane.xlu0 %2726
    %v2728 = vmul.f32 %v2724, %v1202
    %v2729 = vmul.f32 %v2727, %v1202
    %v2730 = vsub.f32 %v2716, %v2728
    %v2731 = vsub.f32 %v2717, %v2729
    %v2732 = vmul.f32 %v2730, %v2730
    %v2733 = vmul.f32 %v2731, %v2731
    %v2734 = vsel %vm145, %v2732, 0.0
    %2735 = vadd.xlane.f32.xlu0 %v2734
    %v2736 = vpop.xlane.xlu0 %2735
    %v2737 = vsel %vm145, %v2733, 0.0
    %2738 = vadd.xlane.f32.xlu0 %v2737
    %v2739 = vpop.xlane.xlu0 %2738
    %v2740 = vmul.f32 %v2736, %v1202
    %v2741 = vmul.f32 %v2739, %v1202
    %v2742 = vadd.f32 %v2740, 1e-05
    %v2743 = vadd.f32 %v2741, 1e-05
    %v2744 = vrsqrt.pop %v2742
    %v2745 = vrsqrt.pop %v2743
    %v2746 = vmul.f32 %v2730, %v2744
    %v2747 = vmul.f32 %v2731, %v2745
    %v2749 = vlaneseq
    %v2750 = vshrl.u32 %v2749, 7
    %v2751 = vsub.s32 0, %v2750
    %v2752 = vrot.slane %v2719, %v2751
    %v2754 = vmul.f32 %v2746, %v2752
    %v2755 = vmul.f32 %v2747, %v2752
    %v2757 = vlaneseq
    %v2758 = vshrl.u32 %v2757, 7
    %v2759 = vsub.s32 0, %v2758
    %v2760 = vrot.slane %v2721, %v2759
    %v2762 = vadd.f32 %v2754, %v2760
    %v2763 = vadd.f32 %v2755, %v2760
    %v2766 = vrot.slane %v2763, 7
    %vm2767 = vcmask 1041409
    %v2768 = vsel %vm2767, %v2766, %v2762
    %vm2770 = vcmask 254976
    %2771 = vst.msk [vmem:[#allocation11] sm:$0x3] %vm2770, %v2768
    // Predicated region
    $region78: #{tpu_custom_call.1} parent=1 // pred_check
      _
    $region79: #{tpu_custom_call.1} parent=1 // pred_check_branch
      %2773 = sbr.rel (0) target = $region81
    $region80: #{tpu_custom_call.1} parent=1 // pred_region
      %s2775 = ssub.s32 32, 32
      %2776 = vsyncadd [#allocation4], %s2775
      %s2778 = sshll.u32 [#allocation11], 4
      %s2779 = int_to_ptr.vmem [resolvable:$true] %s2778
      %2781 = dma.vmem_to_hbm [thread:$0]  %s2779, 32, %s14, [#allocation4]
    $region81: #{tpu_custom_call.1} parent=1 // pred_fallthru
      _
    // Predicated region
    $region82: #{tpu_custom_call.1} parent=1 // pred_check
      _
    $region83: #{tpu_custom_call.1} parent=1 // pred_check_branch
      %2783 = sbr.rel (0) target = $region85
    $region84: #{tpu_custom_call.1} parent=1 // pred_region
      %2784 = dma.done [#allocation4], 32
    $region85: #{tpu_custom_call.1} parent=1 // pred_fallthru
      _
    %2785 = vsyncpa [#allocation3], 1
    %2786 = vsyncpa [#allocation6], 1
    %2787 = vsyncpa [#allocation9], 1
    %2788 = vsyncpa [#allocation4], 1

</llo_original>
